<compile_context>
chip_gen: v7x
topology: tpu7x:2x2x1
jax: 0.10.0
libtpu: 0.0.40
codegen_flags: <defaults>
</compile_context>

<pallas_src>
import math

import jax
import jax.numpy as jnp
from jax import lax
from jax.experimental import pallas as pl
from jax.experimental.pallas import tpu as pltpu

# ---------------- model config (small, synthetic) ----------------
VOCAB_SIZE = 100
TYPE_VOCAB = 2
MAX_POS = 16
HIDDEN = 32
NUM_HEADS = 4
HEAD_DIM = HIDDEN // NUM_HEADS
INTERMEDIATE = 64
NUM_LAYERS = 2
NUM_LABELS = 2
LN_EPS = 1e-12

HEAD_PAD = 128                       # per-head padded lane width (one vreg)
QKV_PAD = 3 * NUM_HEADS * HEAD_PAD   # fused QKV projection width (lane dense)
INTER_PAD = 128                      # padded FFN intermediate width
LOGIT_PAD = 128                      # lane-dense padded classifier width

BATCH = 2
SEQ = 8
ATTN_SCALE = 1.0 / math.sqrt(HEAD_DIM)


# ---------------- in-kernel helpers (pure value math, f32) ----------------
def _layernorm(x, g, b):
    mean = jnp.mean(x, axis=-1, keepdims=True)
    var = jnp.mean((x - mean) * (x - mean), axis=-1, keepdims=True)
    return (x - mean) * lax.rsqrt(var + LN_EPS) * g + b


def _gelu(y):
    # tanh approximation (gelu_new); see TODO(synk) in the header.
    c = math.sqrt(2.0 / math.pi)
    return 0.5 * y * (1.0 + jnp.tanh(c * (y + 0.044715 * y * y * y)))


def _bf16(x):
    return x.astype(jnp.bfloat16)


# ---------------- the fused per-example kernel (grid over batch) ----------------
def _bert_kernel(emb_ref, mask_ref, eg_ref, eb_ref,
                 qkvw_ref, qkvb_ref, ow_ref, ob_ref, ln1g_ref, ln1b_ref,
                 iw_ref, ib_ref, fw_ref, fb_ref, ln2g_ref, ln2b_ref,
                 pw_ref, pb_ref, cw_ref, cb_ref, out_ref):
    mask = mask_ref[0]                                       # (S, S) additive, pre-broadcast
    # embedding LayerNorm (no residual, no zeros slab)
    h = _layernorm(emb_ref[...], eg_ref[...], eb_ref[...])   # (S, H) f32

    for li in range(NUM_LAYERS):
        # fused QKV projection: one bf16 MXU pass, 1536-lane-dense output slab.
        # Head h's Q/K/V live in lanes [h*128 : h*128+HEAD_DIM] of their block.
        qkv = jnp.dot(_bf16(h), qkvw_ref[li],
                      preferred_element_type=jnp.float32) + qkvb_ref[li]

        ctx_blocks = []
        for hh in range(NUM_HEADS):
            q = qkv[:, hh * HEAD_PAD:(hh + 1) * HEAD_PAD]                       # (S, 128)
            k = qkv[:, (NUM_HEADS + hh) * HEAD_PAD:(NUM_HEADS + hh + 1) * HEAD_PAD]
            v = qkv[:, (2 * NUM_HEADS + hh) * HEAD_PAD:(2 * NUM_HEADS + hh + 1) * HEAD_PAD]
            # scale already folded into the Q weights/bias at pack time
            s = lax.dot_general(q, k,
                                dimension_numbers=(((1,), (1,)), ((), ())),
                                preferred_element_type=jnp.float32)             # (S, S)
            s = s + mask
            s = s - jnp.max(s, axis=-1, keepdims=True)
            p = jnp.exp(s)
            p = p * pl.reciprocal(jnp.sum(p, axis=-1, keepdims=True), approx=True)
            ctx_blocks.append(jnp.dot(p, v, preferred_element_type=jnp.float32))  # (S, 128)

        # full-vreg-block lane concat (no sub-128-lane shuffles); o_w is row-padded
        # to (NUM_HEADS*128, H) so the merge is absorbed by the matmul.
        ctx = jnp.concatenate(ctx_blocks, axis=-1)                               # (S, NH*128)
        attn_out = jnp.dot(_bf16(ctx), ow_ref[li],
                           preferred_element_type=jnp.float32) + ob_ref[li]
        h = _layernorm(attn_out + h, ln1g_ref[li], ln1b_ref[li])

        inter = _gelu(jnp.dot(_bf16(h), iw_ref[li],
                              preferred_element_type=jnp.float32) + ib_ref[li])  # (S, 128)
        ffn_out = jnp.dot(_bf16(inter), fw_ref[li],
                          preferred_element_type=jnp.float32) + fb_ref[li]
        h = _layernorm(ffn_out + h, ln2g_ref[li], ln2b_ref[li])

    # pooler + classifier on every row -> fully dense (S, 128) store; the [CLS]
    # row and label column are selected in JAX.
    pooled = jnp.tanh(jnp.dot(_bf16(h), pw_ref[...],
                              preferred_element_type=jnp.float32) + pb_ref[...])
    out_ref[...] = (jnp.dot(_bf16(pooled), cw_ref[...],
                            preferred_element_type=jnp.float32) + cb_ref[...])


# ---------------- parameter init (deterministic, synthetic) ----------------
def init_params(key):
    std = 0.02
    keys = iter(jax.random.split(key, 256))

    def dense(k, fan_in, fan_out):
        return (jax.random.normal(k, (fan_in, fan_out), jnp.float32) * std,
                jnp.zeros((fan_out,), jnp.float32))

    params = {
        "word_emb": jax.random.normal(next(keys), (VOCAB_SIZE, HIDDEN), jnp.float32) * std,
        "pos_emb": jax.random.normal(next(keys), (MAX_POS, HIDDEN), jnp.float32) * std,
        "type_emb": jax.random.normal(next(keys), (TYPE_VOCAB, HIDDEN), jnp.float32) * std,
        "emb_ln_g": jnp.ones((HIDDEN,), jnp.float32),
        "emb_ln_b": jnp.zeros((HIDDEN,), jnp.float32),
        "layers": [],
    }
    for _ in range(NUM_LAYERS):
        qw, qb = dense(next(keys), HIDDEN, HIDDEN)
        kw, kb = dense(next(keys), HIDDEN, HIDDEN)
        vw, vb = dense(next(keys), HIDDEN, HIDDEN)
        ow, ob = dense(next(keys), HIDDEN, HIDDEN)
        iw, ib = dense(next(keys), HIDDEN, INTERMEDIATE)
        fw, fb = dense(next(keys), INTERMEDIATE, HIDDEN)
        params["layers"].append({
            "q_w": qw, "q_b": qb, "k_w": kw, "k_b": kb, "v_w": vw, "v_b": vb,
            "o_w": ow, "o_b": ob,
            "ln1_g": jnp.ones((HIDDEN,), jnp.float32), "ln1_b": jnp.zeros((HIDDEN,), jnp.float32),
            "i_w": iw, "i_b": ib, "f_w": fw, "f_b": fb,
            "ln2_g": jnp.ones((HIDDEN,), jnp.float32), "ln2_b": jnp.zeros((HIDDEN,), jnp.float32),
        })
    pw, pb = dense(next(keys), HIDDEN, HIDDEN)
    cw, cb = dense(next(keys), HIDDEN, NUM_LABELS)
    params.update({"pool_w": pw, "pool_b": pb, "cls_w": cw, "cls_b": cb})
    return params


def pack_params(p):
    """One-time packing: fold the attention scale into Q, pad each Q/K/V head
    block and the FFN intermediate to 128 lanes, row-pad o_w, stack layers,
    pad classifier to 128 lanes, store matmul weights in bf16."""
    layers = p["layers"]

    def pad_head_cols(w, scale=1.0):
        out = jnp.zeros((HIDDEN, NUM_HEADS * HEAD_PAD), jnp.float32)
        for h in range(NUM_HEADS):
            out = out.at[:, h * HEAD_PAD:h * HEAD_PAD + HEAD_DIM].set(
                w[:, h * HEAD_DIM:(h + 1) * HEAD_DIM] * scale)
        return out

    def pad_head_bias(b, scale=1.0):
        out = jnp.zeros((NUM_HEADS * HEAD_PAD,), jnp.float32)
        for h in range(NUM_HEADS):
            out = out.at[h * HEAD_PAD:h * HEAD_PAD + HEAD_DIM].set(
                b[h * HEAD_DIM:(h + 1) * HEAD_DIM] * scale)
        return out

    def pad_head_rows(w):
        out = jnp.zeros((NUM_HEADS * HEAD_PAD, HIDDEN), jnp.float32)
        for h in range(NUM_HEADS):
            out = out.at[h * HEAD_PAD:h * HEAD_PAD + HEAD_DIM, :].set(
                w[h * HEAD_DIM:(h + 1) * HEAD_DIM, :])
        return out

    qkv_w = jnp.stack([jnp.concatenate([pad_head_cols(l["q_w"], ATTN_SCALE),
                                        pad_head_cols(l["k_w"]),
                                        pad_head_cols(l["v_w"])], axis=1)
                       for l in layers], axis=0)                                # (L, H, 1536)
    qkv_b = jnp.stack([jnp.concatenate([pad_head_bias(l["q_b"], ATTN_SCALE),
                                        pad_head_bias(l["k_b"]),
                                        pad_head_bias(l["v_b"])], axis=0)
                       for l in layers], axis=0).reshape(NUM_LAYERS, 1, QKV_PAD)
    o_w = jnp.stack([pad_head_rows(l["o_w"]) for l in layers], axis=0)          # (L, 512, H)

    i_w = jnp.stack([jnp.zeros((HIDDEN, INTER_PAD), jnp.float32)
                     .at[:, :INTERMEDIATE].set(l["i_w"]) for l in layers], axis=0)
    i_b = jnp.stack([jnp.zeros((INTER_PAD,), jnp.float32)
                     .at[:INTERMEDIATE].set(l["i_b"]) for l in layers],
                    axis=0).reshape(NUM_LAYERS, 1, INTER_PAD)
    f_w = jnp.stack([jnp.zeros((INTER_PAD, HIDDEN), jnp.float32)
                     .at[:INTERMEDIATE, :].set(l["f_w"]) for l in layers], axis=0)

    def stk(name, shape):
        return jnp.stack([l[name] for l in layers], axis=0).reshape(shape)

    bf16 = jnp.bfloat16
    packed = {
        "word_emb": p["word_emb"], "pos_emb": p["pos_emb"], "type_emb": p["type_emb"],
        "emb_ln_g": p["emb_ln_g"].reshape(1, HIDDEN),
        "emb_ln_b": p["emb_ln_b"].reshape(1, HIDDEN),
        "qkv_w": qkv_w.astype(bf16),
        "qkv_b": qkv_b,
        "o_w": o_w.astype(bf16),
        "o_b": stk("o_b", (NUM_LAYERS, 1, HIDDEN)),
        "ln1_g": stk("ln1_g", (NUM_LAYERS, 1, HIDDEN)),
        "ln1_b": stk("ln1_b", (NUM_LAYERS, 1, HIDDEN)),
        "i_w": i_w.astype(bf16),
        "i_b": i_b,
        "f_w": f_w.astype(bf16),
        "f_b": stk("f_b", (NUM_LAYERS, 1, HIDDEN)),
        "ln2_g": stk("ln2_g", (NUM_LAYERS, 1, HIDDEN)),
        "ln2_b": stk("ln2_b", (NUM_LAYERS, 1, HIDDEN)),
        "pool_w": p["pool_w"].astype(bf16),
        "pool_b": p["pool_b"].reshape(1, HIDDEN),
        "cls_w": jnp.zeros((HIDDEN, LOGIT_PAD), jnp.float32)
                 .at[:, :NUM_LABELS].set(p["cls_w"]).astype(bf16),
        "cls_b": jnp.zeros((1, LOGIT_PAD), jnp.float32).at[0, :NUM_LABELS].set(p["cls_b"]),
    }
    return packed


def _resident(shape):
    """Full-array weight block, same block for every grid step (stays resident)."""
    nd = len(shape)
    return pl.BlockSpec(shape, lambda b, _nd=nd: (0,) * _nd)


# ---------------- full forward (BertForSequenceClassification) ----------------
@jax.jit
def bert_forward(packed, input_ids, token_type_ids, attention_mask):
    b, s = input_ids.shape

    # embeddings (gathers are glue in plain JAX; see scaling TODO in the header)
    emb = (packed["word_emb"][input_ids]
           + packed["pos_emb"][jnp.arange(s)][None, :, :]
           + packed["type_emb"][token_type_ids]).reshape(b * s, HIDDEN)
    # extended additive attention mask, pre-broadcast to (B, S, S) once in JAX
    mask_row = (1.0 - attention_mask.astype(jnp.float32)) * -10000.0            # (B, S)
    mask_add = jnp.broadcast_to(mask_row[:, None, :], (b, s, s))

    weight_ops = (
        packed["emb_ln_g"], packed["emb_ln_b"],
        packed["qkv_w"], packed["qkv_b"],
        packed["o_w"], packed["o_b"], packed["ln1_g"], packed["ln1_b"],
        packed["i_w"], packed["i_b"], packed["f_w"], packed["f_b"],
        packed["ln2_g"], packed["ln2_b"],
        packed["pool_w"], packed["pool_b"],
        packed["cls_w"], packed["cls_b"],
    )
    operands = (emb, mask_add) + weight_ops

    in_specs = ([pl.BlockSpec((SEQ, HIDDEN), lambda bb: (bb, 0)),        # per-example rows
                 pl.BlockSpec((1, SEQ, SEQ), lambda bb: (bb, 0, 0))]     # per-example mask
                + [_resident(w.shape) for w in weight_ops])

    logits_all = pl.pallas_call(
        _bert_kernel,
        out_shape=jax.ShapeDtypeStruct((b * s, LOGIT_PAD), jnp.float32),
        grid=(b,),
        in_specs=in_specs,
        out_specs=pl.BlockSpec((SEQ, LOGIT_PAD), lambda bb: (bb, 0)),
        compiler_params=pltpu.CompilerParams(dimension_semantics=("parallel",)),
    )(*operands)

    # [CLS] row of each example, then the real label columns
    logits = logits_all.reshape(b, s, LOGIT_PAD)[:, 0, :NUM_LABELS]
    if NUM_LABELS == 2:
        return logits[:, 1]          # matches BERT.forward for label_num == 2
    return logits


if __name__ == "__main__":
    key = jax.random.PRNGKey(0)
    pkey, dkey = jax.random.split(key)
    packed = pack_params(init_params(pkey))

    input_ids = jax.random.randint(dkey, (BATCH, SEQ), 0, VOCAB_SIZE, dtype=jnp.int32)
    token_type_ids = jnp.zeros((BATCH, SEQ), jnp.int32)
    # deterministic attention mask: second example has 2 padding positions
    attention_mask = jnp.array(
        [[1] * SEQ, [1] * (SEQ - 2) + [0, 0]], dtype=jnp.int32)

    out = bert_forward(packed, input_ids, token_type_ids, attention_mask)
    out = jax.block_until_ready(out)
    assert out.shape == (BATCH,)
    print("KERNEL_OK")
</pallas_src>

<mosaic_0001>
module attributes {stable_mosaic.version = 11 : i64} {
  func.func @_bert_kernel(%arg0: i32, %arg1: memref<8x32xf32, #tpu.memory_space<vmem>>, %arg2: memref<1x8x8xf32, #tpu.memory_space<vmem>>, %arg3: memref<1x32xf32, #tpu.memory_space<vmem>>, %arg4: memref<1x32xf32, #tpu.memory_space<vmem>>, %arg5: memref<2x32x1536xbf16, #tpu.memory_space<vmem>>, %arg6: memref<2x1x1536xf32, #tpu.memory_space<vmem>>, %arg7: memref<2x512x32xbf16, #tpu.memory_space<vmem>>, %arg8: memref<2x1x32xf32, #tpu.memory_space<vmem>>, %arg9: memref<2x1x32xf32, #tpu.memory_space<vmem>>, %arg10: memref<2x1x32xf32, #tpu.memory_space<vmem>>, %arg11: memref<2x32x128xbf16, #tpu.memory_space<vmem>>, %arg12: memref<2x1x128xf32, #tpu.memory_space<vmem>>, %arg13: memref<2x128x32xbf16, #tpu.memory_space<vmem>>, %arg14: memref<2x1x32xf32, #tpu.memory_space<vmem>>, %arg15: memref<2x1x32xf32, #tpu.memory_space<vmem>>, %arg16: memref<2x1x32xf32, #tpu.memory_space<vmem>>, %arg17: memref<32x32xbf16, #tpu.memory_space<vmem>>, %arg18: memref<1x32xf32, #tpu.memory_space<vmem>>, %arg19: memref<32x128xbf16, #tpu.memory_space<vmem>>, %arg20: memref<1x128xf32, #tpu.memory_space<vmem>>, %arg21: memref<8x128xf32, #tpu.memory_space<vmem>>) attributes {dimension_semantics = [#tpu.dimension_semantics<parallel>], iteration_bounds = array<i64: 2>, scalar_prefetch = 0 : i64, scratch_operands = 0 : i64, tpu.core_type = #tpu.core_type<tc>, window_params = [{transform_indices = @transform_0, window_bounds = array<i64: 8, 32>}, {transform_indices = @transform_1, window_bounds = array<i64: 1, 8, 8>}, {pipeline_mode = #tpu.pipeline_mode<synchronous>, transform_indices = @transform_2, window_bounds = array<i64: 1, 32>}, {pipeline_mode = #tpu.pipeline_mode<synchronous>, transform_indices = @transform_3, window_bounds = array<i64: 1, 32>}, {pipeline_mode = #tpu.pipeline_mode<synchronous>, transform_indices = @transform_4, window_bounds = array<i64: 2, 32, 1536>}, {pipeline_mode = #tpu.pipeline_mode<synchronous>, transform_indices = @transform_5, window_bounds = array<i64: 2, 1, 1536>}, {pipeline_mode = #tpu.pipeline_mode<synchronous>, transform_indices = @transform_6, window_bounds = array<i64: 2, 512, 32>}, {pipeline_mode = #tpu.pipeline_mode<synchronous>, transform_indices = @transform_7, window_bounds = array<i64: 2, 1, 32>}, {pipeline_mode = #tpu.pipeline_mode<synchronous>, transform_indices = @transform_8, window_bounds = array<i64: 2, 1, 32>}, {pipeline_mode = #tpu.pipeline_mode<synchronous>, transform_indices = @transform_9, window_bounds = array<i64: 2, 1, 32>}, {pipeline_mode = #tpu.pipeline_mode<synchronous>, transform_indices = @transform_10, window_bounds = array<i64: 2, 32, 128>}, {pipeline_mode = #tpu.pipeline_mode<synchronous>, transform_indices = @transform_11, window_bounds = array<i64: 2, 1, 128>}, {pipeline_mode = #tpu.pipeline_mode<synchronous>, transform_indices = @transform_12, window_bounds = array<i64: 2, 128, 32>}, {pipeline_mode = #tpu.pipeline_mode<synchronous>, transform_indices = @transform_13, window_bounds = array<i64: 2, 1, 32>}, {pipeline_mode = #tpu.pipeline_mode<synchronous>, transform_indices = @transform_14, window_bounds = array<i64: 2, 1, 32>}, {pipeline_mode = #tpu.pipeline_mode<synchronous>, transform_indices = @transform_15, window_bounds = array<i64: 2, 1, 32>}, {pipeline_mode = #tpu.pipeline_mode<synchronous>, transform_indices = @transform_16, window_bounds = array<i64: 32, 32>}, {pipeline_mode = #tpu.pipeline_mode<synchronous>, transform_indices = @transform_17, window_bounds = array<i64: 1, 32>}, {pipeline_mode = #tpu.pipeline_mode<synchronous>, transform_indices = @transform_18, window_bounds = array<i64: 32, 128>}, {pipeline_mode = #tpu.pipeline_mode<synchronous>, transform_indices = @transform_19, window_bounds = array<i64: 1, 128>}, {transform_indices = @transform_20, window_bounds = array<i64: 8, 128>}]} {
    %c0 = arith.constant 0 : index
    %c0_0 = arith.constant 0 : index
    %c0_1 = arith.constant 0 : index
    %0 = vector.load %arg2[%c0, %c0_0, %c0_1] : memref<1x8x8xf32, #tpu.memory_space<vmem>>, vector<1x8x8xf32>
    %1 = vector.shape_cast %0 : vector<1x8x8xf32> to vector<8x8xf32>
    %c0_2 = arith.constant 0 : index
    %c0_3 = arith.constant 0 : index
    %2 = vector.load %arg1[%c0_2, %c0_3] : memref<8x32xf32, #tpu.memory_space<vmem>>, vector<8x32xf32>
    %c0_4 = arith.constant 0 : index
    %c0_5 = arith.constant 0 : index
    %3 = vector.load %arg3[%c0_4, %c0_5] : memref<1x32xf32, #tpu.memory_space<vmem>>, vector<1x32xf32>
    %c0_6 = arith.constant 0 : index
    %c0_7 = arith.constant 0 : index
    %4 = vector.load %arg4[%c0_6, %c0_7] : memref<1x32xf32, #tpu.memory_space<vmem>>, vector<1x32xf32>
    %cst = arith.constant dense<0.000000e+00> : vector<8xf32>
    %5 = vector.multi_reduction <add>, %2, %cst [1] : vector<8x32xf32> to vector<8xf32>
    %6 = vector.shape_cast %5 : vector<8xf32> to vector<8x1xf32>
    %cst_8 = arith.constant 3.200000e+01 : f32
    %7 = vector.broadcast %cst_8 : f32 to vector<8x1xf32>
    %8 = arith.divf %6, %7 : vector<8x1xf32>
    %9 = vector.broadcast %8 : vector<8x1xf32> to vector<8x32xf32>
    %10 = arith.subf %2, %9 : vector<8x32xf32>
    %11 = vector.broadcast %8 : vector<8x1xf32> to vector<8x32xf32>
    %12 = arith.subf %2, %11 : vector<8x32xf32>
    %13 = arith.mulf %10, %12 : vector<8x32xf32>
    %cst_9 = arith.constant dense<0.000000e+00> : vector<8xf32>
    %14 = vector.multi_reduction <add>, %13, %cst_9 [1] : vector<8x32xf32> to vector<8xf32>
    %15 = vector.shape_cast %14 : vector<8xf32> to vector<8x1xf32>
    %cst_10 = arith.constant 3.200000e+01 : f32
    %16 = vector.broadcast %cst_10 : f32 to vector<8x1xf32>
    %17 = arith.divf %15, %16 : vector<8x1xf32>
    %18 = vector.broadcast %8 : vector<8x1xf32> to vector<8x32xf32>
    %19 = arith.subf %2, %18 : vector<8x32xf32>
    %cst_11 = arith.constant 9.99999996E-13 : f32
    %20 = vector.broadcast %cst_11 : f32 to vector<8x1xf32>
    %21 = arith.addf %17, %20 : vector<8x1xf32>
    %22 = math.rsqrt %21 : vector<8x1xf32>
    %23 = vector.broadcast %22 : vector<8x1xf32> to vector<8x32xf32>
    %24 = arith.mulf %19, %23 : vector<8x32xf32>
    %25 = vector.broadcast %3 : vector<1x32xf32> to vector<8x32xf32>
    %26 = arith.mulf %24, %25 : vector<8x32xf32>
    %27 = vector.broadcast %4 : vector<1x32xf32> to vector<8x32xf32>
    %28 = arith.addf %26, %27 : vector<8x32xf32>
    %29 = arith.truncf %28 : vector<8x32xf32> to vector<8x32xbf16>
    %c0_12 = arith.constant 0 : index
    %c0_13 = arith.constant 0 : index
    %c0_14 = arith.constant 0 : index
    %30 = vector.load %arg5[%c0_12, %c0_13, %c0_14] : memref<2x32x1536xbf16, #tpu.memory_space<vmem>>, vector<1x32x1536xbf16>
    %31 = vector.shape_cast %30 : vector<1x32x1536xbf16> to vector<32x1536xbf16>
    %cst_15 = arith.constant dense<0.000000e+00> : vector<8x1536xf32>
    %32 = tpu.matmul %29, %31, %cst_15 {dimension_numbers = #tpu.dot_dimension_numbers<[1], [0], [0], [1], [0, 0, 1, 1], [], []>} : vector<8x32xbf16>, vector<32x1536xbf16>, vector<8x1536xf32> -> vector<8x1536xf32>
    %c0_16 = arith.constant 0 : index
    %c0_17 = arith.constant 0 : index
    %c0_18 = arith.constant 0 : index
    %33 = vector.load %arg6[%c0_16, %c0_17, %c0_18] : memref<2x1x1536xf32, #tpu.memory_space<vmem>>, vector<1x1x1536xf32>
    %34 = vector.shape_cast %33 : vector<1x1x1536xf32> to vector<1x1536xf32>
    %35 = vector.broadcast %34 : vector<1x1536xf32> to vector<8x1536xf32>
    %36 = arith.addf %32, %35 : vector<8x1536xf32>
    %37 = vector.extract_strided_slice %36 {offsets = [0, 0], sizes = [8, 128], strides = [1, 1]} : vector<8x1536xf32> to vector<8x128xf32>
    %38 = vector.extract_strided_slice %36 {offsets = [0, 512], sizes = [8, 128], strides = [1, 1]} : vector<8x1536xf32> to vector<8x128xf32>
    %39 = vector.extract_strided_slice %36 {offsets = [0, 1024], sizes = [8, 128], strides = [1, 1]} : vector<8x1536xf32> to vector<8x128xf32>
    %cst_19 = arith.constant dense<0.000000e+00> : vector<8x8xf32>
    %40 = tpu.matmul %37, %38, %cst_19 {dimension_numbers = #tpu.dot_dimension_numbers<[1], [1], [0], [0], [0, 0, 1, 0], [], []>} : vector<8x128xf32>, vector<8x128xf32>, vector<8x8xf32> -> vector<8x8xf32>
    %41 = arith.addf %40, %1 : vector<8x8xf32>
    %cst_20 = arith.constant dense<0xFF800000> : vector<8xf32>
    %42 = vector.multi_reduction <maximumf>, %41, %cst_20 [1] : vector<8x8xf32> to vector<8xf32>
    %43 = vector.shape_cast %42 : vector<8xf32> to vector<8x1xf32>
    %44 = vector.broadcast %43 : vector<8x1xf32> to vector<8x8xf32>
    %45 = arith.subf %41, %44 : vector<8x8xf32>
    %46 = math.exp %45 : vector<8x8xf32>
    %cst_21 = arith.constant dense<0.000000e+00> : vector<8xf32>
    %47 = vector.multi_reduction <add>, %46, %cst_21 [1] : vector<8x8xf32> to vector<8xf32>
    %48 = vector.shape_cast %47 : vector<8xf32> to vector<8x1xf32>
    %49 = tpu.reciprocal %48 {approx = true} : vector<8x1xf32> -> vector<8x1xf32>
    %50 = vector.broadcast %49 : vector<8x1xf32> to vector<8x8xf32>
    %51 = arith.mulf %46, %50 : vector<8x8xf32>
    %cst_22 = arith.constant dense<0.000000e+00> : vector<8x128xf32>
    %52 = tpu.matmul %51, %39, %cst_22 {dimension_numbers = #tpu.dot_dimension_numbers<[1], [0], [0], [1], [0, 0, 1, 1], [], []>} : vector<8x8xf32>, vector<8x128xf32>, vector<8x128xf32> -> vector<8x128xf32>
    %53 = vector.extract_strided_slice %36 {offsets = [0, 128], sizes = [8, 128], strides = [1, 1]} : vector<8x1536xf32> to vector<8x128xf32>
    %54 = vector.extract_strided_slice %36 {offsets = [0, 640], sizes = [8, 128], strides = [1, 1]} : vector<8x1536xf32> to vector<8x128xf32>
    %55 = vector.extract_strided_slice %36 {offsets = [0, 1152], sizes = [8, 128], strides = [1, 1]} : vector<8x1536xf32> to vector<8x128xf32>
    %cst_23 = arith.constant dense<0.000000e+00> : vector<8x8xf32>
    %56 = tpu.matmul %53, %54, %cst_23 {dimension_numbers = #tpu.dot_dimension_numbers<[1], [1], [0], [0], [0, 0, 1, 0], [], []>} : vector<8x128xf32>, vector<8x128xf32>, vector<8x8xf32> -> vector<8x8xf32>
    %57 = arith.addf %56, %1 : vector<8x8xf32>
    %cst_24 = arith.constant dense<0xFF800000> : vector<8xf32>
    %58 = vector.multi_reduction <maximumf>, %57, %cst_24 [1] : vector<8x8xf32> to vector<8xf32>
    %59 = vector.shape_cast %58 : vector<8xf32> to vector<8x1xf32>
    %60 = vector.broadcast %59 : vector<8x1xf32> to vector<8x8xf32>
    %61 = arith.subf %57, %60 : vector<8x8xf32>
    %62 = math.exp %61 : vector<8x8xf32>
    %cst_25 = arith.constant dense<0.000000e+00> : vector<8xf32>
    %63 = vector.multi_reduction <add>, %62, %cst_25 [1] : vector<8x8xf32> to vector<8xf32>
    %64 = vector.shape_cast %63 : vector<8xf32> to vector<8x1xf32>
    %65 = tpu.reciprocal %64 {approx = true} : vector<8x1xf32> -> vector<8x1xf32>
    %66 = vector.broadcast %65 : vector<8x1xf32> to vector<8x8xf32>
    %67 = arith.mulf %62, %66 : vector<8x8xf32>
    %cst_26 = arith.constant dense<0.000000e+00> : vector<8x128xf32>
    %68 = tpu.matmul %67, %55, %cst_26 {dimension_numbers = #tpu.dot_dimension_numbers<[1], [0], [0], [1], [0, 0, 1, 1], [], []>} : vector<8x8xf32>, vector<8x128xf32>, vector<8x128xf32> -> vector<8x128xf32>
    %69 = vector.extract_strided_slice %36 {offsets = [0, 256], sizes = [8, 128], strides = [1, 1]} : vector<8x1536xf32> to vector<8x128xf32>
    %70 = vector.extract_strided_slice %36 {offsets = [0, 768], sizes = [8, 128], strides = [1, 1]} : vector<8x1536xf32> to vector<8x128xf32>
    %71 = vector.extract_strided_slice %36 {offsets = [0, 1280], sizes = [8, 128], strides = [1, 1]} : vector<8x1536xf32> to vector<8x128xf32>
    %cst_27 = arith.constant dense<0.000000e+00> : vector<8x8xf32>
    %72 = tpu.matmul %69, %70, %cst_27 {dimension_numbers = #tpu.dot_dimension_numbers<[1], [1], [0], [0], [0, 0, 1, 0], [], []>} : vector<8x128xf32>, vector<8x128xf32>, vector<8x8xf32> -> vector<8x8xf32>
    %73 = arith.addf %72, %1 : vector<8x8xf32>
    %cst_28 = arith.constant dense<0xFF800000> : vector<8xf32>
    %74 = vector.multi_reduction <maximumf>, %73, %cst_28 [1] : vector<8x8xf32> to vector<8xf32>
    %75 = vector.shape_cast %74 : vector<8xf32> to vector<8x1xf32>
    %76 = vector.broadcast %75 : vector<8x1xf32> to vector<8x8xf32>
    %77 = arith.subf %73, %76 : vector<8x8xf32>
    %78 = math.exp %77 : vector<8x8xf32>
    %cst_29 = arith.constant dense<0.000000e+00> : vector<8xf32>
    %79 = vector.multi_reduction <add>, %78, %cst_29 [1] : vector<8x8xf32> to vector<8xf32>
    %80 = vector.shape_cast %79 : vector<8xf32> to vector<8x1xf32>
    %81 = tpu.reciprocal %80 {approx = true} : vector<8x1xf32> -> vector<8x1xf32>
    %82 = vector.broadcast %81 : vector<8x1xf32> to vector<8x8xf32>
    %83 = arith.mulf %78, %82 : vector<8x8xf32>
    %cst_30 = arith.constant dense<0.000000e+00> : vector<8x128xf32>
    %84 = tpu.matmul %83, %71, %cst_30 {dimension_numbers = #tpu.dot_dimension_numbers<[1], [0], [0], [1], [0, 0, 1, 1], [], []>} : vector<8x8xf32>, vector<8x128xf32>, vector<8x128xf32> -> vector<8x128xf32>
    %85 = vector.extract_strided_slice %36 {offsets = [0, 384], sizes = [8, 128], strides = [1, 1]} : vector<8x1536xf32> to vector<8x128xf32>
    %86 = vector.extract_strided_slice %36 {offsets = [0, 896], sizes = [8, 128], strides = [1, 1]} : vector<8x1536xf32> to vector<8x128xf32>
    %87 = vector.extract_strided_slice %36 {offsets = [0, 1408], sizes = [8, 128], strides = [1, 1]} : vector<8x1536xf32> to vector<8x128xf32>
    %cst_31 = arith.constant dense<0.000000e+00> : vector<8x8xf32>
    %88 = tpu.matmul %85, %86, %cst_31 {dimension_numbers = #tpu.dot_dimension_numbers<[1], [1], [0], [0], [0, 0, 1, 0], [], []>} : vector<8x128xf32>, vector<8x128xf32>, vector<8x8xf32> -> vector<8x8xf32>
    %89 = arith.addf %88, %1 : vector<8x8xf32>
    %cst_32 = arith.constant dense<0xFF800000> : vector<8xf32>
    %90 = vector.multi_reduction <maximumf>, %89, %cst_32 [1] : vector<8x8xf32> to vector<8xf32>
    %91 = vector.shape_cast %90 : vector<8xf32> to vector<8x1xf32>
    %92 = vector.broadcast %91 : vector<8x1xf32> to vector<8x8xf32>
    %93 = arith.subf %89, %92 : vector<8x8xf32>
    %94 = math.exp %93 : vector<8x8xf32>
    %cst_33 = arith.constant dense<0.000000e+00> : vector<8xf32>
    %95 = vector.multi_reduction <add>, %94, %cst_33 [1] : vector<8x8xf32> to vector<8xf32>
    %96 = vector.shape_cast %95 : vector<8xf32> to vector<8x1xf32>
    %97 = tpu.reciprocal %96 {approx = true} : vector<8x1xf32> -> vector<8x1xf32>
    %98 = vector.broadcast %97 : vector<8x1xf32> to vector<8x8xf32>
    %99 = arith.mulf %94, %98 : vector<8x8xf32>
    %cst_34 = arith.constant dense<0.000000e+00> : vector<8x128xf32>
    %100 = tpu.matmul %99, %87, %cst_34 {dimension_numbers = #tpu.dot_dimension_numbers<[1], [0], [0], [1], [0, 0, 1, 1], [], []>} : vector<8x8xf32>, vector<8x128xf32>, vector<8x128xf32> -> vector<8x128xf32>
    %101 = tpu.concatenate %52, %68, %84, %100 in 1 : vector<8x128xf32>, vector<8x128xf32>, vector<8x128xf32>, vector<8x128xf32> -> vector<8x512xf32>
    %102 = arith.truncf %101 : vector<8x512xf32> to vector<8x512xbf16>
    %c0_35 = arith.constant 0 : index
    %c0_36 = arith.constant 0 : index
    %c0_37 = arith.constant 0 : index
    %103 = vector.load %arg7[%c0_35, %c0_36, %c0_37] : memref<2x512x32xbf16, #tpu.memory_space<vmem>>, vector<1x512x32xbf16>
    %104 = vector.shape_cast %103 : vector<1x512x32xbf16> to vector<512x32xbf16>
    %cst_38 = arith.constant dense<0.000000e+00> : vector<8x32xf32>
    %105 = tpu.matmul %102, %104, %cst_38 {dimension_numbers = #tpu.dot_dimension_numbers<[1], [0], [0], [1], [0, 0, 1, 1], [], []>} : vector<8x512xbf16>, vector<512x32xbf16>, vector<8x32xf32> -> vector<8x32xf32>
    %c0_39 = arith.constant 0 : index
    %c0_40 = arith.constant 0 : index
    %c0_41 = arith.constant 0 : index
    %106 = vector.load %arg8[%c0_39, %c0_40, %c0_41] : memref<2x1x32xf32, #tpu.memory_space<vmem>>, vector<1x1x32xf32>
    %107 = vector.shape_cast %106 : vector<1x1x32xf32> to vector<1x32xf32>
    %108 = vector.broadcast %107 : vector<1x32xf32> to vector<8x32xf32>
    %109 = arith.addf %105, %108 : vector<8x32xf32>
    %110 = arith.addf %109, %28 : vector<8x32xf32>
    %c0_42 = arith.constant 0 : index
    %c0_43 = arith.constant 0 : index
    %c0_44 = arith.constant 0 : index
    %111 = vector.load %arg9[%c0_42, %c0_43, %c0_44] : memref<2x1x32xf32, #tpu.memory_space<vmem>>, vector<1x1x32xf32>
    %112 = vector.shape_cast %111 : vector<1x1x32xf32> to vector<1x32xf32>
    %c0_45 = arith.constant 0 : index
    %c0_46 = arith.constant 0 : index
    %c0_47 = arith.constant 0 : index
    %113 = vector.load %arg10[%c0_45, %c0_46, %c0_47] : memref<2x1x32xf32, #tpu.memory_space<vmem>>, vector<1x1x32xf32>
    %114 = vector.shape_cast %113 : vector<1x1x32xf32> to vector<1x32xf32>
    %cst_48 = arith.constant dense<0.000000e+00> : vector<8xf32>
    %115 = vector.multi_reduction <add>, %110, %cst_48 [1] : vector<8x32xf32> to vector<8xf32>
    %116 = vector.shape_cast %115 : vector<8xf32> to vector<8x1xf32>
    %cst_49 = arith.constant 3.200000e+01 : f32
    %117 = vector.broadcast %cst_49 : f32 to vector<8x1xf32>
    %118 = arith.divf %116, %117 : vector<8x1xf32>
    %119 = vector.broadcast %118 : vector<8x1xf32> to vector<8x32xf32>
    %120 = arith.subf %110, %119 : vector<8x32xf32>
    %121 = vector.broadcast %118 : vector<8x1xf32> to vector<8x32xf32>
    %122 = arith.subf %110, %121 : vector<8x32xf32>
    %123 = arith.mulf %120, %122 : vector<8x32xf32>
    %cst_50 = arith.constant dense<0.000000e+00> : vector<8xf32>
    %124 = vector.multi_reduction <add>, %123, %cst_50 [1] : vector<8x32xf32> to vector<8xf32>
    %125 = vector.shape_cast %124 : vector<8xf32> to vector<8x1xf32>
    %cst_51 = arith.constant 3.200000e+01 : f32
    %126 = vector.broadcast %cst_51 : f32 to vector<8x1xf32>
    %127 = arith.divf %125, %126 : vector<8x1xf32>
    %128 = vector.broadcast %118 : vector<8x1xf32> to vector<8x32xf32>
    %129 = arith.subf %110, %128 : vector<8x32xf32>
    %cst_52 = arith.constant 9.99999996E-13 : f32
    %130 = vector.broadcast %cst_52 : f32 to vector<8x1xf32>
    %131 = arith.addf %127, %130 : vector<8x1xf32>
    %132 = math.rsqrt %131 : vector<8x1xf32>
    %133 = vector.broadcast %132 : vector<8x1xf32> to vector<8x32xf32>
    %134 = arith.mulf %129, %133 : vector<8x32xf32>
    %135 = vector.broadcast %112 : vector<1x32xf32> to vector<8x32xf32>
    %136 = arith.mulf %134, %135 : vector<8x32xf32>
    %137 = vector.broadcast %114 : vector<1x32xf32> to vector<8x32xf32>
    %138 = arith.addf %136, %137 : vector<8x32xf32>
    %139 = arith.truncf %138 : vector<8x32xf32> to vector<8x32xbf16>
    %c0_53 = arith.constant 0 : index
    %c0_54 = arith.constant 0 : index
    %c0_55 = arith.constant 0 : index
    %140 = vector.load %arg11[%c0_53, %c0_54, %c0_55] : memref<2x32x128xbf16, #tpu.memory_space<vmem>>, vector<1x32x128xbf16>
    %141 = vector.shape_cast %140 : vector<1x32x128xbf16> to vector<32x128xbf16>
    %cst_56 = arith.constant dense<0.000000e+00> : vector<8x128xf32>
    %142 = tpu.matmul %139, %141, %cst_56 {dimension_numbers = #tpu.dot_dimension_numbers<[1], [0], [0], [1], [0, 0, 1, 1], [], []>} : vector<8x32xbf16>, vector<32x128xbf16>, vector<8x128xf32> -> vector<8x128xf32>
    %c0_57 = arith.constant 0 : index
    %c0_58 = arith.constant 0 : index
    %c0_59 = arith.constant 0 : index
    %143 = vector.load %arg12[%c0_57, %c0_58, %c0_59] : memref<2x1x128xf32, #tpu.memory_space<vmem>>, vector<1x1x128xf32>
    %144 = vector.shape_cast %143 : vector<1x1x128xf32> to vector<1x128xf32>
    %145 = vector.broadcast %144 : vector<1x128xf32> to vector<8x128xf32>
    %146 = arith.addf %142, %145 : vector<8x128xf32>
    %cst_60 = arith.constant 5.000000e-01 : f32
    %147 = vector.broadcast %cst_60 : f32 to vector<8x128xf32>
    %148 = arith.mulf %147, %146 : vector<8x128xf32>
    %cst_61 = arith.constant 4.471500e-02 : f32
    %149 = vector.broadcast %cst_61 : f32 to vector<8x128xf32>
    %150 = arith.mulf %149, %146 : vector<8x128xf32>
    %151 = arith.mulf %150, %146 : vector<8x128xf32>
    %152 = arith.mulf %151, %146 : vector<8x128xf32>
    %153 = arith.addf %146, %152 : vector<8x128xf32>
    %cst_62 = arith.constant 0.797884583 : f32
    %154 = vector.broadcast %cst_62 : f32 to vector<8x128xf32>
    %155 = arith.mulf %154, %153 : vector<8x128xf32>
    %156 = math.tanh %155 : vector<8x128xf32>
    %cst_63 = arith.constant 1.000000e+00 : f32
    %157 = vector.broadcast %cst_63 : f32 to vector<8x128xf32>
    %158 = arith.addf %157, %156 : vector<8x128xf32>
    %159 = arith.mulf %148, %158 : vector<8x128xf32>
    %160 = arith.truncf %159 : vector<8x128xf32> to vector<8x128xbf16>
    %c0_64 = arith.constant 0 : index
    %c0_65 = arith.constant 0 : index
    %c0_66 = arith.constant 0 : index
    %161 = vector.load %arg13[%c0_64, %c0_65, %c0_66] : memref<2x128x32xbf16, #tpu.memory_space<vmem>>, vector<1x128x32xbf16>
    %162 = vector.shape_cast %161 : vector<1x128x32xbf16> to vector<128x32xbf16>
    %cst_67 = arith.constant dense<0.000000e+00> : vector<8x32xf32>
    %163 = tpu.matmul %160, %162, %cst_67 {dimension_numbers = #tpu.dot_dimension_numbers<[1], [0], [0], [1], [0, 0, 1, 1], [], []>} : vector<8x128xbf16>, vector<128x32xbf16>, vector<8x32xf32> -> vector<8x32xf32>
    %c0_68 = arith.constant 0 : index
    %c0_69 = arith.constant 0 : index
    %c0_70 = arith.constant 0 : index
    %164 = vector.load %arg14[%c0_68, %c0_69, %c0_70] : memref<2x1x32xf32, #tpu.memory_space<vmem>>, vector<1x1x32xf32>
    %165 = vector.shape_cast %164 : vector<1x1x32xf32> to vector<1x32xf32>
    %166 = vector.broadcast %165 : vector<1x32xf32> to vector<8x32xf32>
    %167 = arith.addf %163, %166 : vector<8x32xf32>
    %168 = arith.addf %167, %138 : vector<8x32xf32>
    %c0_71 = arith.constant 0 : index
    %c0_72 = arith.constant 0 : index
    %c0_73 = arith.constant 0 : index
    %169 = vector.load %arg15[%c0_71, %c0_72, %c0_73] : memref<2x1x32xf32, #tpu.memory_space<vmem>>, vector<1x1x32xf32>
    %170 = vector.shape_cast %169 : vector<1x1x32xf32> to vector<1x32xf32>
    %c0_74 = arith.constant 0 : index
    %c0_75 = arith.constant 0 : index
    %c0_76 = arith.constant 0 : index
    %171 = vector.load %arg16[%c0_74, %c0_75, %c0_76] : memref<2x1x32xf32, #tpu.memory_space<vmem>>, vector<1x1x32xf32>
    %172 = vector.shape_cast %171 : vector<1x1x32xf32> to vector<1x32xf32>
    %cst_77 = arith.constant dense<0.000000e+00> : vector<8xf32>
    %173 = vector.multi_reduction <add>, %168, %cst_77 [1] : vector<8x32xf32> to vector<8xf32>
    %174 = vector.shape_cast %173 : vector<8xf32> to vector<8x1xf32>
    %cst_78 = arith.constant 3.200000e+01 : f32
    %175 = vector.broadcast %cst_78 : f32 to vector<8x1xf32>
    %176 = arith.divf %174, %175 : vector<8x1xf32>
    %177 = vector.broadcast %176 : vector<8x1xf32> to vector<8x32xf32>
    %178 = arith.subf %168, %177 : vector<8x32xf32>
    %179 = vector.broadcast %176 : vector<8x1xf32> to vector<8x32xf32>
    %180 = arith.subf %168, %179 : vector<8x32xf32>
    %181 = arith.mulf %178, %180 : vector<8x32xf32>
    %cst_79 = arith.constant dense<0.000000e+00> : vector<8xf32>
    %182 = vector.multi_reduction <add>, %181, %cst_79 [1] : vector<8x32xf32> to vector<8xf32>
    %183 = vector.shape_cast %182 : vector<8xf32> to vector<8x1xf32>
    %cst_80 = arith.constant 3.200000e+01 : f32
    %184 = vector.broadcast %cst_80 : f32 to vector<8x1xf32>
    %185 = arith.divf %183, %184 : vector<8x1xf32>
    %186 = vector.broadcast %176 : vector<8x1xf32> to vector<8x32xf32>
    %187 = arith.subf %168, %186 : vector<8x32xf32>
    %cst_81 = arith.constant 9.99999996E-13 : f32
    %188 = vector.broadcast %cst_81 : f32 to vector<8x1xf32>
    %189 = arith.addf %185, %188 : vector<8x1xf32>
    %190 = math.rsqrt %189 : vector<8x1xf32>
    %191 = vector.broadcast %190 : vector<8x1xf32> to vector<8x32xf32>
    %192 = arith.mulf %187, %191 : vector<8x32xf32>
    %193 = vector.broadcast %170 : vector<1x32xf32> to vector<8x32xf32>
    %194 = arith.mulf %192, %193 : vector<8x32xf32>
    %195 = vector.broadcast %172 : vector<1x32xf32> to vector<8x32xf32>
    %196 = arith.addf %194, %195 : vector<8x32xf32>
    %197 = arith.truncf %196 : vector<8x32xf32> to vector<8x32xbf16>
    %c1 = arith.constant 1 : index
    %c0_82 = arith.constant 0 : index
    %c0_83 = arith.constant 0 : index
    %198 = vector.load %arg5[%c1, %c0_82, %c0_83] : memref<2x32x1536xbf16, #tpu.memory_space<vmem>>, vector<1x32x1536xbf16>
    %199 = vector.shape_cast %198 : vector<1x32x1536xbf16> to vector<32x1536xbf16>
    %cst_84 = arith.constant dense<0.000000e+00> : vector<8x1536xf32>
    %200 = tpu.matmul %197, %199, %cst_84 {dimension_numbers = #tpu.dot_dimension_numbers<[1], [0], [0], [1], [0, 0, 1, 1], [], []>} : vector<8x32xbf16>, vector<32x1536xbf16>, vector<8x1536xf32> -> vector<8x1536xf32>
    %c1_85 = arith.constant 1 : index
    %c0_86 = arith.constant 0 : index
    %c0_87 = arith.constant 0 : index
    %201 = vector.load %arg6[%c1_85, %c0_86, %c0_87] : memref<2x1x1536xf32, #tpu.memory_space<vmem>>, vector<1x1x1536xf32>
    %202 = vector.shape_cast %201 : vector<1x1x1536xf32> to vector<1x1536xf32>
    %203 = vector.broadcast %202 : vector<1x1536xf32> to vector<8x1536xf32>
    %204 = arith.addf %200, %203 : vector<8x1536xf32>
    %205 = vector.extract_strided_slice %204 {offsets = [0, 0], sizes = [8, 128], strides = [1, 1]} : vector<8x1536xf32> to vector<8x128xf32>
    %206 = vector.extract_strided_slice %204 {offsets = [0, 512], sizes = [8, 128], strides = [1, 1]} : vector<8x1536xf32> to vector<8x128xf32>
    %207 = vector.extract_strided_slice %204 {offsets = [0, 1024], sizes = [8, 128], strides = [1, 1]} : vector<8x1536xf32> to vector<8x128xf32>
    %cst_88 = arith.constant dense<0.000000e+00> : vector<8x8xf32>
    %208 = tpu.matmul %205, %206, %cst_88 {dimension_numbers = #tpu.dot_dimension_numbers<[1], [1], [0], [0], [0, 0, 1, 0], [], []>} : vector<8x128xf32>, vector<8x128xf32>, vector<8x8xf32> -> vector<8x8xf32>
    %209 = arith.addf %208, %1 : vector<8x8xf32>
    %cst_89 = arith.constant dense<0xFF800000> : vector<8xf32>
    %210 = vector.multi_reduction <maximumf>, %209, %cst_89 [1] : vector<8x8xf32> to vector<8xf32>
    %211 = vector.shape_cast %210 : vector<8xf32> to vector<8x1xf32>
    %212 = vector.broadcast %211 : vector<8x1xf32> to vector<8x8xf32>
    %213 = arith.subf %209, %212 : vector<8x8xf32>
    %214 = math.exp %213 : vector<8x8xf32>
    %cst_90 = arith.constant dense<0.000000e+00> : vector<8xf32>
    %215 = vector.multi_reduction <add>, %214, %cst_90 [1] : vector<8x8xf32> to vector<8xf32>
    %216 = vector.shape_cast %215 : vector<8xf32> to vector<8x1xf32>
    %217 = tpu.reciprocal %216 {approx = true} : vector<8x1xf32> -> vector<8x1xf32>
    %218 = vector.broadcast %217 : vector<8x1xf32> to vector<8x8xf32>
    %219 = arith.mulf %214, %218 : vector<8x8xf32>
    %cst_91 = arith.constant dense<0.000000e+00> : vector<8x128xf32>
    %220 = tpu.matmul %219, %207, %cst_91 {dimension_numbers = #tpu.dot_dimension_numbers<[1], [0], [0], [1], [0, 0, 1, 1], [], []>} : vector<8x8xf32>, vector<8x128xf32>, vector<8x128xf32> -> vector<8x128xf32>
    %221 = vector.extract_strided_slice %204 {offsets = [0, 128], sizes = [8, 128], strides = [1, 1]} : vector<8x1536xf32> to vector<8x128xf32>
    %222 = vector.extract_strided_slice %204 {offsets = [0, 640], sizes = [8, 128], strides = [1, 1]} : vector<8x1536xf32> to vector<8x128xf32>
    %223 = vector.extract_strided_slice %204 {offsets = [0, 1152], sizes = [8, 128], strides = [1, 1]} : vector<8x1536xf32> to vector<8x128xf32>
    %cst_92 = arith.constant dense<0.000000e+00> : vector<8x8xf32>
    %224 = tpu.matmul %221, %222, %cst_92 {dimension_numbers = #tpu.dot_dimension_numbers<[1], [1], [0], [0], [0, 0, 1, 0], [], []>} : vector<8x128xf32>, vector<8x128xf32>, vector<8x8xf32> -> vector<8x8xf32>
    %225 = arith.addf %224, %1 : vector<8x8xf32>
    %cst_93 = arith.constant dense<0xFF800000> : vector<8xf32>
    %226 = vector.multi_reduction <maximumf>, %225, %cst_93 [1] : vector<8x8xf32> to vector<8xf32>
    %227 = vector.shape_cast %226 : vector<8xf32> to vector<8x1xf32>
    %228 = vector.broadcast %227 : vector<8x1xf32> to vector<8x8xf32>
    %229 = arith.subf %225, %228 : vector<8x8xf32>
    %230 = math.exp %229 : vector<8x8xf32>
    %cst_94 = arith.constant dense<0.000000e+00> : vector<8xf32>
    %231 = vector.multi_reduction <add>, %230, %cst_94 [1] : vector<8x8xf32> to vector<8xf32>
    %232 = vector.shape_cast %231 : vector<8xf32> to vector<8x1xf32>
    %233 = tpu.reciprocal %232 {approx = true} : vector<8x1xf32> -> vector<8x1xf32>
    %234 = vector.broadcast %233 : vector<8x1xf32> to vector<8x8xf32>
    %235 = arith.mulf %230, %234 : vector<8x8xf32>
    %cst_95 = arith.constant dense<0.000000e+00> : vector<8x128xf32>
    %236 = tpu.matmul %235, %223, %cst_95 {dimension_numbers = #tpu.dot_dimension_numbers<[1], [0], [0], [1], [0, 0, 1, 1], [], []>} : vector<8x8xf32>, vector<8x128xf32>, vector<8x128xf32> -> vector<8x128xf32>
    %237 = vector.extract_strided_slice %204 {offsets = [0, 256], sizes = [8, 128], strides = [1, 1]} : vector<8x1536xf32> to vector<8x128xf32>
    %238 = vector.extract_strided_slice %204 {offsets = [0, 768], sizes = [8, 128], strides = [1, 1]} : vector<8x1536xf32> to vector<8x128xf32>
    %239 = vector.extract_strided_slice %204 {offsets = [0, 1280], sizes = [8, 128], strides = [1, 1]} : vector<8x1536xf32> to vector<8x128xf32>
    %cst_96 = arith.constant dense<0.000000e+00> : vector<8x8xf32>
    %240 = tpu.matmul %237, %238, %cst_96 {dimension_numbers = #tpu.dot_dimension_numbers<[1], [1], [0], [0], [0, 0, 1, 0], [], []>} : vector<8x128xf32>, vector<8x128xf32>, vector<8x8xf32> -> vector<8x8xf32>
    %241 = arith.addf %240, %1 : vector<8x8xf32>
    %cst_97 = arith.constant dense<0xFF800000> : vector<8xf32>
    %242 = vector.multi_reduction <maximumf>, %241, %cst_97 [1] : vector<8x8xf32> to vector<8xf32>
    %243 = vector.shape_cast %242 : vector<8xf32> to vector<8x1xf32>
    %244 = vector.broadcast %243 : vector<8x1xf32> to vector<8x8xf32>
    %245 = arith.subf %241, %244 : vector<8x8xf32>
    %246 = math.exp %245 : vector<8x8xf32>
    %cst_98 = arith.constant dense<0.000000e+00> : vector<8xf32>
    %247 = vector.multi_reduction <add>, %246, %cst_98 [1] : vector<8x8xf32> to vector<8xf32>
    %248 = vector.shape_cast %247 : vector<8xf32> to vector<8x1xf32>
    %249 = tpu.reciprocal %248 {approx = true} : vector<8x1xf32> -> vector<8x1xf32>
    %250 = vector.broadcast %249 : vector<8x1xf32> to vector<8x8xf32>
    %251 = arith.mulf %246, %250 : vector<8x8xf32>
    %cst_99 = arith.constant dense<0.000000e+00> : vector<8x128xf32>
    %252 = tpu.matmul %251, %239, %cst_99 {dimension_numbers = #tpu.dot_dimension_numbers<[1], [0], [0], [1], [0, 0, 1, 1], [], []>} : vector<8x8xf32>, vector<8x128xf32>, vector<8x128xf32> -> vector<8x128xf32>
    %253 = vector.extract_strided_slice %204 {offsets = [0, 384], sizes = [8, 128], strides = [1, 1]} : vector<8x1536xf32> to vector<8x128xf32>
    %254 = vector.extract_strided_slice %204 {offsets = [0, 896], sizes = [8, 128], strides = [1, 1]} : vector<8x1536xf32> to vector<8x128xf32>
    %255 = vector.extract_strided_slice %204 {offsets = [0, 1408], sizes = [8, 128], strides = [1, 1]} : vector<8x1536xf32> to vector<8x128xf32>
    %cst_100 = arith.constant dense<0.000000e+00> : vector<8x8xf32>
    %256 = tpu.matmul %253, %254, %cst_100 {dimension_numbers = #tpu.dot_dimension_numbers<[1], [1], [0], [0], [0, 0, 1, 0], [], []>} : vector<8x128xf32>, vector<8x128xf32>, vector<8x8xf32> -> vector<8x8xf32>
    %257 = arith.addf %256, %1 : vector<8x8xf32>
    %cst_101 = arith.constant dense<0xFF800000> : vector<8xf32>
    %258 = vector.multi_reduction <maximumf>, %257, %cst_101 [1] : vector<8x8xf32> to vector<8xf32>
    %259 = vector.shape_cast %258 : vector<8xf32> to vector<8x1xf32>
    %260 = vector.broadcast %259 : vector<8x1xf32> to vector<8x8xf32>
    %261 = arith.subf %257, %260 : vector<8x8xf32>
    %262 = math.exp %261 : vector<8x8xf32>
    %cst_102 = arith.constant dense<0.000000e+00> : vector<8xf32>
    %263 = vector.multi_reduction <add>, %262, %cst_102 [1] : vector<8x8xf32> to vector<8xf32>
    %264 = vector.shape_cast %263 : vector<8xf32> to vector<8x1xf32>
    %265 = tpu.reciprocal %264 {approx = true} : vector<8x1xf32> -> vector<8x1xf32>
    %266 = vector.broadcast %265 : vector<8x1xf32> to vector<8x8xf32>
    %267 = arith.mulf %262, %266 : vector<8x8xf32>
    %cst_103 = arith.constant dense<0.000000e+00> : vector<8x128xf32>
    %268 = tpu.matmul %267, %255, %cst_103 {dimension_numbers = #tpu.dot_dimension_numbers<[1], [0], [0], [1], [0, 0, 1, 1], [], []>} : vector<8x8xf32>, vector<8x128xf32>, vector<8x128xf32> -> vector<8x128xf32>
    %269 = tpu.concatenate %220, %236, %252, %268 in 1 : vector<8x128xf32>, vector<8x128xf32>, vector<8x128xf32>, vector<8x128xf32> -> vector<8x512xf32>
    %270 = arith.truncf %269 : vector<8x512xf32> to vector<8x512xbf16>
    %c1_104 = arith.constant 1 : index
    %c0_105 = arith.constant 0 : index
    %c0_106 = arith.constant 0 : index
    %271 = vector.load %arg7[%c1_104, %c0_105, %c0_106] : memref<2x512x32xbf16, #tpu.memory_space<vmem>>, vector<1x512x32xbf16>
    %272 = vector.shape_cast %271 : vector<1x512x32xbf16> to vector<512x32xbf16>
    %cst_107 = arith.constant dense<0.000000e+00> : vector<8x32xf32>
    %273 = tpu.matmul %270, %272, %cst_107 {dimension_numbers = #tpu.dot_dimension_numbers<[1], [0], [0], [1], [0, 0, 1, 1], [], []>} : vector<8x512xbf16>, vector<512x32xbf16>, vector<8x32xf32> -> vector<8x32xf32>
    %c1_108 = arith.constant 1 : index
    %c0_109 = arith.constant 0 : index
    %c0_110 = arith.constant 0 : index
    %274 = vector.load %arg8[%c1_108, %c0_109, %c0_110] : memref<2x1x32xf32, #tpu.memory_space<vmem>>, vector<1x1x32xf32>
    %275 = vector.shape_cast %274 : vector<1x1x32xf32> to vector<1x32xf32>
    %276 = vector.broadcast %275 : vector<1x32xf32> to vector<8x32xf32>
    %277 = arith.addf %273, %276 : vector<8x32xf32>
    %278 = arith.addf %277, %196 : vector<8x32xf32>
    %c1_111 = arith.constant 1 : index
    %c0_112 = arith.constant 0 : index
    %c0_113 = arith.constant 0 : index
    %279 = vector.load %arg9[%c1_111, %c0_112, %c0_113] : memref<2x1x32xf32, #tpu.memory_space<vmem>>, vector<1x1x32xf32>
    %280 = vector.shape_cast %279 : vector<1x1x32xf32> to vector<1x32xf32>
    %c1_114 = arith.constant 1 : index
    %c0_115 = arith.constant 0 : index
    %c0_116 = arith.constant 0 : index
    %281 = vector.load %arg10[%c1_114, %c0_115, %c0_116] : memref<2x1x32xf32, #tpu.memory_space<vmem>>, vector<1x1x32xf32>
    %282 = vector.shape_cast %281 : vector<1x1x32xf32> to vector<1x32xf32>
    %cst_117 = arith.constant dense<0.000000e+00> : vector<8xf32>
    %283 = vector.multi_reduction <add>, %278, %cst_117 [1] : vector<8x32xf32> to vector<8xf32>
    %284 = vector.shape_cast %283 : vector<8xf32> to vector<8x1xf32>
    %cst_118 = arith.constant 3.200000e+01 : f32
    %285 = vector.broadcast %cst_118 : f32 to vector<8x1xf32>
    %286 = arith.divf %284, %285 : vector<8x1xf32>
    %287 = vector.broadcast %286 : vector<8x1xf32> to vector<8x32xf32>
    %288 = arith.subf %278, %287 : vector<8x32xf32>
    %289 = vector.broadcast %286 : vector<8x1xf32> to vector<8x32xf32>
    %290 = arith.subf %278, %289 : vector<8x32xf32>
    %291 = arith.mulf %288, %290 : vector<8x32xf32>
    %cst_119 = arith.constant dense<0.000000e+00> : vector<8xf32>
    %292 = vector.multi_reduction <add>, %291, %cst_119 [1] : vector<8x32xf32> to vector<8xf32>
    %293 = vector.shape_cast %292 : vector<8xf32> to vector<8x1xf32>
    %cst_120 = arith.constant 3.200000e+01 : f32
    %294 = vector.broadcast %cst_120 : f32 to vector<8x1xf32>
    %295 = arith.divf %293, %294 : vector<8x1xf32>
    %296 = vector.broadcast %286 : vector<8x1xf32> to vector<8x32xf32>
    %297 = arith.subf %278, %296 : vector<8x32xf32>
    %cst_121 = arith.constant 9.99999996E-13 : f32
    %298 = vector.broadcast %cst_121 : f32 to vector<8x1xf32>
    %299 = arith.addf %295, %298 : vector<8x1xf32>
    %300 = math.rsqrt %299 : vector<8x1xf32>
    %301 = vector.broadcast %300 : vector<8x1xf32> to vector<8x32xf32>
    %302 = arith.mulf %297, %301 : vector<8x32xf32>
    %303 = vector.broadcast %280 : vector<1x32xf32> to vector<8x32xf32>
    %304 = arith.mulf %302, %303 : vector<8x32xf32>
    %305 = vector.broadcast %282 : vector<1x32xf32> to vector<8x32xf32>
    %306 = arith.addf %304, %305 : vector<8x32xf32>
    %307 = arith.truncf %306 : vector<8x32xf32> to vector<8x32xbf16>
    %c1_122 = arith.constant 1 : index
    %c0_123 = arith.constant 0 : index
    %c0_124 = arith.constant 0 : index
    %308 = vector.load %arg11[%c1_122, %c0_123, %c0_124] : memref<2x32x128xbf16, #tpu.memory_space<vmem>>, vector<1x32x128xbf16>
    %309 = vector.shape_cast %308 : vector<1x32x128xbf16> to vector<32x128xbf16>
    %cst_125 = arith.constant dense<0.000000e+00> : vector<8x128xf32>
    %310 = tpu.matmul %307, %309, %cst_125 {dimension_numbers = #tpu.dot_dimension_numbers<[1], [0], [0], [1], [0, 0, 1, 1], [], []>} : vector<8x32xbf16>, vector<32x128xbf16>, vector<8x128xf32> -> vector<8x128xf32>
    %c1_126 = arith.constant 1 : index
    %c0_127 = arith.constant 0 : index
    %c0_128 = arith.constant 0 : index
    %311 = vector.load %arg12[%c1_126, %c0_127, %c0_128] : memref<2x1x128xf32, #tpu.memory_space<vmem>>, vector<1x1x128xf32>
    %312 = vector.shape_cast %311 : vector<1x1x128xf32> to vector<1x128xf32>
    %313 = vector.broadcast %312 : vector<1x128xf32> to vector<8x128xf32>
    %314 = arith.addf %310, %313 : vector<8x128xf32>
    %cst_129 = arith.constant 5.000000e-01 : f32
    %315 = vector.broadcast %cst_129 : f32 to vector<8x128xf32>
    %316 = arith.mulf %315, %314 : vector<8x128xf32>
    %cst_130 = arith.constant 4.471500e-02 : f32
    %317 = vector.broadcast %cst_130 : f32 to vector<8x128xf32>
    %318 = arith.mulf %317, %314 : vector<8x128xf32>
    %319 = arith.mulf %318, %314 : vector<8x128xf32>
    %320 = arith.mulf %319, %314 : vector<8x128xf32>
    %321 = arith.addf %314, %320 : vector<8x128xf32>
    %cst_131 = arith.constant 0.797884583 : f32
    %322 = vector.broadcast %cst_131 : f32 to vector<8x128xf32>
    %323 = arith.mulf %322, %321 : vector<8x128xf32>
    %324 = math.tanh %323 : vector<8x128xf32>
    %cst_132 = arith.constant 1.000000e+00 : f32
    %325 = vector.broadcast %cst_132 : f32 to vector<8x128xf32>
    %326 = arith.addf %325, %324 : vector<8x128xf32>
    %327 = arith.mulf %316, %326 : vector<8x128xf32>
    %328 = arith.truncf %327 : vector<8x128xf32> to vector<8x128xbf16>
    %c1_133 = arith.constant 1 : index
    %c0_134 = arith.constant 0 : index
    %c0_135 = arith.constant 0 : index
    %329 = vector.load %arg13[%c1_133, %c0_134, %c0_135] : memref<2x128x32xbf16, #tpu.memory_space<vmem>>, vector<1x128x32xbf16>
    %330 = vector.shape_cast %329 : vector<1x128x32xbf16> to vector<128x32xbf16>
    %cst_136 = arith.constant dense<0.000000e+00> : vector<8x32xf32>
    %331 = tpu.matmul %328, %330, %cst_136 {dimension_numbers = #tpu.dot_dimension_numbers<[1], [0], [0], [1], [0, 0, 1, 1], [], []>} : vector<8x128xbf16>, vector<128x32xbf16>, vector<8x32xf32> -> vector<8x32xf32>
    %c1_137 = arith.constant 1 : index
    %c0_138 = arith.constant 0 : index
    %c0_139 = arith.constant 0 : index
    %332 = vector.load %arg14[%c1_137, %c0_138, %c0_139] : memref<2x1x32xf32, #tpu.memory_space<vmem>>, vector<1x1x32xf32>
    %333 = vector.shape_cast %332 : vector<1x1x32xf32> to vector<1x32xf32>
    %334 = vector.broadcast %333 : vector<1x32xf32> to vector<8x32xf32>
    %335 = arith.addf %331, %334 : vector<8x32xf32>
    %336 = arith.addf %335, %306 : vector<8x32xf32>
    %c1_140 = arith.constant 1 : index
    %c0_141 = arith.constant 0 : index
    %c0_142 = arith.constant 0 : index
    %337 = vector.load %arg15[%c1_140, %c0_141, %c0_142] : memref<2x1x32xf32, #tpu.memory_space<vmem>>, vector<1x1x32xf32>
    %338 = vector.shape_cast %337 : vector<1x1x32xf32> to vector<1x32xf32>
    %c1_143 = arith.constant 1 : index
    %c0_144 = arith.constant 0 : index
    %c0_145 = arith.constant 0 : index
    %339 = vector.load %arg16[%c1_143, %c0_144, %c0_145] : memref<2x1x32xf32, #tpu.memory_space<vmem>>, vector<1x1x32xf32>
    %340 = vector.shape_cast %339 : vector<1x1x32xf32> to vector<1x32xf32>
    %cst_146 = arith.constant dense<0.000000e+00> : vector<8xf32>
    %341 = vector.multi_reduction <add>, %336, %cst_146 [1] : vector<8x32xf32> to vector<8xf32>
    %342 = vector.shape_cast %341 : vector<8xf32> to vector<8x1xf32>
    %cst_147 = arith.constant 3.200000e+01 : f32
    %343 = vector.broadcast %cst_147 : f32 to vector<8x1xf32>
    %344 = arith.divf %342, %343 : vector<8x1xf32>
    %345 = vector.broadcast %344 : vector<8x1xf32> to vector<8x32xf32>
    %346 = arith.subf %336, %345 : vector<8x32xf32>
    %347 = vector.broadcast %344 : vector<8x1xf32> to vector<8x32xf32>
    %348 = arith.subf %336, %347 : vector<8x32xf32>
    %349 = arith.mulf %346, %348 : vector<8x32xf32>
    %cst_148 = arith.constant dense<0.000000e+00> : vector<8xf32>
    %350 = vector.multi_reduction <add>, %349, %cst_148 [1] : vector<8x32xf32> to vector<8xf32>
    %351 = vector.shape_cast %350 : vector<8xf32> to vector<8x1xf32>
    %cst_149 = arith.constant 3.200000e+01 : f32
    %352 = vector.broadcast %cst_149 : f32 to vector<8x1xf32>
    %353 = arith.divf %351, %352 : vector<8x1xf32>
    %354 = vector.broadcast %344 : vector<8x1xf32> to vector<8x32xf32>
    %355 = arith.subf %336, %354 : vector<8x32xf32>
    %cst_150 = arith.constant 9.99999996E-13 : f32
    %356 = vector.broadcast %cst_150 : f32 to vector<8x1xf32>
    %357 = arith.addf %353, %356 : vector<8x1xf32>
    %358 = math.rsqrt %357 : vector<8x1xf32>
    %359 = vector.broadcast %358 : vector<8x1xf32> to vector<8x32xf32>
    %360 = arith.mulf %355, %359 : vector<8x32xf32>
    %361 = vector.broadcast %338 : vector<1x32xf32> to vector<8x32xf32>
    %362 = arith.mulf %360, %361 : vector<8x32xf32>
    %363 = vector.broadcast %340 : vector<1x32xf32> to vector<8x32xf32>
    %364 = arith.addf %362, %363 : vector<8x32xf32>
    %365 = arith.truncf %364 : vector<8x32xf32> to vector<8x32xbf16>
    %c0_151 = arith.constant 0 : index
    %c0_152 = arith.constant 0 : index
    %366 = vector.load %arg17[%c0_151, %c0_152] : memref<32x32xbf16, #tpu.memory_space<vmem>>, vector<32x32xbf16>
    %cst_153 = arith.constant dense<0.000000e+00> : vector<8x32xf32>
    %367 = tpu.matmul %365, %366, %cst_153 {dimension_numbers = #tpu.dot_dimension_numbers<[1], [0], [0], [1], [0, 0, 1, 1], [], []>} : vector<8x32xbf16>, vector<32x32xbf16>, vector<8x32xf32> -> vector<8x32xf32>
    %c0_154 = arith.constant 0 : index
    %c0_155 = arith.constant 0 : index
    %368 = vector.load %arg18[%c0_154, %c0_155] : memref<1x32xf32, #tpu.memory_space<vmem>>, vector<1x32xf32>
    %369 = vector.broadcast %368 : vector<1x32xf32> to vector<8x32xf32>
    %370 = arith.addf %367, %369 : vector<8x32xf32>
    %371 = math.tanh %370 : vector<8x32xf32>
    %372 = arith.truncf %371 : vector<8x32xf32> to vector<8x32xbf16>
    %c0_156 = arith.constant 0 : index
    %c0_157 = arith.constant 0 : index
    %373 = vector.load %arg19[%c0_156, %c0_157] : memref<32x128xbf16, #tpu.memory_space<vmem>>, vector<32x128xbf16>
    %cst_158 = arith.constant dense<0.000000e+00> : vector<8x128xf32>
    %374 = tpu.matmul %372, %373, %cst_158 {dimension_numbers = #tpu.dot_dimension_numbers<[1], [0], [0], [1], [0, 0, 1, 1], [], []>} : vector<8x32xbf16>, vector<32x128xbf16>, vector<8x128xf32> -> vector<8x128xf32>
    %c0_159 = arith.constant 0 : index
    %c0_160 = arith.constant 0 : index
    %375 = vector.load %arg20[%c0_159, %c0_160] : memref<1x128xf32, #tpu.memory_space<vmem>>, vector<1x128xf32>
    %376 = vector.broadcast %375 : vector<1x128xf32> to vector<8x128xf32>
    %377 = arith.addf %374, %376 : vector<8x128xf32>
    %c0_161 = arith.constant 0 : index
    %c0_162 = arith.constant 0 : index
    %378 = vector.load %arg21[%c0_161, %c0_162] : memref<8x128xf32, #tpu.memory_space<vmem>>, vector<8x128xf32>
    tpu.vector_store %arg21[%c0_161, %c0_162], %377 {strides = array<i32>} : memref<8x128xf32, #tpu.memory_space<vmem>>, vector<8x128xf32>,
    return
  }
  func.func @transform_0(%arg0: i32) -> (i32, i32) {
    %c0_i32 = arith.constant 0 : i32
    %c0_i32_0 = arith.constant 0 : i32
    return %arg0, %c0_i32 : i32, i32
  }
  func.func @transform_1(%arg0: i32) -> (i32, i32, i32) {
    %c0_i32 = arith.constant 0 : i32
    %c0_i32_0 = arith.constant 0 : i32
    %c0_i32_1 = arith.constant 0 : i32
    return %arg0, %c0_i32, %c0_i32_0 : i32, i32, i32
  }
  func.func @transform_2(%arg0: i32) -> (i32, i32) {
    %c0_i32 = arith.constant 0 : i32
    %c0_i32_0 = arith.constant 0 : i32
    %c0_i32_1 = arith.constant 0 : i32
    return %c0_i32, %c0_i32_0 : i32, i32
  }
  func.func @transform_3(%arg0: i32) -> (i32, i32) {
    %c0_i32 = arith.constant 0 : i32
    %c0_i32_0 = arith.constant 0 : i32
    %c0_i32_1 = arith.constant 0 : i32
    return %c0_i32, %c0_i32_0 : i32, i32
  }
  func.func @transform_4(%arg0: i32) -> (i32, i32, i32) {
    %c0_i32 = arith.constant 0 : i32
    %c0_i32_0 = arith.constant 0 : i32
    %c0_i32_1 = arith.constant 0 : i32
    %c0_i32_2 = arith.constant 0 : i32
    return %c0_i32, %c0_i32_0, %c0_i32_1 : i32, i32, i32
  }
  func.func @transform_5(%arg0: i32) -> (i32, i32, i32) {
    %c0_i32 = arith.constant 0 : i32
    %c0_i32_0 = arith.constant 0 : i32
    %c0_i32_1 = arith.constant 0 : i32
    %c0_i32_2 = arith.constant 0 : i32
    return %c0_i32, %c0_i32_0, %c0_i32_1 : i32, i32, i32
  }
  func.func @transform_6(%arg0: i32) -> (i32, i32, i32) {
    %c0_i32 = arith.constant 0 : i32
    %c0_i32_0 = arith.constant 0 : i32
    %c0_i32_1 = arith.constant 0 : i32
    %c0_i32_2 = arith.constant 0 : i32
    return %c0_i32, %c0_i32_0, %c0_i32_1 : i32, i32, i32
  }
  func.func @transform_7(%arg0: i32) -> (i32, i32, i32) {
    %c0_i32 = arith.constant 0 : i32
    %c0_i32_0 = arith.constant 0 : i32
    %c0_i32_1 = arith.constant 0 : i32
    %c0_i32_2 = arith.constant 0 : i32
    return %c0_i32, %c0_i32_0, %c0_i32_1 : i32, i32, i32
  }
  func.func @transform_8(%arg0: i32) -> (i32, i32, i32) {
    %c0_i32 = arith.constant 0 : i32
    %c0_i32_0 = arith.constant 0 : i32
    %c0_i32_1 = arith.constant 0 : i32
    %c0_i32_2 = arith.constant 0 : i32
    return %c0_i32, %c0_i32_0, %c0_i32_1 : i32, i32, i32
  }
  func.func @transform_9(%arg0: i32) -> (i32, i32, i32) {
    %c0_i32 = arith.constant 0 : i32
    %c0_i32_0 = arith.constant 0 : i32
    %c0_i32_1 = arith.constant 0 : i32
    %c0_i32_2 = arith.constant 0 : i32
    return %c0_i32, %c0_i32_0, %c0_i32_1 : i32, i32, i32
  }
  func.func @transform_10(%arg0: i32) -> (i32, i32, i32) {
    %c0_i32 = arith.constant 0 : i32
    %c0_i32_0 = arith.constant 0 : i32
    %c0_i32_1 = arith.constant 0 : i32
    %c0_i32_2 = arith.constant 0 : i32
    return %c0_i32, %c0_i32_0, %c0_i32_1 : i32, i32, i32
  }
  func.func @transform_11(%arg0: i32) -> (i32, i32, i32) {
    %c0_i32 = arith.constant 0 : i32
    %c0_i32_0 = arith.constant 0 : i32
    %c0_i32_1 = arith.constant 0 : i32
    %c0_i32_2 = arith.constant 0 : i32
    return %c0_i32, %c0_i32_0, %c0_i32_1 : i32, i32, i32
  }
  func.func @transform_12(%arg0: i32) -> (i32, i32, i32) {
    %c0_i32 = arith.constant 0 : i32
    %c0_i32_0 = arith.constant 0 : i32
    %c0_i32_1 = arith.constant 0 : i32
    %c0_i32_2 = arith.constant 0 : i32
    return %c0_i32, %c0_i32_0, %c0_i32_1 : i32, i32, i32
  }
  func.func @transform_13(%arg0: i32) -> (i32, i32, i32) {
    %c0_i32 = arith.constant 0 : i32
    %c0_i32_0 = arith.constant 0 : i32
    %c0_i32_1 = arith.constant 0 : i32
    %c0_i32_2 = arith.constant 0 : i32
    return %c0_i32, %c0_i32_0, %c0_i32_1 : i32, i32, i32
  }
  func.func @transform_14(%arg0: i32) -> (i32, i32, i32) {
    %c0_i32 = arith.constant 0 : i32
    %c0_i32_0 = arith.constant 0 : i32
    %c0_i32_1 = arith.constant 0 : i32
    %c0_i32_2 = arith.constant 0 : i32
    return %c0_i32, %c0_i32_0, %c0_i32_1 : i32, i32, i32
  }
  func.func @transform_15(%arg0: i32) -> (i32, i32, i32) {
    %c0_i32 = arith.constant 0 : i32
    %c0_i32_0 = arith.constant 0 : i32
    %c0_i32_1 = arith.constant 0 : i32
    %c0_i32_2 = arith.constant 0 : i32
    return %c0_i32, %c0_i32_0, %c0_i32_1 : i32, i32, i32
  }
  func.func @transform_16(%arg0: i32) -> (i32, i32) {
    %c0_i32 = arith.constant 0 : i32
    %c0_i32_0 = arith.constant 0 : i32
    %c0_i32_1 = arith.constant 0 : i32
    return %c0_i32, %c0_i32_0 : i32, i32
  }
  func.func @transform_17(%arg0: i32) -> (i32, i32) {
    %c0_i32 = arith.constant 0 : i32
    %c0_i32_0 = arith.constant 0 : i32
    %c0_i32_1 = arith.constant 0 : i32
    return %c0_i32, %c0_i32_0 : i32, i32
  }
  func.func @transform_18(%arg0: i32) -> (i32, i32) {
    %c0_i32 = arith.constant 0 : i32
    %c0_i32_0 = arith.constant 0 : i32
    %c0_i32_1 = arith.constant 0 : i32
    return %c0_i32, %c0_i32_0 : i32, i32
  }
  func.func @transform_19(%arg0: i32) -> (i32, i32) {
    %c0_i32 = arith.constant 0 : i32
    %c0_i32_0 = arith.constant 0 : i32
    %c0_i32_1 = arith.constant 0 : i32
    return %c0_i32, %c0_i32_0 : i32, i32
  }
  func.func @transform_20(%arg0: i32) -> (i32, i32) {
    %c0_i32 = arith.constant 0 : i32
    %c0_i32_0 = arith.constant 0 : i32
    return %arg0, %c0_i32 : i32, i32
  }
}

</mosaic_0001>

<llo_original>
// kernel: bert_forward.1
$region0: #{bert_forward.1}
  #allocation0 [shape = 'u32[]', space=smem, size = 0x4, offset = 0x4, fixed_abs, tag = 'smem constant byte address 0x4 - core index']
  #allocation1 [shape = 'u32[144,128]{1,0:T(1,128)}', space=vmem, size = 0x12000, scoped, tag = 'internal scratch']
  %s0 = inlined_call_operand.vmem [shape: f32[16,32], index: 0, kind: input, shape index: {}]
  %s1 = inlined_call_operand.vmem [shape: f32[2,8,8], index: 1, kind: input, shape index: {}]
  %s2 = inlined_call_operand.vmem [shape: f32[1,32], index: 2, kind: input, shape index: {}]
  %s3 = inlined_call_operand.vmem [shape: f32[1,32], index: 3, kind: input, shape index: {}]
  %s4 = inlined_call_operand.vmem [shape: bf16[2,32,1536], index: 4, kind: input, shape index: {}]
  %s5 = inlined_call_operand.vmem [shape: f32[2,1,1536], index: 5, kind: input, shape index: {}]
  %s6 = inlined_call_operand.vmem [shape: bf16[2,512,32], index: 6, kind: input, shape index: {}]
  %s7 = inlined_call_operand.vmem [shape: f32[2,1,32], index: 7, kind: input, shape index: {}]
  %s8 = inlined_call_operand.vmem [shape: f32[2,1,32], index: 8, kind: input, shape index: {}]
  %s9 = inlined_call_operand.vmem [shape: f32[2,1,32], index: 9, kind: input, shape index: {}]
  %s10 = inlined_call_operand.vmem [shape: bf16[2,32,128], index: 10, kind: input, shape index: {}]
  %s11 = inlined_call_operand.vmem [shape: f32[2,1,128], index: 11, kind: input, shape index: {}]
  %s12 = inlined_call_operand.vmem [shape: bf16[2,128,32], index: 12, kind: input, shape index: {}]
  %s13 = inlined_call_operand.vmem [shape: f32[2,1,32], index: 13, kind: input, shape index: {}]
  %s14 = inlined_call_operand.vmem [shape: f32[2,1,32], index: 14, kind: input, shape index: {}]
  %s15 = inlined_call_operand.vmem [shape: f32[2,1,32], index: 15, kind: input, shape index: {}]
  %s16 = inlined_call_operand.vmem [shape: bf16[32,32], index: 16, kind: input, shape index: {}]
  %s17 = inlined_call_operand.vmem [shape: f32[1,32], index: 17, kind: input, shape index: {}]
  %s18 = inlined_call_operand.vmem [shape: bf16[32,128], index: 18, kind: input, shape index: {}]
  %s19 = inlined_call_operand.vmem [shape: f32[1,128], index: 19, kind: input, shape index: {}]
  %s20 = inlined_call_operand.vmem [shape: f32[16,128], index: 20, kind: output, shape index: {}]
  %s21 = sld [smem:[#allocation0]]
  $region113: #{bert_forward.1} parent=0
    _
  %s23 = ssub.s32 1, %s21
  %s24 = scalar_select 0, %s23, %s21
  loop: start=0, step=1, limit=4
  $region2: #{bert_forward.1} parent=0 // loop_pre_header
    _
  $region3: #{bert_forward.1} parent=0 // loop_header
    %s26 = sphi 0, %s30
    %p27 = scmp.ge.s32.totalorder %s26, 4
    %s36 = sphi 0, %s38
    %s39 = sphi 0, %s36
    %s40 = sphi 0, %s39
    %s56 = sphi 0, %s40
    %s62 = sphi 0, %s64
    %s65 = sphi 0, %s62
    %s66 = sphi 0, %s65
    %s82 = sphi 0, %s66
    %s86 = sphi 0, %s86
    %s88 = sphi 0, %s86
    %s89 = sphi 0, %s88
    %s103 = sphi 0, %s89
    %s107 = sphi 0, %s107
    %s109 = sphi 0, %s107
    %s110 = sphi 0, %s109
    %s124 = sphi 0, %s110
    %s128 = sphi 0, %s128
    %s130 = sphi 0, %s128
    %s131 = sphi 0, %s130
    %s145 = sphi 0, %s131
    %s149 = sphi 0, %s149
    %s151 = sphi 0, %s149
    %s152 = sphi 0, %s151
    %s166 = sphi 0, %s152
    %s170 = sphi 0, %s170
    %s172 = sphi 0, %s170
    %s173 = sphi 0, %s172
    %s187 = sphi 0, %s173
    %s191 = sphi 0, %s191
    %s193 = sphi 0, %s191
    %s194 = sphi 0, %s193
    %s208 = sphi 0, %s194
    %s212 = sphi 0, %s212
    %s214 = sphi 0, %s212
    %s215 = sphi 0, %s214
    %s229 = sphi 0, %s215
    %s233 = sphi 0, %s233
    %s235 = sphi 0, %s233
    %s236 = sphi 0, %s235
    %s250 = sphi 0, %s236
    %s254 = sphi 0, %s254
    %s256 = sphi 0, %s254
    %s257 = sphi 0, %s256
    %s271 = sphi 0, %s257
    %s275 = sphi 0, %s275
    %s277 = sphi 0, %s275
    %s278 = sphi 0, %s277
    %s292 = sphi 0, %s278
    %s296 = sphi 0, %s296
    %s298 = sphi 0, %s296
    %s299 = sphi 0, %s298
    %s313 = sphi 0, %s299
    %s317 = sphi 0, %s317
    %s319 = sphi 0, %s317
    %s320 = sphi 0, %s319
    %s334 = sphi 0, %s320
    %s338 = sphi 0, %s338
    %s340 = sphi 0, %s338
    %s341 = sphi 0, %s340
    %s355 = sphi 0, %s341
    %s359 = sphi 0, %s359
    %s361 = sphi 0, %s359
    %s362 = sphi 0, %s361
    %s376 = sphi 0, %s362
    %s380 = sphi 0, %s380
    %s382 = sphi 0, %s380
    %s383 = sphi 0, %s382
    %s397 = sphi 0, %s383
    %s401 = sphi 0, %s401
    %s403 = sphi 0, %s401
    %s404 = sphi 0, %s403
    %s418 = sphi 0, %s404
    %s422 = sphi 0, %s422
    %s424 = sphi 0, %s422
    %s425 = sphi 0, %s424
    %s439 = sphi 0, %s425
    %s443 = sphi 0, %s443
    %s445 = sphi 0, %s443
    %s446 = sphi 0, %s445
    %s460 = sphi 0, %s446
    %s466 = sphi 0, %s468
    %s469 = sphi 0, %s466
    %s470 = sphi 0, %s469
    %s486 = sphi 0, %s470
  $region4: #{bert_forward.1} parent=0 // loop_header_branch
    %29 = sbr.rel (%p27) target = $region8
  $region5: #{bert_forward.1} parent=0 // loop_body
    %s31 = ssub.s32 %s26, 1
    %s32 = ssub.s32 %s26, 2
    %s33 = sadd.s32 %s26, 1
    %s34 = ssub.s32 %s26, %s33
    %p35 = scmp.eq.s32.totalorder %s34, 0
    %s37 = sadd.s32 %s36, 1
    %s38 = scalar_select %p35, %s36, %s37
    %p41 = pneg %p35
    %p42 = scmp.eq.s32.totalorder %s26, 1
    %p43 = por %p41, %p42
    %p44 = scmp.ne.s32.totalorder %s36, %s39
    %p45 = scmp.eq.s32.totalorder %s26, 0
    %p46 = por %p44, %p45
    %p47 = scmp.ne.s32.totalorder %s36, %s39
    %p48 = scmp.eq.s32.totalorder %s31, 1
    %p49 = por %p47, %p48
    %p50 = scmp.ne.s32.totalorder %s39, %s40
    %p51 = scmp.eq.s32.totalorder %s31, 0
    %p52 = por %p50, %p51
    %p53 = scmp.ne.s32.totalorder %s39, %s40
    %p54 = scmp.eq.s32.totalorder %s32, 1
    %p55 = por %p53, %p54
    %p57 = scmp.ne.s32.totalorder %s40, %s56
    %p58 = scmp.eq.s32.totalorder %s32, 0
    %p59 = por %p57, %p58
    %s60 = ssub.s32 %s26, %s33
    %p61 = scmp.eq.s32.totalorder %s60, 0
    %s63 = sadd.s32 %s62, 1
    %s64 = scalar_select %p61, %s62, %s63
    %p67 = pneg %p61
    %p68 = scmp.eq.s32.totalorder %s26, 1
    %p69 = por %p67, %p68
    %p70 = scmp.ne.s32.totalorder %s62, %s65
    %p71 = scmp.eq.s32.totalorder %s26, 0
    %p72 = por %p70, %p71
    %p73 = scmp.ne.s32.totalorder %s62, %s65
    %p74 = scmp.eq.s32.totalorder %s31, 1
    %p75 = por %p73, %p74
    %p76 = scmp.ne.s32.totalorder %s65, %s66
    %p77 = scmp.eq.s32.totalorder %s31, 0
    %p78 = por %p76, %p77
    %p79 = scmp.ne.s32.totalorder %s65, %s66
    %p80 = scmp.eq.s32.totalorder %s32, 1
    %p81 = por %p79, %p80
    %p83 = scmp.ne.s32.totalorder %s66, %s82
    %p84 = scmp.eq.s32.totalorder %s32, 0
    %p85 = por %p83, %p84
    %s87 = sadd.s32 %s86, 1
    %p90 = scmp.eq.s32.totalorder %s26, 1
    %p91 = scmp.ne.s32.totalorder %s86, %s88
    %p92 = scmp.eq.s32.totalorder %s26, 0
    %p93 = por %p91, %p92
    %p94 = scmp.ne.s32.totalorder %s86, %s88
    %p95 = scmp.eq.s32.totalorder %s31, 1
    %p96 = por %p94, %p95
    %p97 = scmp.ne.s32.totalorder %s88, %s89
    %p98 = scmp.eq.s32.totalorder %s31, 0
    %p99 = por %p97, %p98
    %p100 = scmp.ne.s32.totalorder %s88, %s89
    %p101 = scmp.eq.s32.totalorder %s32, 1
    %p102 = por %p100, %p101
    %p104 = scmp.ne.s32.totalorder %s89, %s103
    %p105 = scmp.eq.s32.totalorder %s32, 0
    %p106 = por %p104, %p105
    %s108 = sadd.s32 %s107, 1
    %p111 = scmp.eq.s32.totalorder %s26, 1
    %p112 = scmp.ne.s32.totalorder %s107, %s109
    %p113 = scmp.eq.s32.totalorder %s26, 0
    %p114 = por %p112, %p113
    %p115 = scmp.ne.s32.totalorder %s107, %s109
    %p116 = scmp.eq.s32.totalorder %s31, 1
    %p117 = por %p115, %p116
    %p118 = scmp.ne.s32.totalorder %s109, %s110
    %p119 = scmp.eq.s32.totalorder %s31, 0
    %p120 = por %p118, %p119
    %p121 = scmp.ne.s32.totalorder %s109, %s110
    %p122 = scmp.eq.s32.totalorder %s32, 1
    %p123 = por %p121, %p122
    %p125 = scmp.ne.s32.totalorder %s110, %s124
    %p126 = scmp.eq.s32.totalorder %s32, 0
    %p127 = por %p125, %p126
    %s129 = sadd.s32 %s128, 1
    %p132 = scmp.eq.s32.totalorder %s26, 1
    %p133 = scmp.ne.s32.totalorder %s128, %s130
    %p134 = scmp.eq.s32.totalorder %s26, 0
    %p135 = por %p133, %p134
    %p136 = scmp.ne.s32.totalorder %s128, %s130
    %p137 = scmp.eq.s32.totalorder %s31, 1
    %p138 = por %p136, %p137
    %p139 = scmp.ne.s32.totalorder %s130, %s131
    %p140 = scmp.eq.s32.totalorder %s31, 0
    %p141 = por %p139, %p140
    %p142 = scmp.ne.s32.totalorder %s130, %s131
    %p143 = scmp.eq.s32.totalorder %s32, 1
    %p144 = por %p142, %p143
    %p146 = scmp.ne.s32.totalorder %s131, %s145
    %p147 = scmp.eq.s32.totalorder %s32, 0
    %p148 = por %p146, %p147
    %s150 = sadd.s32 %s149, 1
    %p153 = scmp.eq.s32.totalorder %s26, 1
    %p154 = scmp.ne.s32.totalorder %s149, %s151
    %p155 = scmp.eq.s32.totalorder %s26, 0
    %p156 = por %p154, %p155
    %p157 = scmp.ne.s32.totalorder %s149, %s151
    %p158 = scmp.eq.s32.totalorder %s31, 1
    %p159 = por %p157, %p158
    %p160 = scmp.ne.s32.totalorder %s151, %s152
    %p161 = scmp.eq.s32.totalorder %s31, 0
    %p162 = por %p160, %p161
    %p163 = scmp.ne.s32.totalorder %s151, %s152
    %p164 = scmp.eq.s32.totalorder %s32, 1
    %p165 = por %p163, %p164
    %p167 = scmp.ne.s32.totalorder %s152, %s166
    %p168 = scmp.eq.s32.totalorder %s32, 0
    %p169 = por %p167, %p168
    %s171 = sadd.s32 %s170, 1
    %p174 = scmp.eq.s32.totalorder %s26, 1
    %p175 = scmp.ne.s32.totalorder %s170, %s172
    %p176 = scmp.eq.s32.totalorder %s26, 0
    %p177 = por %p175, %p176
    %p178 = scmp.ne.s32.totalorder %s170, %s172
    %p179 = scmp.eq.s32.totalorder %s31, 1
    %p180 = por %p178, %p179
    %p181 = scmp.ne.s32.totalorder %s172, %s173
    %p182 = scmp.eq.s32.totalorder %s31, 0
    %p183 = por %p181, %p182
    %p184 = scmp.ne.s32.totalorder %s172, %s173
    %p185 = scmp.eq.s32.totalorder %s32, 1
    %p186 = por %p184, %p185
    %p188 = scmp.ne.s32.totalorder %s173, %s187
    %p189 = scmp.eq.s32.totalorder %s32, 0
    %p190 = por %p188, %p189
    %s192 = sadd.s32 %s191, 1
    %p195 = scmp.eq.s32.totalorder %s26, 1
    %p196 = scmp.ne.s32.totalorder %s191, %s193
    %p197 = scmp.eq.s32.totalorder %s26, 0
    %p198 = por %p196, %p197
    %p199 = scmp.ne.s32.totalorder %s191, %s193
    %p200 = scmp.eq.s32.totalorder %s31, 1
    %p201 = por %p199, %p200
    %p202 = scmp.ne.s32.totalorder %s193, %s194
    %p203 = scmp.eq.s32.totalorder %s31, 0
    %p204 = por %p202, %p203
    %p205 = scmp.ne.s32.totalorder %s193, %s194
    %p206 = scmp.eq.s32.totalorder %s32, 1
    %p207 = por %p205, %p206
    %p209 = scmp.ne.s32.totalorder %s194, %s208
    %p210 = scmp.eq.s32.totalorder %s32, 0
    %p211 = por %p209, %p210
    %s213 = sadd.s32 %s212, 1
    %p216 = scmp.eq.s32.totalorder %s26, 1
    %p217 = scmp.ne.s32.totalorder %s212, %s214
    %p218 = scmp.eq.s32.totalorder %s26, 0
    %p219 = por %p217, %p218
    %p220 = scmp.ne.s32.totalorder %s212, %s214
    %p221 = scmp.eq.s32.totalorder %s31, 1
    %p222 = por %p220, %p221
    %p223 = scmp.ne.s32.totalorder %s214, %s215
    %p224 = scmp.eq.s32.totalorder %s31, 0
    %p225 = por %p223, %p224
    %p226 = scmp.ne.s32.totalorder %s214, %s215
    %p227 = scmp.eq.s32.totalorder %s32, 1
    %p228 = por %p226, %p227
    %p230 = scmp.ne.s32.totalorder %s215, %s229
    %p231 = scmp.eq.s32.totalorder %s32, 0
    %p232 = por %p230, %p231
    %s234 = sadd.s32 %s233, 1
    %p237 = scmp.eq.s32.totalorder %s26, 1
    %p238 = scmp.ne.s32.totalorder %s233, %s235
    %p239 = scmp.eq.s32.totalorder %s26, 0
    %p240 = por %p238, %p239
    %p241 = scmp.ne.s32.totalorder %s233, %s235
    %p242 = scmp.eq.s32.totalorder %s31, 1
    %p243 = por %p241, %p242
    %p244 = scmp.ne.s32.totalorder %s235, %s236
    %p245 = scmp.eq.s32.totalorder %s31, 0
    %p246 = por %p244, %p245
    %p247 = scmp.ne.s32.totalorder %s235, %s236
    %p248 = scmp.eq.s32.totalorder %s32, 1
    %p249 = por %p247, %p248
    %p251 = scmp.ne.s32.totalorder %s236, %s250
    %p252 = scmp.eq.s32.totalorder %s32, 0
    %p253 = por %p251, %p252
    %s255 = sadd.s32 %s254, 1
    %p258 = scmp.eq.s32.totalorder %s26, 1
    %p259 = scmp.ne.s32.totalorder %s254, %s256
    %p260 = scmp.eq.s32.totalorder %s26, 0
    %p261 = por %p259, %p260
    %p262 = scmp.ne.s32.totalorder %s254, %s256
    %p263 = scmp.eq.s32.totalorder %s31, 1
    %p264 = por %p262, %p263
    %p265 = scmp.ne.s32.totalorder %s256, %s257
    %p266 = scmp.eq.s32.totalorder %s31, 0
    %p267 = por %p265, %p266
    %p268 = scmp.ne.s32.totalorder %s256, %s257
    %p269 = scmp.eq.s32.totalorder %s32, 1
    %p270 = por %p268, %p269
    %p272 = scmp.ne.s32.totalorder %s257, %s271
    %p273 = scmp.eq.s32.totalorder %s32, 0
    %p274 = por %p272, %p273
    %s276 = sadd.s32 %s275, 1
    %p279 = scmp.eq.s32.totalorder %s26, 1
    %p280 = scmp.ne.s32.totalorder %s275, %s277
    %p281 = scmp.eq.s32.totalorder %s26, 0
    %p282 = por %p280, %p281
    %p283 = scmp.ne.s32.totalorder %s275, %s277
    %p284 = scmp.eq.s32.totalorder %s31, 1
    %p285 = por %p283, %p284
    %p286 = scmp.ne.s32.totalorder %s277, %s278
    %p287 = scmp.eq.s32.totalorder %s31, 0
    %p288 = por %p286, %p287
    %p289 = scmp.ne.s32.totalorder %s277, %s278
    %p290 = scmp.eq.s32.totalorder %s32, 1
    %p291 = por %p289, %p290
    %p293 = scmp.ne.s32.totalorder %s278, %s292
    %p294 = scmp.eq.s32.totalorder %s32, 0
    %p295 = por %p293, %p294
    %s297 = sadd.s32 %s296, 1
    %p300 = scmp.eq.s32.totalorder %s26, 1
    %p301 = scmp.ne.s32.totalorder %s296, %s298
    %p302 = scmp.eq.s32.totalorder %s26, 0
    %p303 = por %p301, %p302
    %p304 = scmp.ne.s32.totalorder %s296, %s298
    %p305 = scmp.eq.s32.totalorder %s31, 1
    %p306 = por %p304, %p305
    %p307 = scmp.ne.s32.totalorder %s298, %s299
    %p308 = scmp.eq.s32.totalorder %s31, 0
    %p309 = por %p307, %p308
    %p310 = scmp.ne.s32.totalorder %s298, %s299
    %p311 = scmp.eq.s32.totalorder %s32, 1
    %p312 = por %p310, %p311
    %p314 = scmp.ne.s32.totalorder %s299, %s313
    %p315 = scmp.eq.s32.totalorder %s32, 0
    %p316 = por %p314, %p315
    %s318 = sadd.s32 %s317, 1
    %p321 = scmp.eq.s32.totalorder %s26, 1
    %p322 = scmp.ne.s32.totalorder %s317, %s319
    %p323 = scmp.eq.s32.totalorder %s26, 0
    %p324 = por %p322, %p323
    %p325 = scmp.ne.s32.totalorder %s317, %s319
    %p326 = scmp.eq.s32.totalorder %s31, 1
    %p327 = por %p325, %p326
    %p328 = scmp.ne.s32.totalorder %s319, %s320
    %p329 = scmp.eq.s32.totalorder %s31, 0
    %p330 = por %p328, %p329
    %p331 = scmp.ne.s32.totalorder %s319, %s320
    %p332 = scmp.eq.s32.totalorder %s32, 1
    %p333 = por %p331, %p332
    %p335 = scmp.ne.s32.totalorder %s320, %s334
    %p336 = scmp.eq.s32.totalorder %s32, 0
    %p337 = por %p335, %p336
    %s339 = sadd.s32 %s338, 1
    %p342 = scmp.eq.s32.totalorder %s26, 1
    %p343 = scmp.ne.s32.totalorder %s338, %s340
    %p344 = scmp.eq.s32.totalorder %s26, 0
    %p345 = por %p343, %p344
    %p346 = scmp.ne.s32.totalorder %s338, %s340
    %p347 = scmp.eq.s32.totalorder %s31, 1
    %p348 = por %p346, %p347
    %p349 = scmp.ne.s32.totalorder %s340, %s341
    %p350 = scmp.eq.s32.totalorder %s31, 0
    %p351 = por %p349, %p350
    %p352 = scmp.ne.s32.totalorder %s340, %s341
    %p353 = scmp.eq.s32.totalorder %s32, 1
    %p354 = por %p352, %p353
    %p356 = scmp.ne.s32.totalorder %s341, %s355
    %p357 = scmp.eq.s32.totalorder %s32, 0
    %p358 = por %p356, %p357
    %s360 = sadd.s32 %s359, 1
    %p363 = scmp.eq.s32.totalorder %s26, 1
    %p364 = scmp.ne.s32.totalorder %s359, %s361
    %p365 = scmp.eq.s32.totalorder %s26, 0
    %p366 = por %p364, %p365
    %p367 = scmp.ne.s32.totalorder %s359, %s361
    %p368 = scmp.eq.s32.totalorder %s31, 1
    %p369 = por %p367, %p368
    %p370 = scmp.ne.s32.totalorder %s361, %s362
    %p371 = scmp.eq.s32.totalorder %s31, 0
    %p372 = por %p370, %p371
    %p373 = scmp.ne.s32.totalorder %s361, %s362
    %p374 = scmp.eq.s32.totalorder %s32, 1
    %p375 = por %p373, %p374
    %p377 = scmp.ne.s32.totalorder %s362, %s376
    %p378 = scmp.eq.s32.totalorder %s32, 0
    %p379 = por %p377, %p378
    %s381 = sadd.s32 %s380, 1
    %p384 = scmp.eq.s32.totalorder %s26, 1
    %p385 = scmp.ne.s32.totalorder %s380, %s382
    %p386 = scmp.eq.s32.totalorder %s26, 0
    %p387 = por %p385, %p386
    %p388 = scmp.ne.s32.totalorder %s380, %s382
    %p389 = scmp.eq.s32.totalorder %s31, 1
    %p390 = por %p388, %p389
    %p391 = scmp.ne.s32.totalorder %s382, %s383
    %p392 = scmp.eq.s32.totalorder %s31, 0
    %p393 = por %p391, %p392
    %p394 = scmp.ne.s32.totalorder %s382, %s383
    %p395 = scmp.eq.s32.totalorder %s32, 1
    %p396 = por %p394, %p395
    %p398 = scmp.ne.s32.totalorder %s383, %s397
    %p399 = scmp.eq.s32.totalorder %s32, 0
    %p400 = por %p398, %p399
    %s402 = sadd.s32 %s401, 1
    %p405 = scmp.eq.s32.totalorder %s26, 1
    %p406 = scmp.ne.s32.totalorder %s401, %s403
    %p407 = scmp.eq.s32.totalorder %s26, 0
    %p408 = por %p406, %p407
    %p409 = scmp.ne.s32.totalorder %s401, %s403
    %p410 = scmp.eq.s32.totalorder %s31, 1
    %p411 = por %p409, %p410
    %p412 = scmp.ne.s32.totalorder %s403, %s404
    %p413 = scmp.eq.s32.totalorder %s31, 0
    %p414 = por %p412, %p413
    %p415 = scmp.ne.s32.totalorder %s403, %s404
    %p416 = scmp.eq.s32.totalorder %s32, 1
    %p417 = por %p415, %p416
    %p419 = scmp.ne.s32.totalorder %s404, %s418
    %p420 = scmp.eq.s32.totalorder %s32, 0
    %p421 = por %p419, %p420
    %s423 = sadd.s32 %s422, 1
    %p426 = scmp.eq.s32.totalorder %s26, 1
    %p427 = scmp.ne.s32.totalorder %s422, %s424
    %p428 = scmp.eq.s32.totalorder %s26, 0
    %p429 = por %p427, %p428
    %p430 = scmp.ne.s32.totalorder %s422, %s424
    %p431 = scmp.eq.s32.totalorder %s31, 1
    %p432 = por %p430, %p431
    %p433 = scmp.ne.s32.totalorder %s424, %s425
    %p434 = scmp.eq.s32.totalorder %s31, 0
    %p435 = por %p433, %p434
    %p436 = scmp.ne.s32.totalorder %s424, %s425
    %p437 = scmp.eq.s32.totalorder %s32, 1
    %p438 = por %p436, %p437
    %p440 = scmp.ne.s32.totalorder %s425, %s439
    %p441 = scmp.eq.s32.totalorder %s32, 0
    %p442 = por %p440, %p441
    %s444 = sadd.s32 %s443, 1
    %p447 = scmp.eq.s32.totalorder %s26, 1
    %p448 = scmp.ne.s32.totalorder %s443, %s445
    %p449 = scmp.eq.s32.totalorder %s26, 0
    %p450 = por %p448, %p449
    %p451 = scmp.ne.s32.totalorder %s443, %s445
    %p452 = scmp.eq.s32.totalorder %s31, 1
    %p453 = por %p451, %p452
    %p454 = scmp.ne.s32.totalorder %s445, %s446
    %p455 = scmp.eq.s32.totalorder %s31, 0
    %p456 = por %p454, %p455
    %p457 = scmp.ne.s32.totalorder %s445, %s446
    %p458 = scmp.eq.s32.totalorder %s32, 1
    %p459 = por %p457, %p458
    %p461 = scmp.ne.s32.totalorder %s446, %s460
    %p462 = scmp.eq.s32.totalorder %s32, 0
    %p463 = por %p461, %p462
    %s464 = ssub.s32 %s26, %s33
    %p465 = scmp.eq.s32.totalorder %s464, 0
    %s467 = sadd.s32 %s466, 1
    %s468 = scalar_select %p465, %s466, %s467
    %p471 = pneg %p465
    %p472 = scmp.eq.s32.totalorder %s26, 1
    %p473 = por %p471, %p472
    %p474 = scmp.ne.s32.totalorder %s466, %s469
    %p475 = scmp.eq.s32.totalorder %s26, 0
    %p476 = por %p474, %p475
    %p477 = scmp.ne.s32.totalorder %s466, %s469
    %p478 = scmp.eq.s32.totalorder %s31, 1
    %p479 = por %p477, %p478
    %p480 = scmp.ne.s32.totalorder %s469, %s470
    %p481 = scmp.eq.s32.totalorder %s31, 0
    %p482 = por %p480, %p481
    %p483 = scmp.ne.s32.totalorder %s469, %s470
    %p484 = scmp.eq.s32.totalorder %s32, 1
    %p485 = por %p483, %p484
    %p487 = scmp.ne.s32.totalorder %s470, %s486
    %p488 = scmp.eq.s32.totalorder %s32, 0
    %p489 = por %p487, %p488
    %p490 = scmp.le.s32.totalorder 1, %s26
    %p491 = scmp.lt.s32.totalorder %s26, 3
    %p492 = pnand %p490, %p491
    %p493 = pneg %p492
    // Predicated region
    $region9: #{bert_forward.1} parent=5 // pred_check
      _
    $region10: #{bert_forward.1} parent=5 // pred_check_branch
      %495 = sbr.rel (%p492) target = $region12
    $region11: #{bert_forward.1} parent=5 // pred_region
      %s496 = ssub.s32 %s26, 1
      // Predicated region
      $region13: #{bert_forward.1} parent=11 // pred_check
        %p497 = pneg %p99
      $region14: #{bert_forward.1} parent=11 // pred_check_branch
        %499 = sbr.rel (%p497) target = $region16
      $region15: #{bert_forward.1} parent=11 // pred_region
        _
      $region16: #{bert_forward.1} parent=11 // pred_fallthru
        _
      // Predicated region
      $region17: #{bert_forward.1} parent=11 // pred_check
        %p500 = pneg %p120
      $region18: #{bert_forward.1} parent=11 // pred_check_branch
        %502 = sbr.rel (%p500) target = $region20
      $region19: #{bert_forward.1} parent=11 // pred_region
        _
      $region20: #{bert_forward.1} parent=11 // pred_fallthru
        _
      // Predicated region
      $region21: #{bert_forward.1} parent=11 // pred_check
        %p503 = pneg %p141
      $region22: #{bert_forward.1} parent=11 // pred_check_branch
        %505 = sbr.rel (%p503) target = $region24
      $region23: #{bert_forward.1} parent=11 // pred_region
        _
      $region24: #{bert_forward.1} parent=11 // pred_fallthru
        _
      // Predicated region
      $region25: #{bert_forward.1} parent=11 // pred_check
        %p506 = pneg %p162
      $region26: #{bert_forward.1} parent=11 // pred_check_branch
        %508 = sbr.rel (%p506) target = $region28
      $region27: #{bert_forward.1} parent=11 // pred_region
        _
      $region28: #{bert_forward.1} parent=11 // pred_fallthru
        _
      // Predicated region
      $region29: #{bert_forward.1} parent=11 // pred_check
        %p509 = pneg %p183
      $region30: #{bert_forward.1} parent=11 // pred_check_branch
        %511 = sbr.rel (%p509) target = $region32
      $region31: #{bert_forward.1} parent=11 // pred_region
        _
      $region32: #{bert_forward.1} parent=11 // pred_fallthru
        _
      // Predicated region
      $region33: #{bert_forward.1} parent=11 // pred_check
        %p512 = pneg %p204
      $region34: #{bert_forward.1} parent=11 // pred_check_branch
        %514 = sbr.rel (%p512) target = $region36
      $region35: #{bert_forward.1} parent=11 // pred_region
        _
      $region36: #{bert_forward.1} parent=11 // pred_fallthru
        _
      // Predicated region
      $region37: #{bert_forward.1} parent=11 // pred_check
        %p515 = pneg %p225
      $region38: #{bert_forward.1} parent=11 // pred_check_branch
        %517 = sbr.rel (%p515) target = $region40
      $region39: #{bert_forward.1} parent=11 // pred_region
        _
      $region40: #{bert_forward.1} parent=11 // pred_fallthru
        _
      // Predicated region
      $region41: #{bert_forward.1} parent=11 // pred_check
        %p518 = pneg %p246
      $region42: #{bert_forward.1} parent=11 // pred_check_branch
        %520 = sbr.rel (%p518) target = $region44
      $region43: #{bert_forward.1} parent=11 // pred_region
        _
      $region44: #{bert_forward.1} parent=11 // pred_fallthru
        _
      // Predicated region
      $region45: #{bert_forward.1} parent=11 // pred_check
        %p521 = pneg %p267
      $region46: #{bert_forward.1} parent=11 // pred_check_branch
        %523 = sbr.rel (%p521) target = $region48
      $region47: #{bert_forward.1} parent=11 // pred_region
        _
      $region48: #{bert_forward.1} parent=11 // pred_fallthru
        _
      // Predicated region
      $region49: #{bert_forward.1} parent=11 // pred_check
        %p524 = pneg %p288
      $region50: #{bert_forward.1} parent=11 // pred_check_branch
        %526 = sbr.rel (%p524) target = $region52
      $region51: #{bert_forward.1} parent=11 // pred_region
        _
      $region52: #{bert_forward.1} parent=11 // pred_fallthru
        _
      // Predicated region
      $region53: #{bert_forward.1} parent=11 // pred_check
        %p527 = pneg %p309
      $region54: #{bert_forward.1} parent=11 // pred_check_branch
        %529 = sbr.rel (%p527) target = $region56
      $region55: #{bert_forward.1} parent=11 // pred_region
        _
      $region56: #{bert_forward.1} parent=11 // pred_fallthru
        _
      // Predicated region
      $region57: #{bert_forward.1} parent=11 // pred_check
        %p530 = pneg %p330
      $region58: #{bert_forward.1} parent=11 // pred_check_branch
        %532 = sbr.rel (%p530) target = $region60
      $region59: #{bert_forward.1} parent=11 // pred_region
        _
      $region60: #{bert_forward.1} parent=11 // pred_fallthru
        _
      // Predicated region
      $region61: #{bert_forward.1} parent=11 // pred_check
        %p533 = pneg %p351
      $region62: #{bert_forward.1} parent=11 // pred_check_branch
        %535 = sbr.rel (%p533) target = $region64
      $region63: #{bert_forward.1} parent=11 // pred_region
        _
      $region64: #{bert_forward.1} parent=11 // pred_fallthru
        _
      // Predicated region
      $region65: #{bert_forward.1} parent=11 // pred_check
        %p536 = pneg %p372
      $region66: #{bert_forward.1} parent=11 // pred_check_branch
        %538 = sbr.rel (%p536) target = $region68
      $region67: #{bert_forward.1} parent=11 // pred_region
        _
      $region68: #{bert_forward.1} parent=11 // pred_fallthru
        _
      // Predicated region
      $region69: #{bert_forward.1} parent=11 // pred_check
        %p539 = pneg %p393
      $region70: #{bert_forward.1} parent=11 // pred_check_branch
        %541 = sbr.rel (%p539) target = $region72
      $region71: #{bert_forward.1} parent=11 // pred_region
        _
      $region72: #{bert_forward.1} parent=11 // pred_fallthru
        _
      // Predicated region
      $region73: #{bert_forward.1} parent=11 // pred_check
        %p542 = pneg %p414
      $region74: #{bert_forward.1} parent=11 // pred_check_branch
        %544 = sbr.rel (%p542) target = $region76
      $region75: #{bert_forward.1} parent=11 // pred_region
        _
      $region76: #{bert_forward.1} parent=11 // pred_fallthru
        _
      // Predicated region
      $region77: #{bert_forward.1} parent=11 // pred_check
        %p545 = pneg %p435
      $region78: #{bert_forward.1} parent=11 // pred_check_branch
        %547 = sbr.rel (%p545) target = $region80
      $region79: #{bert_forward.1} parent=11 // pred_region
        _
      $region80: #{bert_forward.1} parent=11 // pred_fallthru
        _
      // Predicated region
      $region81: #{bert_forward.1} parent=11 // pred_check
        %p548 = pneg %p456
      $region82: #{bert_forward.1} parent=11 // pred_check_branch
        %550 = sbr.rel (%p548) target = $region84
      $region83: #{bert_forward.1} parent=11 // pred_region
        _
      $region84: #{bert_forward.1} parent=11 // pred_fallthru
        _
    $region12: #{bert_forward.1} parent=5 // pred_fallthru
      _
    %p551 = scmp.lt.s32.totalorder %s26, 2
    // Predicated region
    $region85: #{bert_forward.1} parent=5 // pred_check
      %p552 = pneg %p551
    $region86: #{bert_forward.1} parent=5 // pred_check_branch
      %554 = sbr.rel (%p552) target = $region88
    $region87: #{bert_forward.1} parent=5 // pred_region
      // Predicated region
      $region89: #{bert_forward.1} parent=87 // pred_check
        %p555 = pneg %p46
      $region90: #{bert_forward.1} parent=87 // pred_check_branch
        %557 = sbr.rel (%p555) target = $region92
      $region91: #{bert_forward.1} parent=87 // pred_region
        %p558 = scmp.lt.s32.totalorder %s26, 1
        %s559 = scalar_select %p558, %s26, 1
        %s560 = smul.addr %s559, 8
        %s561 = scalar_lea.vmem %s0, %s560
      $region92: #{bert_forward.1} parent=87 // pred_fallthru
        _
      // Predicated region
      $region93: #{bert_forward.1} parent=87 // pred_check
        %p562 = pneg %p72
      $region94: #{bert_forward.1} parent=87 // pred_check_branch
        %564 = sbr.rel (%p562) target = $region96
      $region95: #{bert_forward.1} parent=87 // pred_region
        %p565 = scmp.lt.s32.totalorder %s26, 1
        %s566 = scalar_select %p565, %s26, 1
        %s567 = smul.addr %s566, 8
        %s568 = scalar_lea.vmem %s1, %s567
      $region96: #{bert_forward.1} parent=87 // pred_fallthru
        _
    $region88: #{bert_forward.1} parent=5 // pred_fallthru
      _
    %p569 = scmp.le.s32.totalorder 1, %s26
    %p570 = scmp.lt.s32.totalorder %s26, 3
    %p571 = pnand %p569, %p570
    %p572 = pneg %p571
    // Predicated region
    $region97: #{bert_forward.1} parent=5 // pred_check
      _
    $region98: #{bert_forward.1} parent=5 // pred_check_branch
      %574 = sbr.rel (%p571) target = $region100
    $region99: #{bert_forward.1} parent=5 // pred_region
      %s575 = ssub.s32 %s26, 1
      %p576 = scmp.lt.s32.totalorder %s31, 1
      %s577 = scalar_select %p576, %s31, 1
      %s578 = smul.addr %s577, 8
      %s579 = scalar_lea.vmem %s0, %s578
      %p580 = pneg %p52
      %p581 = pneg %p49
      %p582 = scmp.lt.s32.totalorder %s31, 1
      %s583 = scalar_select %p582, %s31, 1
      %s584 = smul.addr %s583, 8
      %s585 = scalar_lea.vmem %s1, %s584
      %p586 = pneg %p78
      %p587 = pneg %p75
      %p588 = pneg %p99
      %p589 = pneg %p96
      %p590 = pneg %p120
      %p591 = pneg %p117
      %p592 = pneg %p141
      %p593 = pneg %p138
      %p594 = pneg %p162
      %p595 = pneg %p159
      %p596 = pneg %p183
      %p597 = pneg %p180
      %p598 = pneg %p204
      %p599 = pneg %p201
      %p600 = pneg %p225
      %p601 = pneg %p222
      %p602 = pneg %p246
      %p603 = pneg %p243
      %p604 = pneg %p267
      %p605 = pneg %p264
      %p606 = pneg %p288
      %p607 = pneg %p285
      %p608 = pneg %p309
      %p609 = pneg %p306
      %p610 = pneg %p330
      %p611 = pneg %p327
      %p612 = pneg %p351
      %p613 = pneg %p348
      %p614 = pneg %p372
      %p615 = pneg %p369
      %p616 = pneg %p393
      %p617 = pneg %p390
      %p618 = pneg %p414
      %p619 = pneg %p411
      %p620 = pneg %p435
      %p621 = pneg %p432
      %p622 = pneg %p456
      %p623 = pneg %p453
      %p624 = pneg %p482
      %p625 = pneg %p479
      %p626 = scmp.lt.s32.totalorder %s31, 1
      %s627 = scalar_select %p626, %s31, 1
      %s628 = smul.addr %s627, 8
      %s629 = scalar_lea.vmem %s20, %s628
      %p630 = scmp.lt.s32.totalorder %s31, 1
      %s631 = scalar_select %p630, %s31, 1
      %s632 = smul.addr %s631, 8
      %s633 = scalar_lea.vmem %s0, %s632
      %p634 = scmp.lt.s32.totalorder %s31, 1
      %s635 = scalar_select %p634, %s31, 1
      %s636 = smul.addr %s635, 8
      %s637 = scalar_lea.vmem %s1, %s636
      %p638 = scmp.lt.s32.totalorder %s31, 1
      %s639 = scalar_select %p638, %s31, 1
      %s640 = smul.addr %s639, 8
      %s641 = scalar_lea.vmem %s20, %s640
      %v643 = vld [vmem:[%s637] sm:$0xff]
      %v644 = vld [vmem:[%s633] sm:$0xff]
      %v645 = vld [vmem:[%s2] sm:$0x1]
      %v646 = vld [vmem:[%s3] sm:$0x1]
      %vm647 = vcmask 261120
      %v648 = vsel %vm647, %v644, 0.0
      %649 = vadd.xlane.f32.xlu0 %v648
      %v650 = vpop.xlane.xlu0 %649
      %v651 = vrcp.pop 32.0
      %v652 = vmul.f32 %v650, %v651
      %v653 = vsub.f32 %v644, %v652
      %v654 = vmul.f32 %v653, %v653
      %v655 = vsel %vm647, %v654, 0.0
      %656 = vadd.xlane.f32.xlu0 %v655
      %v657 = vpop.xlane.xlu0 %656
      %v658 = vmul.f32 %v657, %v651
      %v659 = vadd.f32 %v658, 1e-12
      %v660 = vrsqrt.pop %v659
      %v661 = vmul.f32 %v653, %v660
      %v663 = vlaneseq
      %v664 = vshrl.u32 %v663, 7
      %v665 = vsub.s32 0, %v664
      %v666 = vrot.slane %v645, %v665
      %v668 = vmul.f32 %v661, %v666
      %v670 = vlaneseq
      %v671 = vshrl.u32 %v670, 7
      %v672 = vsub.s32 0, %v671
      %v673 = vrot.slane %v646, %v672
      %v675 = vadd.f32 %v668, %v673
      %v676 = vpack.c.bf16 %v675, %v675
      %v677 = vld [vmem:[%s4] sm:$0xff]
      %v678 = vld [vmem:[%s4 + $0x8] sm:$0xff]
      %v679 = vld [vmem:[%s4 + $0x10] sm:$0xff]
      %v680 = vld [vmem:[%s4 + $0x18] sm:$0xff]
      %v681 = vld [vmem:[%s4 + $0x20] sm:$0xff]
      %v682 = vld [vmem:[%s4 + $0x28] sm:$0xff]
      %v683 = vld [vmem:[%s4 + $0x30] sm:$0xff]
      %v684 = vld [vmem:[%s4 + $0x38] sm:$0xff]
      %v685 = vld [vmem:[%s4 + $0x40] sm:$0xff]
      %v686 = vld [vmem:[%s4 + $0x48] sm:$0xff]
      %v687 = vld [vmem:[%s4 + $0x50] sm:$0xff]
      %v688 = vld [vmem:[%s4 + $0x58] sm:$0xff]
      %v689 = vld [vmem:[%s4 + $0x60] sm:$0xff]
      %v690 = vld [vmem:[%s4 + $0x68] sm:$0xff]
      %v691 = vld [vmem:[%s4 + $0x70] sm:$0xff]
      %v692 = vld [vmem:[%s4 + $0x78] sm:$0xff]
      %v693 = vld [vmem:[%s4 + $0x80] sm:$0xff]
      %v694 = vld [vmem:[%s4 + $0x88] sm:$0xff]
      %v695 = vld [vmem:[%s4 + $0x90] sm:$0xff]
      %v696 = vld [vmem:[%s4 + $0x98] sm:$0xff]
      %v697 = vld [vmem:[%s4 + $0xa0] sm:$0xff]
      %v698 = vld [vmem:[%s4 + $0xa8] sm:$0xff]
      %v699 = vld [vmem:[%s4 + $0xb0] sm:$0xff]
      %v700 = vld [vmem:[%s4 + $0xb8] sm:$0xff]
      %v701 = vld [vmem:[%s5] sm:$0xff]
      %v702 = vld [vmem:[%s5 + $0x8] sm:$0xf]
      %v705 = vlaneseq
      %v706 = vshrl.u32 %v705, 7
      %v707 = vsub.s32 0, %v706
      %v708 = vrot.slane %v701, %v707
      %v709 = vlaneseq
      %v710 = vshrl.u32 %v709, 7
      %v711 = vsub.s32 1, %v710
      %v712 = vrot.slane %v701, %v711
      %v713 = vlaneseq
      %v714 = vshrl.u32 %v713, 7
      %v715 = vsub.s32 2, %v714
      %v716 = vrot.slane %v701, %v715
      %v717 = vlaneseq
      %v718 = vshrl.u32 %v717, 7
      %v719 = vsub.s32 3, %v718
      %v720 = vrot.slane %v701, %v719
      %v721 = vlaneseq
      %v722 = vshrl.u32 %v721, 7
      %v723 = vsub.s32 4, %v722
      %v724 = vrot.slane %v701, %v723
      %v725 = vlaneseq
      %v726 = vshrl.u32 %v725, 7
      %v727 = vsub.s32 5, %v726
      %v728 = vrot.slane %v701, %v727
      %v729 = vlaneseq
      %v730 = vshrl.u32 %v729, 7
      %v731 = vsub.s32 6, %v730
      %v732 = vrot.slane %v701, %v731
      %v733 = vlaneseq
      %v734 = vshrl.u32 %v733, 7
      %v735 = vsub.s32 7, %v734
      %v736 = vrot.slane %v701, %v735
      %v737 = vlaneseq
      %v738 = vshrl.u32 %v737, 7
      %v739 = vsub.s32 0, %v738
      %v740 = vrot.slane %v702, %v739
      %v741 = vlaneseq
      %v742 = vshrl.u32 %v741, 7
      %v743 = vsub.s32 1, %v742
      %v744 = vrot.slane %v702, %v743
      %v745 = vlaneseq
      %v746 = vshrl.u32 %v745, 7
      %v747 = vsub.s32 2, %v746
      %v748 = vrot.slane %v702, %v747
      %v749 = vlaneseq
      %v750 = vshrl.u32 %v749, 7
      %v751 = vsub.s32 3, %v750
      %v752 = vrot.slane %v702, %v751
      %v789 = vunpack.c.l.b16 %v677
      %v790 = vunpack.c.h.b16 %v677
      %v791 = vunpack.c.l.b16 %v678
      %v792 = vunpack.c.h.b16 %v678
      %v793 = vunpack.c.l.b16 %v679
      %v794 = vunpack.c.h.b16 %v679
      %v795 = vunpack.c.l.b16 %v680
      %v796 = vunpack.c.h.b16 %v680
      %v797 = vunpack.c.l.b16 %v681
      %v798 = vunpack.c.h.b16 %v681
      %v799 = vunpack.c.l.b16 %v682
      %v800 = vunpack.c.h.b16 %v682
      %v801 = vunpack.c.l.b16 %v683
      %v802 = vunpack.c.h.b16 %v683
      %v803 = vunpack.c.l.b16 %v684
      %v804 = vunpack.c.h.b16 %v684
      %v805 = vunpack.c.l.b16 %v685
      %v806 = vunpack.c.h.b16 %v685
      %v807 = vunpack.c.l.b16 %v686
      %v808 = vunpack.c.h.b16 %v686
      %v809 = vunpack.c.l.b16 %v687
      %v810 = vunpack.c.h.b16 %v687
      %v811 = vunpack.c.l.b16 %v688
      %v812 = vunpack.c.h.b16 %v688
      %v813 = vunpack.c.l.b16 %v689
      %v814 = vunpack.c.h.b16 %v689
      %v815 = vunpack.c.l.b16 %v690
      %v816 = vunpack.c.h.b16 %v690
      %v817 = vunpack.c.l.b16 %v691
      %v818 = vunpack.c.h.b16 %v691
      %v819 = vunpack.c.l.b16 %v692
      %v820 = vunpack.c.h.b16 %v692
      %v821 = vunpack.c.l.b16 %v693
      %v822 = vunpack.c.h.b16 %v693
      %v823 = vunpack.c.l.b16 %v694
      %v824 = vunpack.c.h.b16 %v694
      %v825 = vunpack.c.l.b16 %v695
      %v826 = vunpack.c.h.b16 %v695
      %v827 = vunpack.c.l.b16 %v696
      %v828 = vunpack.c.h.b16 %v696
      %v829 = vunpack.c.l.b16 %v697
      %v830 = vunpack.c.h.b16 %v697
      %v831 = vunpack.c.l.b16 %v698
      %v832 = vunpack.c.h.b16 %v698
      %v833 = vunpack.c.l.b16 %v699
      %v834 = vunpack.c.h.b16 %v699
      %v835 = vunpack.c.l.b16 %v700
      %v836 = vunpack.c.h.b16 %v700
      %v837 = vpack.c.b16 %v801, %v789
      %v838 = vpack.c.b16 %v802, %v790
      %v839 = vpack.c.b16 %v803, %v791
      %v840 = vpack.c.b16 %v804, %v792
      %v841 = vpack.c.b16 %v805, %v793
      %v842 = vpack.c.b16 %v806, %v794
      %v843 = vpack.c.b16 %v807, %v795
      %v844 = vpack.c.b16 %v808, %v796
      %v845 = vpack.c.b16 %v809, %v797
      %v846 = vpack.c.b16 %v810, %v798
      %v847 = vpack.c.b16 %v811, %v799
      %v848 = vpack.c.b16 %v812, %v800
      %v849 = vpack.c.b16 %v825, %v813
      %v850 = vpack.c.b16 %v826, %v814
      %v851 = vpack.c.b16 %v827, %v815
      %v852 = vpack.c.b16 %v828, %v816
      %v853 = vpack.c.b16 %v829, %v817
      %v854 = vpack.c.b16 %v830, %v818
      %v855 = vpack.c.b16 %v831, %v819
      %v856 = vpack.c.b16 %v832, %v820
      %v857 = vpack.c.b16 %v833, %v821
      %v858 = vpack.c.b16 %v834, %v822
      %v859 = vpack.c.b16 %v835, %v823
      %v860 = vpack.c.b16 %v836, %v824
      %v886 = vsel %vm647, %v676, 0
      %888 = vmatprep.subr.bf16.mxu0 %v838
      %889 = vmatpush1.bf16.msra.mxu0 %v837
      %890 = vmatprep.subr.bf16.mxu0 %v850
      %891 = vmatpush1.bf16.msra.mxu0 %v849
      %892 = vmatprep.subr.bf16.mxu0 0
      %893 = vmatpush1.bf16.msra.mxu0 0
      %894 = vmatprep.subr.bf16.mxu0 0
      %895 = vmatpush1.bf16.msra.mxu0 0
      %896 = vmatprep.subr.bf16.mxu0 0
      %897 = vmatpush1.bf16.msra.mxu0 0
      %898 = vmatprep.subr.bf16.mxu0 0
      %899 = vmatpush1.bf16.msra.mxu0 0
      %900 = vmatprep.subr.bf16.mxu0 0
      %901 = vmatpush1.bf16.msra.mxu0 0
      %902 = vmatprep.subr.bf16.mxu0 0
      %903 = vmatpush1.bf16.msra.mxu0 0
      %904 = vmatprep.subr.bf16.mxu0 0
      %905 = vmatpush1.bf16.msra.mxu0 0
      %906 = vmatprep.subr.bf16.mxu0 0
      %907 = vmatpush1.bf16.msra.mxu0 0
      %908 = vmatprep.subr.bf16.mxu0 0
      %909 = vmatpush1.bf16.msra.mxu0 0
      %910 = vmatprep.subr.bf16.mxu0 0
      %911 = vmatpush1.bf16.msra.mxu0 0
      %912 = vmatprep.subr.bf16.mxu0 0
      %913 = vmatpush1.bf16.msra.mxu0 0
      %914 = vmatprep.subr.bf16.mxu0 0
      %915 = vmatpush1.bf16.msra.mxu0 0
      %916 = vmatprep.subr.bf16.mxu0 0
      %917 = vmatpush1.bf16.msra.mxu0 0
      %918 = vmatprep.subr.bf16.mxu0 0
      %919 = vmatpush1.bf16.msra.mxu0 0
      %920 = vmatprep.mubr.bf16.mxu0 0
      %921 = vmatmul.mubr.bf16.gmra.mrb[0].mxu0 %v886
      %v922 = vpop.f32.mrb[0].mxu0
      %v923 = vadd.f32 %v708, %v922
      %v924 = vpop.f32.mrb[0].mxu0
      %v925 = vadd.f32 %v712, %v924
      %v926 = vpop.f32.mrb[0].mxu0
      %v927 = vpop.f32.mrb[0].mxu0
      %928 = vdwg.mxu0
      %929 = vmatprep.subr.bf16.mxu0 %v840
      %930 = vmatpush1.bf16.msra.mxu0 %v839
      %931 = vmatprep.subr.bf16.mxu0 %v852
      %932 = vmatpush1.bf16.msra.mxu0 %v851
      %933 = vmatprep.subr.bf16.mxu0 0
      %934 = vmatpush1.bf16.msra.mxu0 0
      %935 = vmatprep.subr.bf16.mxu0 0
      %936 = vmatpush1.bf16.msra.mxu0 0
      %937 = vmatprep.subr.bf16.mxu0 0
      %938 = vmatpush1.bf16.msra.mxu0 0
      %939 = vmatprep.subr.bf16.mxu0 0
      %940 = vmatpush1.bf16.msra.mxu0 0
      %941 = vmatprep.subr.bf16.mxu0 0
      %942 = vmatpush1.bf16.msra.mxu0 0
      %943 = vmatprep.subr.bf16.mxu0 0
      %944 = vmatpush1.bf16.msra.mxu0 0
      %945 = vmatprep.subr.bf16.mxu0 0
      %946 = vmatpush1.bf16.msra.mxu0 0
      %947 = vmatprep.subr.bf16.mxu0 0
      %948 = vmatpush1.bf16.msra.mxu0 0
      %949 = vmatprep.subr.bf16.mxu0 0
      %950 = vmatpush1.bf16.msra.mxu0 0
      %951 = vmatprep.subr.bf16.mxu0 0
      %952 = vmatpush1.bf16.msra.mxu0 0
      %953 = vmatprep.subr.bf16.mxu0 0
      %954 = vmatpush1.bf16.msra.mxu0 0
      %955 = vmatprep.subr.bf16.mxu0 0
      %956 = vmatpush1.bf16.msra.mxu0 0
      %957 = vmatprep.subr.bf16.mxu0 0
      %958 = vmatpush1.bf16.msra.mxu0 0
      %959 = vmatprep.subr.bf16.mxu0 0
      %960 = vmatpush1.bf16.msra.mxu0 0
      %961 = vmatprep.mubr.bf16.mxu0 0
      %962 = vmatmul.mubr.bf16.gmra.mrb[0].mxu0 %v886
      %v963 = vpop.f32.mrb[0].mxu0
      %v964 = vadd.f32 %v716, %v963
      %v965 = vpop.f32.mrb[0].mxu0
      %v966 = vadd.f32 %v720, %v965
      %v967 = vpop.f32.mrb[0].mxu0
      %v968 = vpop.f32.mrb[0].mxu0
      %969 = vdwg.mxu0
      %970 = vmatprep.subr.bf16.mxu0 %v842
      %971 = vmatpush1.bf16.msra.mxu0 %v841
      %972 = vmatprep.subr.bf16.mxu0 %v854
      %973 = vmatpush1.bf16.msra.mxu0 %v853
      %974 = vmatprep.subr.bf16.mxu0 0
      %975 = vmatpush1.bf16.msra.mxu0 0
      %976 = vmatprep.subr.bf16.mxu0 0
      %977 = vmatpush1.bf16.msra.mxu0 0
      %978 = vmatprep.subr.bf16.mxu0 0
      %979 = vmatpush1.bf16.msra.mxu0 0
      %980 = vmatprep.subr.bf16.mxu0 0
      %981 = vmatpush1.bf16.msra.mxu0 0
      %982 = vmatprep.subr.bf16.mxu0 0
      %983 = vmatpush1.bf16.msra.mxu0 0
      %984 = vmatprep.subr.bf16.mxu0 0
      %985 = vmatpush1.bf16.msra.mxu0 0
      %986 = vmatprep.subr.bf16.mxu0 0
      %987 = vmatpush1.bf16.msra.mxu0 0
      %988 = vmatprep.subr.bf16.mxu0 0
      %989 = vmatpush1.bf16.msra.mxu0 0
      %990 = vmatprep.subr.bf16.mxu0 0
      %991 = vmatpush1.bf16.msra.mxu0 0
      %992 = vmatprep.subr.bf16.mxu0 0
      %993 = vmatpush1.bf16.msra.mxu0 0
      %994 = vmatprep.subr.bf16.mxu0 0
      %995 = vmatpush1.bf16.msra.mxu0 0
      %996 = vmatprep.subr.bf16.mxu0 0
      %997 = vmatpush1.bf16.msra.mxu0 0
      %998 = vmatprep.subr.bf16.mxu0 0
      %999 = vmatpush1.bf16.msra.mxu0 0
      %1000 = vmatprep.subr.bf16.mxu0 0
      %1001 = vmatpush1.bf16.msra.mxu0 0
      %1002 = vmatprep.mubr.bf16.mxu0 0
      %1003 = vmatmul.mubr.bf16.gmra.mrb[0].mxu0 %v886
      %v1004 = vpop.f32.mrb[0].mxu0
      %v1005 = vadd.f32 %v724, %v1004
      %v1006 = vpop.f32.mrb[0].mxu0
      %v1007 = vadd.f32 %v728, %v1006
      %v1008 = vpop.f32.mrb[0].mxu0
      %v1009 = vpop.f32.mrb[0].mxu0
      %1010 = vdwg.mxu0
      %1011 = vmatprep.subr.bf16.mxu0 %v844
      %1012 = vmatpush1.bf16.msra.mxu0 %v843
      %1013 = vmatprep.subr.bf16.mxu0 %v856
      %1014 = vmatpush1.bf16.msra.mxu0 %v855
      %1015 = vmatprep.subr.bf16.mxu0 0
      %1016 = vmatpush1.bf16.msra.mxu0 0
      %1017 = vmatprep.subr.bf16.mxu0 0
      %1018 = vmatpush1.bf16.msra.mxu0 0
      %1019 = vmatprep.subr.bf16.mxu0 0
      %1020 = vmatpush1.bf16.msra.mxu0 0
      %1021 = vmatprep.subr.bf16.mxu0 0
      %1022 = vmatpush1.bf16.msra.mxu0 0
      %1023 = vmatprep.subr.bf16.mxu0 0
      %1024 = vmatpush1.bf16.msra.mxu0 0
      %1025 = vmatprep.subr.bf16.mxu0 0
      %1026 = vmatpush1.bf16.msra.mxu0 0
      %1027 = vmatprep.subr.bf16.mxu0 0
      %1028 = vmatpush1.bf16.msra.mxu0 0
      %1029 = vmatprep.subr.bf16.mxu0 0
      %1030 = vmatpush1.bf16.msra.mxu0 0
      %1031 = vmatprep.subr.bf16.mxu0 0
      %1032 = vmatpush1.bf16.msra.mxu0 0
      %1033 = vmatprep.subr.bf16.mxu0 0
      %1034 = vmatpush1.bf16.msra.mxu0 0
      %1035 = vmatprep.subr.bf16.mxu0 0
      %1036 = vmatpush1.bf16.msra.mxu0 0
      %1037 = vmatprep.subr.bf16.mxu0 0
      %1038 = vmatpush1.bf16.msra.mxu0 0
      %1039 = vmatprep.subr.bf16.mxu0 0
      %1040 = vmatpush1.bf16.msra.mxu0 0
      %1041 = vmatprep.subr.bf16.mxu0 0
      %1042 = vmatpush1.bf16.msra.mxu0 0
      %1043 = vmatprep.mubr.bf16.mxu0 0
      %1044 = vmatmul.mubr.bf16.gmra.mrb[0].mxu0 %v886
      %v1045 = vpop.f32.mrb[0].mxu0
      %v1046 = vadd.f32 %v732, %v1045
      %v1047 = vpop.f32.mrb[0].mxu0
      %v1048 = vadd.f32 %v736, %v1047
      %v1049 = vpop.f32.mrb[0].mxu0
      %v1050 = vpop.f32.mrb[0].mxu0
      %1051 = vdwg.mxu0
      %1052 = vmatprep.subr.bf16.mxu0 %v846
      %1053 = vmatpush1.bf16.msra.mxu0 %v845
      %1054 = vmatprep.subr.bf16.mxu0 %v858
      %1055 = vmatpush1.bf16.msra.mxu0 %v857
      %1056 = vmatprep.subr.bf16.mxu0 0
      %1057 = vmatpush1.bf16.msra.mxu0 0
      %1058 = vmatprep.subr.bf16.mxu0 0
      %1059 = vmatpush1.bf16.msra.mxu0 0
      %1060 = vmatprep.subr.bf16.mxu0 0
      %1061 = vmatpush1.bf16.msra.mxu0 0
      %1062 = vmatprep.subr.bf16.mxu0 0
      %1063 = vmatpush1.bf16.msra.mxu0 0
      %1064 = vmatprep.subr.bf16.mxu0 0
      %1065 = vmatpush1.bf16.msra.mxu0 0
      %1066 = vmatprep.subr.bf16.mxu0 0
      %1067 = vmatpush1.bf16.msra.mxu0 0
      %1068 = vmatprep.subr.bf16.mxu0 0
      %1069 = vmatpush1.bf16.msra.mxu0 0
      %1070 = vmatprep.subr.bf16.mxu0 0
      %1071 = vmatpush1.bf16.msra.mxu0 0
      %1072 = vmatprep.subr.bf16.mxu0 0
      %1073 = vmatpush1.bf16.msra.mxu0 0
      %1074 = vmatprep.subr.bf16.mxu0 0
      %1075 = vmatpush1.bf16.msra.mxu0 0
      %1076 = vmatprep.subr.bf16.mxu0 0
      %1077 = vmatpush1.bf16.msra.mxu0 0
      %1078 = vmatprep.subr.bf16.mxu0 0
      %1079 = vmatpush1.bf16.msra.mxu0 0
      %1080 = vmatprep.subr.bf16.mxu0 0
      %1081 = vmatpush1.bf16.msra.mxu0 0
      %1082 = vmatprep.subr.bf16.mxu0 0
      %1083 = vmatpush1.bf16.msra.mxu0 0
      %1084 = vmatprep.mubr.bf16.mxu0 0
      %1085 = vmatmul.mubr.bf16.gmra.mrb[0].mxu0 %v886
      %v1086 = vpop.f32.mrb[0].mxu0
      %v1087 = vadd.f32 %v740, %v1086
      %v1088 = vpop.f32.mrb[0].mxu0
      %v1089 = vadd.f32 %v744, %v1088
      %v1090 = vpop.f32.mrb[0].mxu0
      %v1091 = vpop.f32.mrb[0].mxu0
      %1092 = vdwg.mxu0
      %1093 = vmatprep.subr.bf16.mxu0 %v848
      %1094 = vmatpush1.bf16.msra.mxu0 %v847
      %1095 = vmatprep.subr.bf16.mxu0 %v860
      %1096 = vmatpush1.bf16.msra.mxu0 %v859
      %1097 = vmatprep.subr.bf16.mxu0 0
      %1098 = vmatpush1.bf16.msra.mxu0 0
      %1099 = vmatprep.subr.bf16.mxu0 0
      %1100 = vmatpush1.bf16.msra.mxu0 0
      %1101 = vmatprep.subr.bf16.mxu0 0
      %1102 = vmatpush1.bf16.msra.mxu0 0
      %1103 = vmatprep.subr.bf16.mxu0 0
      %1104 = vmatpush1.bf16.msra.mxu0 0
      %1105 = vmatprep.subr.bf16.mxu0 0
      %1106 = vmatpush1.bf16.msra.mxu0 0
      %1107 = vmatprep.subr.bf16.mxu0 0
      %1108 = vmatpush1.bf16.msra.mxu0 0
      %1109 = vmatprep.subr.bf16.mxu0 0
      %1110 = vmatpush1.bf16.msra.mxu0 0
      %1111 = vmatprep.subr.bf16.mxu0 0
      %1112 = vmatpush1.bf16.msra.mxu0 0
      %1113 = vmatprep.subr.bf16.mxu0 0
      %1114 = vmatpush1.bf16.msra.mxu0 0
      %1115 = vmatprep.subr.bf16.mxu0 0
      %1116 = vmatpush1.bf16.msra.mxu0 0
      %1117 = vmatprep.subr.bf16.mxu0 0
      %1118 = vmatpush1.bf16.msra.mxu0 0
      %1119 = vmatprep.subr.bf16.mxu0 0
      %1120 = vmatpush1.bf16.msra.mxu0 0
      %1121 = vmatprep.subr.bf16.mxu0 0
      %1122 = vmatpush1.bf16.msra.mxu0 0
      %1123 = vmatprep.subr.bf16.mxu0 0
      %1124 = vmatpush1.bf16.msra.mxu0 0
      %1125 = vmatprep.mubr.bf16.mxu0 0
      %1126 = vmatmul.mubr.bf16.gmra.mrb[0].mxu0 %v886
      %v1127 = vpop.f32.mrb[0].mxu0
      %v1128 = vadd.f32 %v748, %v1127
      %v1129 = vpop.f32.mrb[0].mxu0
      %v1130 = vadd.f32 %v752, %v1129
      %v1131 = vpop.f32.mrb[0].mxu0
      %v1132 = vpop.f32.mrb[0].mxu0
      %1133 = vdwg.mxu0
      %1134 = vmatprep.subr.mxu0 0.0
      %1135 = vmatpush1.xpose.msra.mxu0 %v1005
      %1136 = vmatprep.subr.mxu0 0.0
      %1137 = vmatpush1.xpose.msra.mxu0 0.0
      %1138 = vmatprep.subr.mxu0 0.0
      %1139 = vmatpush1.xpose.msra.mxu0 0.0
      %1140 = vmatprep.subr.mxu0 0.0
      %1141 = vmatpush1.xpose.msra.mxu0 0.0
      %1142 = vmatprep.subr.mxu0 0.0
      %1143 = vmatpush1.xpose.msra.mxu0 0.0
      %1144 = vmatprep.subr.mxu0 0.0
      %1145 = vmatpush1.xpose.msra.mxu0 0.0
      %1146 = vmatprep.subr.mxu0 0.0
      %1147 = vmatpush1.xpose.msra.mxu0 0.0
      %1148 = vmatprep.subr.mxu0 0.0
      %1149 = vmatpush1.xpose.msra.mxu0 0.0
      %1150 = vmatprep.subr.mxu0 0.0
      %1151 = vmatpush1.xpose.msra.mxu0 0.0
      %1152 = vmatprep.subr.mxu0 0.0
      %1153 = vmatpush1.xpose.msra.mxu0 0.0
      %1154 = vmatprep.subr.mxu0 0.0
      %1155 = vmatpush1.xpose.msra.mxu0 0.0
      %1156 = vmatprep.subr.mxu0 0.0
      %1157 = vmatpush1.xpose.msra.mxu0 0.0
      %1158 = vmatprep.subr.mxu0 0.0
      %1159 = vmatpush1.xpose.msra.mxu0 0.0
      %1160 = vmatprep.subr.mxu0 0.0
      %1161 = vmatpush1.xpose.msra.mxu0 0.0
      %1162 = vmatprep.subr.mxu0 0.0
      %1163 = vmatpush1.xpose.msra.mxu0 0.0
      %1164 = vmatprep.subr.mxu0 0.0
      %1165 = vmatpush1.xpose.msra.mxu0 0.0
      %1166 = vmatprep.subr.mxu0 0.0
      %1167 = vmatpush1.xpose.msra.mxu0 0.0
      %1168 = vmatprep.subr.mxu0 0.0
      %1169 = vmatpush1.xpose.msra.mxu0 0.0
      %1170 = vmatprep.subr.mxu0 0.0
      %1171 = vmatpush1.xpose.msra.mxu0 0.0
      %1172 = vmatprep.subr.mxu0 0.0
      %1173 = vmatpush1.xpose.msra.mxu0 0.0
      %1174 = vmatprep.subr.mxu0 0.0
      %1175 = vmatpush1.xpose.msra.mxu0 0.0
      %1176 = vmatprep.subr.mxu0 0.0
      %1177 = vmatpush1.xpose.msra.mxu0 0.0
      %1178 = vmatprep.subr.mxu0 0.0
      %1179 = vmatpush1.xpose.msra.mxu0 0.0
      %1180 = vmatprep.subr.mxu0 0.0
      %1181 = vmatpush1.xpose.msra.mxu0 0.0
      %1182 = vmatprep.subr.mxu0 0.0
      %1183 = vmatpush1.xpose.msra.mxu0 0.0
      %1184 = vmatprep.subr.mxu0 0.0
      %1185 = vmatpush1.xpose.msra.mxu0 0.0
      %1186 = vmatprep.subr.mxu0 0.0
      %1187 = vmatpush1.xpose.msra.mxu0 0.0
      %1188 = vmatprep.subr.mxu0 0.0
      %1189 = vmatpush1.xpose.msra.mxu0 0.0
      %1190 = vmatprep.subr.mxu0 0.0
      %1191 = vmatpush1.xpose.msra.mxu0 0.0
      %1192 = vmatprep.subr.mxu0 0.0
      %1193 = vmatpush1.xpose.msra.mxu0 0.0
      %1194 = vmatprep.subr.mxu0 0.0
      %1195 = vmatpush1.xpose.msra.mxu0 0.0
      %1196 = vmatprep.subr.mxu0 0.0
      %1197 = vmatpush1.xpose.msra.mxu0 0.0
      %1198 = vmatprep.mubr.f32.mxu0 0.0
      %1199 = vmatmul.mubr.f32.gmra.mrb[0].mxu0 %v923
      %v1200 = vpop.f32.mrb[0].mxu0
      %v1201 = vadd.f32 %v643, %v1200
      %v1202 = vpop.f32.mrb[0].mxu0
      %1203 = vdwg.mxu0
      %vm1204 = vcmask 64512
      %v1205 = vsel %vm1204, %v1201, -inf
      %1206 = vmax.xlane.f32.xlu0 %v1205
      %v1207 = vpop.xlane.xlu0 %1206
      %v1208 = vsub.f32 %v1201, %v1207
      %v1209 = vmul.f32 %v1208, 1.442695
      %v1210 = vpow.pop %v1209
      %v1211 = vsel %vm1204, %v1210, 0.0
      %1212 = vadd.xlane.f32.xlu0 %v1211
      %v1213 = vpop.xlane.xlu0 %1212
      %v1214 = vrcp.pop %v1213
      %v1215 = vmul.f32 %v1210, %v1214
      %v1217 = vsel %vm1204, %v1215, 0
      %1219 = vmatprep.subr.mxu0 0.0
      %1220 = vmatpush1.msra.mxu0 %v1087
      %1221 = vmatprep.subr.mxu0 0.0
      %1222 = vmatpush1.msra.mxu0 0.0
      %1223 = vmatprep.subr.mxu0 0.0
      %1224 = vmatpush1.msra.mxu0 0.0
      %1225 = vmatprep.subr.mxu0 0.0
      %1226 = vmatpush1.msra.mxu0 0.0
      %1227 = vmatprep.subr.mxu0 0.0
      %1228 = vmatpush1.msra.mxu0 0.0
      %1229 = vmatprep.subr.mxu0 0.0
      %1230 = vmatpush1.msra.mxu0 0.0
      %1231 = vmatprep.subr.mxu0 0.0
      %1232 = vmatpush1.msra.mxu0 0.0
      %1233 = vmatprep.subr.mxu0 0.0
      %1234 = vmatpush1.msra.mxu0 0.0
      %1235 = vmatprep.subr.mxu0 0.0
      %1236 = vmatpush1.msra.mxu0 0.0
      %1237 = vmatprep.subr.mxu0 0.0
      %1238 = vmatpush1.msra.mxu0 0.0
      %1239 = vmatprep.subr.mxu0 0.0
      %1240 = vmatpush1.msra.mxu0 0.0
      %1241 = vmatprep.subr.mxu0 0.0
      %1242 = vmatpush1.msra.mxu0 0.0
      %1243 = vmatprep.subr.mxu0 0.0
      %1244 = vmatpush1.msra.mxu0 0.0
      %1245 = vmatprep.subr.mxu0 0.0
      %1246 = vmatpush1.msra.mxu0 0.0
      %1247 = vmatprep.subr.mxu0 0.0
      %1248 = vmatpush1.msra.mxu0 0.0
      %1249 = vmatprep.subr.mxu0 0.0
      %1250 = vmatpush1.msra.mxu0 0.0
      %1251 = vmatprep.subr.mxu0 0.0
      %1252 = vmatpush1.msra.mxu0 0.0
      %1253 = vmatprep.subr.mxu0 0.0
      %1254 = vmatpush1.msra.mxu0 0.0
      %1255 = vmatprep.subr.mxu0 0.0
      %1256 = vmatpush1.msra.mxu0 0.0
      %1257 = vmatprep.subr.mxu0 0.0
      %1258 = vmatpush1.msra.mxu0 0.0
      %1259 = vmatprep.subr.mxu0 0.0
      %1260 = vmatpush1.msra.mxu0 0.0
      %1261 = vmatprep.subr.mxu0 0.0
      %1262 = vmatpush1.msra.mxu0 0.0
      %1263 = vmatprep.subr.mxu0 0.0
      %1264 = vmatpush1.msra.mxu0 0.0
      %1265 = vmatprep.subr.mxu0 0.0
      %1266 = vmatpush1.msra.mxu0 0.0
      %1267 = vmatprep.subr.mxu0 0.0
      %1268 = vmatpush1.msra.mxu0 0.0
      %1269 = vmatprep.subr.mxu0 0.0
      %1270 = vmatpush1.msra.mxu0 0.0
      %1271 = vmatprep.subr.mxu0 0.0
      %1272 = vmatpush1.msra.mxu0 0.0
      %1273 = vmatprep.subr.mxu0 0.0
      %1274 = vmatpush1.msra.mxu0 0.0
      %1275 = vmatprep.subr.mxu0 0.0
      %1276 = vmatpush1.msra.mxu0 0.0
      %1277 = vmatprep.subr.mxu0 0.0
      %1278 = vmatpush1.msra.mxu0 0.0
      %1279 = vmatprep.subr.mxu0 0.0
      %1280 = vmatpush1.msra.mxu0 0.0
      %1281 = vmatprep.subr.mxu0 0.0
      %1282 = vmatpush1.msra.mxu0 0.0
      %1283 = vmatprep.mubr.f32.mxu0 0.0
      %1284 = vmatmul.mubr.f32.gmra.mrb[0].mxu0 %v1217
      %v1285 = vpop.f32.mrb[0].mxu0
      %v1286 = vadd.f32 0.0, %v1285
      %v1287 = vpop.f32.mrb[0].mxu0
      %1288 = vdwg.mxu0
      %1289 = vmatprep.subr.mxu0 0.0
      %1290 = vmatpush1.xpose.msra.mxu0 %v1007
      %1291 = vmatprep.subr.mxu0 0.0
      %1292 = vmatpush1.xpose.msra.mxu0 0.0
      %1293 = vmatprep.subr.mxu0 0.0
      %1294 = vmatpush1.xpose.msra.mxu0 0.0
      %1295 = vmatprep.subr.mxu0 0.0
      %1296 = vmatpush1.xpose.msra.mxu0 0.0
      %1297 = vmatprep.subr.mxu0 0.0
      %1298 = vmatpush1.xpose.msra.mxu0 0.0
      %1299 = vmatprep.subr.mxu0 0.0
      %1300 = vmatpush1.xpose.msra.mxu0 0.0
      %1301 = vmatprep.subr.mxu0 0.0
      %1302 = vmatpush1.xpose.msra.mxu0 0.0
      %1303 = vmatprep.subr.mxu0 0.0
      %1304 = vmatpush1.xpose.msra.mxu0 0.0
      %1305 = vmatprep.subr.mxu0 0.0
      %1306 = vmatpush1.xpose.msra.mxu0 0.0
      %1307 = vmatprep.subr.mxu0 0.0
      %1308 = vmatpush1.xpose.msra.mxu0 0.0
      %1309 = vmatprep.subr.mxu0 0.0
      %1310 = vmatpush1.xpose.msra.mxu0 0.0
      %1311 = vmatprep.subr.mxu0 0.0
      %1312 = vmatpush1.xpose.msra.mxu0 0.0
      %1313 = vmatprep.subr.mxu0 0.0
      %1314 = vmatpush1.xpose.msra.mxu0 0.0
      %1315 = vmatprep.subr.mxu0 0.0
      %1316 = vmatpush1.xpose.msra.mxu0 0.0
      %1317 = vmatprep.subr.mxu0 0.0
      %1318 = vmatpush1.xpose.msra.mxu0 0.0
      %1319 = vmatprep.subr.mxu0 0.0
      %1320 = vmatpush1.xpose.msra.mxu0 0.0
      %1321 = vmatprep.subr.mxu0 0.0
      %1322 = vmatpush1.xpose.msra.mxu0 0.0
      %1323 = vmatprep.subr.mxu0 0.0
      %1324 = vmatpush1.xpose.msra.mxu0 0.0
      %1325 = vmatprep.subr.mxu0 0.0
      %1326 = vmatpush1.xpose.msra.mxu0 0.0
      %1327 = vmatprep.subr.mxu0 0.0
      %1328 = vmatpush1.xpose.msra.mxu0 0.0
      %1329 = vmatprep.subr.mxu0 0.0
      %1330 = vmatpush1.xpose.msra.mxu0 0.0
      %1331 = vmatprep.subr.mxu0 0.0
      %1332 = vmatpush1.xpose.msra.mxu0 0.0
      %1333 = vmatprep.subr.mxu0 0.0
      %1334 = vmatpush1.xpose.msra.mxu0 0.0
      %1335 = vmatprep.subr.mxu0 0.0
      %1336 = vmatpush1.xpose.msra.mxu0 0.0
      %1337 = vmatprep.subr.mxu0 0.0
      %1338 = vmatpush1.xpose.msra.mxu0 0.0
      %1339 = vmatprep.subr.mxu0 0.0
      %1340 = vmatpush1.xpose.msra.mxu0 0.0
      %1341 = vmatprep.subr.mxu0 0.0
      %1342 = vmatpush1.xpose.msra.mxu0 0.0
      %1343 = vmatprep.subr.mxu0 0.0
      %1344 = vmatpush1.xpose.msra.mxu0 0.0
      %1345 = vmatprep.subr.mxu0 0.0
      %1346 = vmatpush1.xpose.msra.mxu0 0.0
      %1347 = vmatprep.subr.mxu0 0.0
      %1348 = vmatpush1.xpose.msra.mxu0 0.0
      %1349 = vmatprep.subr.mxu0 0.0
      %1350 = vmatpush1.xpose.msra.mxu0 0.0
      %1351 = vmatprep.subr.mxu0 0.0
      %1352 = vmatpush1.xpose.msra.mxu0 0.0
      %1353 = vmatprep.mubr.f32.mxu0 0.0
      %1354 = vmatmul.mubr.f32.gmra.mrb[0].mxu0 %v925
      %v1355 = vpop.f32.mrb[0].mxu0
      %v1356 = vadd.f32 %v643, %v1355
      %v1357 = vpop.f32.mrb[0].mxu0
      %1358 = vdwg.mxu0
      %v1359 = vsel %vm1204, %v1356, -inf
      %1360 = vmax.xlane.f32.xlu0 %v1359
      %v1361 = vpop.xlane.xlu0 %1360
      %v1362 = vsub.f32 %v1356, %v1361
      %v1363 = vmul.f32 %v1362, 1.442695
      %v1364 = vpow.pop %v1363
      %v1365 = vsel %vm1204, %v1364, 0.0
      %1366 = vadd.xlane.f32.xlu0 %v1365
      %v1367 = vpop.xlane.xlu0 %1366
      %v1368 = vrcp.pop %v1367
      %v1369 = vmul.f32 %v1364, %v1368
      %v1371 = vsel %vm1204, %v1369, 0
      %1373 = vmatprep.subr.mxu0 0.0
      %1374 = vmatpush1.msra.mxu0 %v1089
      %1375 = vmatprep.subr.mxu0 0.0
      %1376 = vmatpush1.msra.mxu0 0.0
      %1377 = vmatprep.subr.mxu0 0.0
      %1378 = vmatpush1.msra.mxu0 0.0
      %1379 = vmatprep.subr.mxu0 0.0
      %1380 = vmatpush1.msra.mxu0 0.0
      %1381 = vmatprep.subr.mxu0 0.0
      %1382 = vmatpush1.msra.mxu0 0.0
      %1383 = vmatprep.subr.mxu0 0.0
      %1384 = vmatpush1.msra.mxu0 0.0
      %1385 = vmatprep.subr.mxu0 0.0
      %1386 = vmatpush1.msra.mxu0 0.0
      %1387 = vmatprep.subr.mxu0 0.0
      %1388 = vmatpush1.msra.mxu0 0.0
      %1389 = vmatprep.subr.mxu0 0.0
      %1390 = vmatpush1.msra.mxu0 0.0
      %1391 = vmatprep.subr.mxu0 0.0
      %1392 = vmatpush1.msra.mxu0 0.0
      %1393 = vmatprep.subr.mxu0 0.0
      %1394 = vmatpush1.msra.mxu0 0.0
      %1395 = vmatprep.subr.mxu0 0.0
      %1396 = vmatpush1.msra.mxu0 0.0
      %1397 = vmatprep.subr.mxu0 0.0
      %1398 = vmatpush1.msra.mxu0 0.0
      %1399 = vmatprep.subr.mxu0 0.0
      %1400 = vmatpush1.msra.mxu0 0.0
      %1401 = vmatprep.subr.mxu0 0.0
      %1402 = vmatpush1.msra.mxu0 0.0
      %1403 = vmatprep.subr.mxu0 0.0
      %1404 = vmatpush1.msra.mxu0 0.0
      %1405 = vmatprep.subr.mxu0 0.0
      %1406 = vmatpush1.msra.mxu0 0.0
      %1407 = vmatprep.subr.mxu0 0.0
      %1408 = vmatpush1.msra.mxu0 0.0
      %1409 = vmatprep.subr.mxu0 0.0
      %1410 = vmatpush1.msra.mxu0 0.0
      %1411 = vmatprep.subr.mxu0 0.0
      %1412 = vmatpush1.msra.mxu0 0.0
      %1413 = vmatprep.subr.mxu0 0.0
      %1414 = vmatpush1.msra.mxu0 0.0
      %1415 = vmatprep.subr.mxu0 0.0
      %1416 = vmatpush1.msra.mxu0 0.0
      %1417 = vmatprep.subr.mxu0 0.0
      %1418 = vmatpush1.msra.mxu0 0.0
      %1419 = vmatprep.subr.mxu0 0.0
      %1420 = vmatpush1.msra.mxu0 0.0
      %1421 = vmatprep.subr.mxu0 0.0
      %1422 = vmatpush1.msra.mxu0 0.0
      %1423 = vmatprep.subr.mxu0 0.0
      %1424 = vmatpush1.msra.mxu0 0.0
      %1425 = vmatprep.subr.mxu0 0.0
      %1426 = vmatpush1.msra.mxu0 0.0
      %1427 = vmatprep.subr.mxu0 0.0
      %1428 = vmatpush1.msra.mxu0 0.0
      %1429 = vmatprep.subr.mxu0 0.0
      %1430 = vmatpush1.msra.mxu0 0.0
      %1431 = vmatprep.subr.mxu0 0.0
      %1432 = vmatpush1.msra.mxu0 0.0
      %1433 = vmatprep.subr.mxu0 0.0
      %1434 = vmatpush1.msra.mxu0 0.0
      %1435 = vmatprep.subr.mxu0 0.0
      %1436 = vmatpush1.msra.mxu0 0.0
      %1437 = vmatprep.mubr.f32.mxu0 0.0
      %1438 = vmatmul.mubr.f32.gmra.mrb[0].mxu0 %v1371
      %v1439 = vpop.f32.mrb[0].mxu0
      %v1440 = vadd.f32 0.0, %v1439
      %v1441 = vpop.f32.mrb[0].mxu0
      %1442 = vdwg.mxu0
      %1443 = vmatprep.subr.mxu0 0.0
      %1444 = vmatpush1.xpose.msra.mxu0 %v1046
      %1445 = vmatprep.subr.mxu0 0.0
      %1446 = vmatpush1.xpose.msra.mxu0 0.0
      %1447 = vmatprep.subr.mxu0 0.0
      %1448 = vmatpush1.xpose.msra.mxu0 0.0
      %1449 = vmatprep.subr.mxu0 0.0
      %1450 = vmatpush1.xpose.msra.mxu0 0.0
      %1451 = vmatprep.subr.mxu0 0.0
      %1452 = vmatpush1.xpose.msra.mxu0 0.0
      %1453 = vmatprep.subr.mxu0 0.0
      %1454 = vmatpush1.xpose.msra.mxu0 0.0
      %1455 = vmatprep.subr.mxu0 0.0
      %1456 = vmatpush1.xpose.msra.mxu0 0.0
      %1457 = vmatprep.subr.mxu0 0.0
      %1458 = vmatpush1.xpose.msra.mxu0 0.0
      %1459 = vmatprep.subr.mxu0 0.0
      %1460 = vmatpush1.xpose.msra.mxu0 0.0
      %1461 = vmatprep.subr.mxu0 0.0
      %1462 = vmatpush1.xpose.msra.mxu0 0.0
      %1463 = vmatprep.subr.mxu0 0.0
      %1464 = vmatpush1.xpose.msra.mxu0 0.0
      %1465 = vmatprep.subr.mxu0 0.0
      %1466 = vmatpush1.xpose.msra.mxu0 0.0
      %1467 = vmatprep.subr.mxu0 0.0
      %1468 = vmatpush1.xpose.msra.mxu0 0.0
      %1469 = vmatprep.subr.mxu0 0.0
      %1470 = vmatpush1.xpose.msra.mxu0 0.0
      %1471 = vmatprep.subr.mxu0 0.0
      %1472 = vmatpush1.xpose.msra.mxu0 0.0
      %1473 = vmatprep.subr.mxu0 0.0
      %1474 = vmatpush1.xpose.msra.mxu0 0.0
      %1475 = vmatprep.subr.mxu0 0.0
      %1476 = vmatpush1.xpose.msra.mxu0 0.0
      %1477 = vmatprep.subr.mxu0 0.0
      %1478 = vmatpush1.xpose.msra.mxu0 0.0
      %1479 = vmatprep.subr.mxu0 0.0
      %1480 = vmatpush1.xpose.msra.mxu0 0.0
      %1481 = vmatprep.subr.mxu0 0.0
      %1482 = vmatpush1.xpose.msra.mxu0 0.0
      %1483 = vmatprep.subr.mxu0 0.0
      %1484 = vmatpush1.xpose.msra.mxu0 0.0
      %1485 = vmatprep.subr.mxu0 0.0
      %1486 = vmatpush1.xpose.msra.mxu0 0.0
      %1487 = vmatprep.subr.mxu0 0.0
      %1488 = vmatpush1.xpose.msra.mxu0 0.0
      %1489 = vmatprep.subr.mxu0 0.0
      %1490 = vmatpush1.xpose.msra.mxu0 0.0
      %1491 = vmatprep.subr.mxu0 0.0
      %1492 = vmatpush1.xpose.msra.mxu0 0.0
      %1493 = vmatprep.subr.mxu0 0.0
      %1494 = vmatpush1.xpose.msra.mxu0 0.0
      %1495 = vmatprep.subr.mxu0 0.0
      %1496 = vmatpush1.xpose.msra.mxu0 0.0
      %1497 = vmatprep.subr.mxu0 0.0
      %1498 = vmatpush1.xpose.msra.mxu0 0.0
      %1499 = vmatprep.subr.mxu0 0.0
      %1500 = vmatpush1.xpose.msra.mxu0 0.0
      %1501 = vmatprep.subr.mxu0 0.0
      %1502 = vmatpush1.xpose.msra.mxu0 0.0
      %1503 = vmatprep.subr.mxu0 0.0
      %1504 = vmatpush1.xpose.msra.mxu0 0.0
      %1505 = vmatprep.subr.mxu0 0.0
      %1506 = vmatpush1.xpose.msra.mxu0 0.0
      %1507 = vmatprep.mubr.f32.mxu0 0.0
      %1508 = vmatmul.mubr.f32.gmra.mrb[0].mxu0 %v964
      %v1509 = vpop.f32.mrb[0].mxu0
      %v1510 = vadd.f32 %v643, %v1509
      %v1511 = vpop.f32.mrb[0].mxu0
      %1512 = vdwg.mxu0
      %v1513 = vsel %vm1204, %v1510, -inf
      %1514 = vmax.xlane.f32.xlu0 %v1513
      %v1515 = vpop.xlane.xlu0 %1514
      %v1516 = vsub.f32 %v1510, %v1515
      %v1517 = vmul.f32 %v1516, 1.442695
      %v1518 = vpow.pop %v1517
      %v1519 = vsel %vm1204, %v1518, 0.0
      %1520 = vadd.xlane.f32.xlu0 %v1519
      %v1521 = vpop.xlane.xlu0 %1520
      %v1522 = vrcp.pop %v1521
      %v1523 = vmul.f32 %v1518, %v1522
      %v1525 = vsel %vm1204, %v1523, 0
      %1527 = vmatprep.subr.mxu0 0.0
      %1528 = vmatpush1.msra.mxu0 %v1128
      %1529 = vmatprep.subr.mxu0 0.0
      %1530 = vmatpush1.msra.mxu0 0.0
      %1531 = vmatprep.subr.mxu0 0.0
      %1532 = vmatpush1.msra.mxu0 0.0
      %1533 = vmatprep.subr.mxu0 0.0
      %1534 = vmatpush1.msra.mxu0 0.0
      %1535 = vmatprep.subr.mxu0 0.0
      %1536 = vmatpush1.msra.mxu0 0.0
      %1537 = vmatprep.subr.mxu0 0.0
      %1538 = vmatpush1.msra.mxu0 0.0
      %1539 = vmatprep.subr.mxu0 0.0
      %1540 = vmatpush1.msra.mxu0 0.0
      %1541 = vmatprep.subr.mxu0 0.0
      %1542 = vmatpush1.msra.mxu0 0.0
      %1543 = vmatprep.subr.mxu0 0.0
      %1544 = vmatpush1.msra.mxu0 0.0
      %1545 = vmatprep.subr.mxu0 0.0
      %1546 = vmatpush1.msra.mxu0 0.0
      %1547 = vmatprep.subr.mxu0 0.0
      %1548 = vmatpush1.msra.mxu0 0.0
      %1549 = vmatprep.subr.mxu0 0.0
      %1550 = vmatpush1.msra.mxu0 0.0
      %1551 = vmatprep.subr.mxu0 0.0
      %1552 = vmatpush1.msra.mxu0 0.0
      %1553 = vmatprep.subr.mxu0 0.0
      %1554 = vmatpush1.msra.mxu0 0.0
      %1555 = vmatprep.subr.mxu0 0.0
      %1556 = vmatpush1.msra.mxu0 0.0
      %1557 = vmatprep.subr.mxu0 0.0
      %1558 = vmatpush1.msra.mxu0 0.0
      %1559 = vmatprep.subr.mxu0 0.0
      %1560 = vmatpush1.msra.mxu0 0.0
      %1561 = vmatprep.subr.mxu0 0.0
      %1562 = vmatpush1.msra.mxu0 0.0
      %1563 = vmatprep.subr.mxu0 0.0
      %1564 = vmatpush1.msra.mxu0 0.0
      %1565 = vmatprep.subr.mxu0 0.0
      %1566 = vmatpush1.msra.mxu0 0.0
      %1567 = vmatprep.subr.mxu0 0.0
      %1568 = vmatpush1.msra.mxu0 0.0
      %1569 = vmatprep.subr.mxu0 0.0
      %1570 = vmatpush1.msra.mxu0 0.0
      %1571 = vmatprep.subr.mxu0 0.0
      %1572 = vmatpush1.msra.mxu0 0.0
      %1573 = vmatprep.subr.mxu0 0.0
      %1574 = vmatpush1.msra.mxu0 0.0
      %1575 = vmatprep.subr.mxu0 0.0
      %1576 = vmatpush1.msra.mxu0 0.0
      %1577 = vmatprep.subr.mxu0 0.0
      %1578 = vmatpush1.msra.mxu0 0.0
      %1579 = vmatprep.subr.mxu0 0.0
      %1580 = vmatpush1.msra.mxu0 0.0
      %1581 = vmatprep.subr.mxu0 0.0
      %1582 = vmatpush1.msra.mxu0 0.0
      %1583 = vmatprep.subr.mxu0 0.0
      %1584 = vmatpush1.msra.mxu0 0.0
      %1585 = vmatprep.subr.mxu0 0.0
      %1586 = vmatpush1.msra.mxu0 0.0
      %1587 = vmatprep.subr.mxu0 0.0
      %1588 = vmatpush1.msra.mxu0 0.0
      %1589 = vmatprep.subr.mxu0 0.0
      %1590 = vmatpush1.msra.mxu0 0.0
      %1591 = vmatprep.mubr.f32.mxu0 0.0
      %1592 = vmatmul.mubr.f32.gmra.mrb[0].mxu0 %v1525
      %v1593 = vpop.f32.mrb[0].mxu0
      %v1594 = vadd.f32 0.0, %v1593
      %v1595 = vpop.f32.mrb[0].mxu0
      %1596 = vdwg.mxu0
      %1597 = vmatprep.subr.mxu0 0.0
      %1598 = vmatpush1.xpose.msra.mxu0 %v1048
      %1599 = vmatprep.subr.mxu0 0.0
      %1600 = vmatpush1.xpose.msra.mxu0 0.0
      %1601 = vmatprep.subr.mxu0 0.0
      %1602 = vmatpush1.xpose.msra.mxu0 0.0
      %1603 = vmatprep.subr.mxu0 0.0
      %1604 = vmatpush1.xpose.msra.mxu0 0.0
      %1605 = vmatprep.subr.mxu0 0.0
      %1606 = vmatpush1.xpose.msra.mxu0 0.0
      %1607 = vmatprep.subr.mxu0 0.0
      %1608 = vmatpush1.xpose.msra.mxu0 0.0
      %1609 = vmatprep.subr.mxu0 0.0
      %1610 = vmatpush1.xpose.msra.mxu0 0.0
      %1611 = vmatprep.subr.mxu0 0.0
      %1612 = vmatpush1.xpose.msra.mxu0 0.0
      %1613 = vmatprep.subr.mxu0 0.0
      %1614 = vmatpush1.xpose.msra.mxu0 0.0
      %1615 = vmatprep.subr.mxu0 0.0
      %1616 = vmatpush1.xpose.msra.mxu0 0.0
      %1617 = vmatprep.subr.mxu0 0.0
      %1618 = vmatpush1.xpose.msra.mxu0 0.0
      %1619 = vmatprep.subr.mxu0 0.0
      %1620 = vmatpush1.xpose.msra.mxu0 0.0
      %1621 = vmatprep.subr.mxu0 0.0
      %1622 = vmatpush1.xpose.msra.mxu0 0.0
      %1623 = vmatprep.subr.mxu0 0.0
      %1624 = vmatpush1.xpose.msra.mxu0 0.0
      %1625 = vmatprep.subr.mxu0 0.0
      %1626 = vmatpush1.xpose.msra.mxu0 0.0
      %1627 = vmatprep.subr.mxu0 0.0
      %1628 = vmatpush1.xpose.msra.mxu0 0.0
      %1629 = vmatprep.subr.mxu0 0.0
      %1630 = vmatpush1.xpose.msra.mxu0 0.0
      %1631 = vmatprep.subr.mxu0 0.0
      %1632 = vmatpush1.xpose.msra.mxu0 0.0
      %1633 = vmatprep.subr.mxu0 0.0
      %1634 = vmatpush1.xpose.msra.mxu0 0.0
      %1635 = vmatprep.subr.mxu0 0.0
      %1636 = vmatpush1.xpose.msra.mxu0 0.0
      %1637 = vmatprep.subr.mxu0 0.0
      %1638 = vmatpush1.xpose.msra.mxu0 0.0
      %1639 = vmatprep.subr.mxu0 0.0
      %1640 = vmatpush1.xpose.msra.mxu0 0.0
      %1641 = vmatprep.subr.mxu0 0.0
      %1642 = vmatpush1.xpose.msra.mxu0 0.0
      %1643 = vmatprep.subr.mxu0 0.0
      %1644 = vmatpush1.xpose.msra.mxu0 0.0
      %1645 = vmatprep.subr.mxu0 0.0
      %1646 = vmatpush1.xpose.msra.mxu0 0.0
      %1647 = vmatprep.subr.mxu0 0.0
      %1648 = vmatpush1.xpose.msra.mxu0 0.0
      %1649 = vmatprep.subr.mxu0 0.0
      %1650 = vmatpush1.xpose.msra.mxu0 0.0
      %1651 = vmatprep.subr.mxu0 0.0
      %1652 = vmatpush1.xpose.msra.mxu0 0.0
      %1653 = vmatprep.subr.mxu0 0.0
      %1654 = vmatpush1.xpose.msra.mxu0 0.0
      %1655 = vmatprep.subr.mxu0 0.0
      %1656 = vmatpush1.xpose.msra.mxu0 0.0
      %1657 = vmatprep.subr.mxu0 0.0
      %1658 = vmatpush1.xpose.msra.mxu0 0.0
      %1659 = vmatprep.subr.mxu0 0.0
      %1660 = vmatpush1.xpose.msra.mxu0 0.0
      %1661 = vmatprep.mubr.f32.mxu0 0.0
      %1662 = vmatmul.mubr.f32.gmra.mrb[0].mxu0 %v966
      %v1663 = vpop.f32.mrb[0].mxu0
      %v1664 = vadd.f32 %v643, %v1663
      %v1665 = vpop.f32.mrb[0].mxu0
      %1666 = vdwg.mxu0
      %v1667 = vsel %vm1204, %v1664, -inf
      %1668 = vmax.xlane.f32.xlu0 %v1667
      %v1669 = vpop.xlane.xlu0 %1668
      %v1670 = vsub.f32 %v1664, %v1669
      %v1671 = vmul.f32 %v1670, 1.442695
      %v1672 = vpow.pop %v1671
      %v1673 = vsel %vm1204, %v1672, 0.0
      %1674 = vadd.xlane.f32.xlu0 %v1673
      %v1675 = vpop.xlane.xlu0 %1674
      %v1676 = vrcp.pop %v1675
      %v1677 = vmul.f32 %v1672, %v1676
      %v1679 = vsel %vm1204, %v1677, 0
      %1681 = vmatprep.subr.mxu0 0.0
      %1682 = vmatpush1.msra.mxu0 %v1130
      %1683 = vmatprep.subr.mxu0 0.0
      %1684 = vmatpush1.msra.mxu0 0.0
      %1685 = vmatprep.subr.mxu0 0.0
      %1686 = vmatpush1.msra.mxu0 0.0
      %1687 = vmatprep.subr.mxu0 0.0
      %1688 = vmatpush1.msra.mxu0 0.0
      %1689 = vmatprep.subr.mxu0 0.0
      %1690 = vmatpush1.msra.mxu0 0.0
      %1691 = vmatprep.subr.mxu0 0.0
      %1692 = vmatpush1.msra.mxu0 0.0
      %1693 = vmatprep.subr.mxu0 0.0
      %1694 = vmatpush1.msra.mxu0 0.0
      %1695 = vmatprep.subr.mxu0 0.0
      %1696 = vmatpush1.msra.mxu0 0.0
      %1697 = vmatprep.subr.mxu0 0.0
      %1698 = vmatpush1.msra.mxu0 0.0
      %1699 = vmatprep.subr.mxu0 0.0
      %1700 = vmatpush1.msra.mxu0 0.0
      %1701 = vmatprep.subr.mxu0 0.0
      %1702 = vmatpush1.msra.mxu0 0.0
      %1703 = vmatprep.subr.mxu0 0.0
      %1704 = vmatpush1.msra.mxu0 0.0
      %1705 = vmatprep.subr.mxu0 0.0
      %1706 = vmatpush1.msra.mxu0 0.0
      %1707 = vmatprep.subr.mxu0 0.0
      %1708 = vmatpush1.msra.mxu0 0.0
      %1709 = vmatprep.subr.mxu0 0.0
      %1710 = vmatpush1.msra.mxu0 0.0
      %1711 = vmatprep.subr.mxu0 0.0
      %1712 = vmatpush1.msra.mxu0 0.0
      %1713 = vmatprep.subr.mxu0 0.0
      %1714 = vmatpush1.msra.mxu0 0.0
      %1715 = vmatprep.subr.mxu0 0.0
      %1716 = vmatpush1.msra.mxu0 0.0
      %1717 = vmatprep.subr.mxu0 0.0
      %1718 = vmatpush1.msra.mxu0 0.0
      %1719 = vmatprep.subr.mxu0 0.0
      %1720 = vmatpush1.msra.mxu0 0.0
      %1721 = vmatprep.subr.mxu0 0.0
      %1722 = vmatpush1.msra.mxu0 0.0
      %1723 = vmatprep.subr.mxu0 0.0
      %1724 = vmatpush1.msra.mxu0 0.0
      %1725 = vmatprep.subr.mxu0 0.0
      %1726 = vmatpush1.msra.mxu0 0.0
      %1727 = vmatprep.subr.mxu0 0.0
      %1728 = vmatpush1.msra.mxu0 0.0
      %1729 = vmatprep.subr.mxu0 0.0
      %1730 = vmatpush1.msra.mxu0 0.0
      %1731 = vmatprep.subr.mxu0 0.0
      %1732 = vmatpush1.msra.mxu0 0.0
      %1733 = vmatprep.subr.mxu0 0.0
      %1734 = vmatpush1.msra.mxu0 0.0
      %1735 = vmatprep.subr.mxu0 0.0
      %1736 = vmatpush1.msra.mxu0 0.0
      %1737 = vmatprep.subr.mxu0 0.0
      %1738 = vmatpush1.msra.mxu0 0.0
      %1739 = vmatprep.subr.mxu0 0.0
      %1740 = vmatpush1.msra.mxu0 0.0
      %1741 = vmatprep.subr.mxu0 0.0
      %1742 = vmatpush1.msra.mxu0 0.0
      %1743 = vmatprep.subr.mxu0 0.0
      %1744 = vmatpush1.msra.mxu0 0.0
      %1745 = vmatprep.mubr.f32.mxu0 0.0
      %1746 = vmatmul.mubr.f32.gmra.mrb[0].mxu0 %v1679
      %v1747 = vpop.f32.mrb[0].mxu0
      %v1748 = vadd.f32 0.0, %v1747
      %v1749 = vpop.f32.mrb[0].mxu0
      %1750 = vdwg.mxu0
      %v1751 = vpack.c.bf16 %v1286, %v1286
      %v1752 = vpack.c.bf16 %v1440, %v1440
      %v1753 = vpack.c.bf16 %v1594, %v1594
      %v1754 = vpack.c.bf16 %v1748, %v1748
      %v1755 = vld [vmem:[%s6] sm:$0xf]
      %v1756 = vld [vmem:[%s6 + $0x4] sm:$0xf]
      %v1757 = vld [vmem:[%s6 + $0x8] sm:$0xf]
      %v1758 = vld [vmem:[%s6 + $0xc] sm:$0xf]
      %v1759 = vld [vmem:[%s6 + $0x10] sm:$0xf]
      %v1760 = vld [vmem:[%s6 + $0x14] sm:$0xf]
      %v1761 = vld [vmem:[%s6 + $0x18] sm:$0xf]
      %v1762 = vld [vmem:[%s6 + $0x1c] sm:$0xf]
      %v1763 = vld [vmem:[%s6 + $0x20] sm:$0xf]
      %v1764 = vld [vmem:[%s6 + $0x24] sm:$0xf]
      %v1765 = vld [vmem:[%s6 + $0x28] sm:$0xf]
      %v1766 = vld [vmem:[%s6 + $0x2c] sm:$0xf]
      %v1767 = vld [vmem:[%s6 + $0x30] sm:$0xf]
      %v1768 = vld [vmem:[%s6 + $0x34] sm:$0xf]
      %v1769 = vld [vmem:[%s6 + $0x38] sm:$0xf]
      %v1770 = vld [vmem:[%s6 + $0x3c] sm:$0xf]
      %v1771 = vld [vmem:[%s6 + $0x40] sm:$0xf]
      %v1772 = vld [vmem:[%s6 + $0x44] sm:$0xf]
      %v1773 = vld [vmem:[%s6 + $0x48] sm:$0xf]
      %v1774 = vld [vmem:[%s6 + $0x4c] sm:$0xf]
      %v1775 = vld [vmem:[%s6 + $0x50] sm:$0xf]
      %v1776 = vld [vmem:[%s6 + $0x54] sm:$0xf]
      %v1777 = vld [vmem:[%s6 + $0x58] sm:$0xf]
      %v1778 = vld [vmem:[%s6 + $0x5c] sm:$0xf]
      %v1779 = vld [vmem:[%s6 + $0x60] sm:$0xf]
      %v1780 = vld [vmem:[%s6 + $0x64] sm:$0xf]
      %v1781 = vld [vmem:[%s6 + $0x68] sm:$0xf]
      %v1782 = vld [vmem:[%s6 + $0x6c] sm:$0xf]
      %v1783 = vld [vmem:[%s6 + $0x70] sm:$0xf]
      %v1784 = vld [vmem:[%s6 + $0x74] sm:$0xf]
      %v1785 = vld [vmem:[%s6 + $0x78] sm:$0xf]
      %v1786 = vld [vmem:[%s6 + $0x7c] sm:$0xf]
      %v1787 = vld [vmem:[%s6 + $0x80] sm:$0xf]
      %v1788 = vld [vmem:[%s6 + $0x84] sm:$0xf]
      %v1789 = vld [vmem:[%s6 + $0x88] sm:$0xf]
      %v1790 = vld [vmem:[%s6 + $0x8c] sm:$0xf]
      %v1791 = vld [vmem:[%s6 + $0x90] sm:$0xf]
      %v1792 = vld [vmem:[%s6 + $0x94] sm:$0xf]
      %v1793 = vld [vmem:[%s6 + $0x98] sm:$0xf]
      %v1794 = vld [vmem:[%s6 + $0x9c] sm:$0xf]
      %v1795 = vld [vmem:[%s6 + $0xa0] sm:$0xf]
      %v1796 = vld [vmem:[%s6 + $0xa4] sm:$0xf]
      %v1797 = vld [vmem:[%s6 + $0xa8] sm:$0xf]
      %v1798 = vld [vmem:[%s6 + $0xac] sm:$0xf]
      %v1799 = vld [vmem:[%s6 + $0xb0] sm:$0xf]
      %v1800 = vld [vmem:[%s6 + $0xb4] sm:$0xf]
      %v1801 = vld [vmem:[%s6 + $0xb8] sm:$0xf]
      %v1802 = vld [vmem:[%s6 + $0xbc] sm:$0xf]
      %v1803 = vld [vmem:[%s6 + $0xc0] sm:$0xf]
      %v1804 = vld [vmem:[%s6 + $0xc4] sm:$0xf]
      %v1805 = vld [vmem:[%s6 + $0xc8] sm:$0xf]
      %v1806 = vld [vmem:[%s6 + $0xcc] sm:$0xf]
      %v1807 = vld [vmem:[%s6 + $0xd0] sm:$0xf]
      %v1808 = vld [vmem:[%s6 + $0xd4] sm:$0xf]
      %v1809 = vld [vmem:[%s6 + $0xd8] sm:$0xf]
      %v1810 = vld [vmem:[%s6 + $0xdc] sm:$0xf]
      %v1811 = vld [vmem:[%s6 + $0xe0] sm:$0xf]
      %v1812 = vld [vmem:[%s6 + $0xe4] sm:$0xf]
      %v1813 = vld [vmem:[%s6 + $0xe8] sm:$0xf]
      %v1814 = vld [vmem:[%s6 + $0xec] sm:$0xf]
      %v1815 = vld [vmem:[%s6 + $0xf0] sm:$0xf]
      %v1816 = vld [vmem:[%s6 + $0xf4] sm:$0xf]
      %v1817 = vld [vmem:[%s6 + $0xf8] sm:$0xf]
      %v1818 = vld [vmem:[%s6 + $0xfc] sm:$0xf]
      %v1819 = vld [vmem:[%s7] sm:$0x1]
      %v1821 = vlaneseq
      %v1822 = vshrl.u32 %v1821, 7
      %v1823 = vsub.s32 0, %v1822
      %v1824 = vrot.slane %v1819, %v1823
      %v1890 = vunpack.c.l.b16 %v1755
      %v1891 = vunpack.c.l.b16 %v1756
      %v1892 = vunpack.c.l.b16 %v1757
      %v1893 = vunpack.c.l.b16 %v1758
      %v1894 = vunpack.c.l.b16 %v1759
      %v1895 = vunpack.c.l.b16 %v1760
      %v1896 = vunpack.c.l.b16 %v1761
      %v1897 = vunpack.c.l.b16 %v1762
      %v1898 = vunpack.c.l.b16 %v1763
      %v1899 = vunpack.c.l.b16 %v1764
      %v1900 = vunpack.c.l.b16 %v1765
      %v1901 = vunpack.c.l.b16 %v1766
      %v1902 = vunpack.c.l.b16 %v1767
      %v1903 = vunpack.c.l.b16 %v1768
      %v1904 = vunpack.c.l.b16 %v1769
      %v1905 = vunpack.c.l.b16 %v1770
      %v1906 = vunpack.c.l.b16 %v1771
      %v1907 = vunpack.c.l.b16 %v1772
      %v1908 = vunpack.c.l.b16 %v1773
      %v1909 = vunpack.c.l.b16 %v1774
      %v1910 = vunpack.c.l.b16 %v1775
      %v1911 = vunpack.c.l.b16 %v1776
      %v1912 = vunpack.c.l.b16 %v1777
      %v1913 = vunpack.c.l.b16 %v1778
      %v1914 = vunpack.c.l.b16 %v1779
      %v1915 = vunpack.c.l.b16 %v1780
      %v1916 = vunpack.c.l.b16 %v1781
      %v1917 = vunpack.c.l.b16 %v1782
      %v1918 = vunpack.c.l.b16 %v1783
      %v1919 = vunpack.c.l.b16 %v1784
      %v1920 = vunpack.c.l.b16 %v1785
      %v1921 = vunpack.c.l.b16 %v1786
      %v1922 = vunpack.c.l.b16 %v1787
      %v1923 = vunpack.c.l.b16 %v1788
      %v1924 = vunpack.c.l.b16 %v1789
      %v1925 = vunpack.c.l.b16 %v1790
      %v1926 = vunpack.c.l.b16 %v1791
      %v1927 = vunpack.c.l.b16 %v1792
      %v1928 = vunpack.c.l.b16 %v1793
      %v1929 = vunpack.c.l.b16 %v1794
      %v1930 = vunpack.c.l.b16 %v1795
      %v1931 = vunpack.c.l.b16 %v1796
      %v1932 = vunpack.c.l.b16 %v1797
      %v1933 = vunpack.c.l.b16 %v1798
      %v1934 = vunpack.c.l.b16 %v1799
      %v1935 = vunpack.c.l.b16 %v1800
      %v1936 = vunpack.c.l.b16 %v1801
      %v1937 = vunpack.c.l.b16 %v1802
      %v1938 = vunpack.c.l.b16 %v1803
      %v1939 = vunpack.c.l.b16 %v1804
      %v1940 = vunpack.c.l.b16 %v1805
      %v1941 = vunpack.c.l.b16 %v1806
      %v1942 = vunpack.c.l.b16 %v1807
      %v1943 = vunpack.c.l.b16 %v1808
      %v1944 = vunpack.c.l.b16 %v1809
      %v1945 = vunpack.c.l.b16 %v1810
      %v1946 = vunpack.c.l.b16 %v1811
      %v1947 = vunpack.c.l.b16 %v1812
      %v1948 = vunpack.c.l.b16 %v1813
      %v1949 = vunpack.c.l.b16 %v1814
      %v1950 = vunpack.c.l.b16 %v1815
      %v1951 = vunpack.c.l.b16 %v1816
      %v1952 = vunpack.c.l.b16 %v1817
      %v1953 = vunpack.c.l.b16 %v1818
      %v1954 = vpack.c.b16 %v1891, %v1890
      %v1955 = vpack.c.b16 %v1893, %v1892
      %v1956 = vpack.c.b16 %v1895, %v1894
      %v1957 = vpack.c.b16 %v1897, %v1896
      %v1958 = vpack.c.b16 %v1899, %v1898
      %v1959 = vpack.c.b16 %v1901, %v1900
      %v1960 = vpack.c.b16 %v1903, %v1902
      %v1961 = vpack.c.b16 %v1905, %v1904
      %v1962 = vpack.c.b16 %v1907, %v1906
      %v1963 = vpack.c.b16 %v1909, %v1908
      %v1964 = vpack.c.b16 %v1911, %v1910
      %v1965 = vpack.c.b16 %v1913, %v1912
      %v1966 = vpack.c.b16 %v1915, %v1914
      %v1967 = vpack.c.b16 %v1917, %v1916
      %v1968 = vpack.c.b16 %v1919, %v1918
      %v1969 = vpack.c.b16 %v1921, %v1920
      %v1970 = vpack.c.b16 %v1923, %v1922
      %v1971 = vpack.c.b16 %v1925, %v1924
      %v1972 = vpack.c.b16 %v1927, %v1926
      %v1973 = vpack.c.b16 %v1929, %v1928
      %v1974 = vpack.c.b16 %v1931, %v1930
      %v1975 = vpack.c.b16 %v1933, %v1932
      %v1976 = vpack.c.b16 %v1935, %v1934
      %v1977 = vpack.c.b16 %v1937, %v1936
      %v1978 = vpack.c.b16 %v1939, %v1938
      %v1979 = vpack.c.b16 %v1941, %v1940
      %v1980 = vpack.c.b16 %v1943, %v1942
      %v1981 = vpack.c.b16 %v1945, %v1944
      %v1982 = vpack.c.b16 %v1947, %v1946
      %v1983 = vpack.c.b16 %v1949, %v1948
      %v1984 = vpack.c.b16 %v1951, %v1950
      %v1985 = vpack.c.b16 %v1953, %v1952
      %2018 = vmatprep.subr.bf16.mxu0 0
      %2019 = vmatpush1.bf16.msra.mxu0 %v1954
      %2020 = vmatprep.subr.bf16.mxu0 0
      %2021 = vmatpush1.bf16.msra.mxu0 %v1955
      %2022 = vmatprep.subr.bf16.mxu0 0
      %2023 = vmatpush1.bf16.msra.mxu0 %v1956
      %2024 = vmatprep.subr.bf16.mxu0 0
      %2025 = vmatpush1.bf16.msra.mxu0 %v1957
      %2026 = vmatprep.subr.bf16.mxu0 0
      %2027 = vmatpush1.bf16.msra.mxu0 %v1958
      %2028 = vmatprep.subr.bf16.mxu0 0
      %2029 = vmatpush1.bf16.msra.mxu0 %v1959
      %2030 = vmatprep.subr.bf16.mxu0 0
      %2031 = vmatpush1.bf16.msra.mxu0 %v1960
      %2032 = vmatprep.subr.bf16.mxu0 0
      %2033 = vmatpush1.bf16.msra.mxu0 %v1961
      %2034 = vmatprep.subr.bf16.mxu0 0
      %2035 = vmatpush1.bf16.msra.mxu0 %v1962
      %2036 = vmatprep.subr.bf16.mxu0 0
      %2037 = vmatpush1.bf16.msra.mxu0 %v1963
      %2038 = vmatprep.subr.bf16.mxu0 0
      %2039 = vmatpush1.bf16.msra.mxu0 %v1964
      %2040 = vmatprep.subr.bf16.mxu0 0
      %2041 = vmatpush1.bf16.msra.mxu0 %v1965
      %2042 = vmatprep.subr.bf16.mxu0 0
      %2043 = vmatpush1.bf16.msra.mxu0 %v1966
      %2044 = vmatprep.subr.bf16.mxu0 0
      %2045 = vmatpush1.bf16.msra.mxu0 %v1967
      %2046 = vmatprep.subr.bf16.mxu0 0
      %2047 = vmatpush1.bf16.msra.mxu0 %v1968
      %2048 = vmatprep.subr.bf16.mxu0 0
      %2049 = vmatpush1.bf16.msra.mxu0 %v1969
      %2050 = vmatprep.mubr.bf16.mxu0 %v1752
      %2051 = vmatmul.mubr.bf16.gmra.mrb[0].mxu0 %v1751
      %v2052 = vpop.f32.mrb[0].mxu0
      %v2053 = vadd.f32 %v1824, %v2052
      %v2054 = vpop.f32.mrb[0].mxu0
      %v2055 = vpop.f32.mrb[0].mxu0
      %v2056 = vpop.f32.mrb[0].mxu0
      %2057 = vdwg.mxu0
      %2058 = vmatprep.subr.bf16.mxu0 0
      %2059 = vmatpush1.bf16.msra.mxu0 %v1970
      %2060 = vmatprep.subr.bf16.mxu0 0
      %2061 = vmatpush1.bf16.msra.mxu0 %v1971
      %2062 = vmatprep.subr.bf16.mxu0 0
      %2063 = vmatpush1.bf16.msra.mxu0 %v1972
      %2064 = vmatprep.subr.bf16.mxu0 0
      %2065 = vmatpush1.bf16.msra.mxu0 %v1973
      %2066 = vmatprep.subr.bf16.mxu0 0
      %2067 = vmatpush1.bf16.msra.mxu0 %v1974
      %2068 = vmatprep.subr.bf16.mxu0 0
      %2069 = vmatpush1.bf16.msra.mxu0 %v1975
      %2070 = vmatprep.subr.bf16.mxu0 0
      %2071 = vmatpush1.bf16.msra.mxu0 %v1976
      %2072 = vmatprep.subr.bf16.mxu0 0
      %2073 = vmatpush1.bf16.msra.mxu0 %v1977
      %2074 = vmatprep.subr.bf16.mxu0 0
      %2075 = vmatpush1.bf16.msra.mxu0 %v1978
      %2076 = vmatprep.subr.bf16.mxu0 0
      %2077 = vmatpush1.bf16.msra.mxu0 %v1979
      %2078 = vmatprep.subr.bf16.mxu0 0
      %2079 = vmatpush1.bf16.msra.mxu0 %v1980
      %2080 = vmatprep.subr.bf16.mxu0 0
      %2081 = vmatpush1.bf16.msra.mxu0 %v1981
      %2082 = vmatprep.subr.bf16.mxu0 0
      %2083 = vmatpush1.bf16.msra.mxu0 %v1982
      %2084 = vmatprep.subr.bf16.mxu0 0
      %2085 = vmatpush1.bf16.msra.mxu0 %v1983
      %2086 = vmatprep.subr.bf16.mxu0 0
      %2087 = vmatpush1.bf16.msra.mxu0 %v1984
      %2088 = vmatprep.subr.bf16.mxu0 0
      %2089 = vmatpush1.bf16.msra.mxu0 %v1985
      %2090 = vmatprep.mubr.bf16.mxu0 %v1754
      %2091 = vmatmul.mubr.bf16.gmra.mrb[0].mxu0 %v1753
      %v2092 = vpop.f32.mrb[0].mxu0
      %v2093 = vadd.f32 %v2053, %v2092
      %v2094 = vpop.f32.mrb[0].mxu0
      %v2095 = vpop.f32.mrb[0].mxu0
      %v2096 = vpop.f32.mrb[0].mxu0
      %2097 = vdwg.mxu0
      %v2098 = vadd.f32 %v2093, %v675
      %v2099 = vld [vmem:[%s8] sm:$0x1]
      %v2100 = vld [vmem:[%s9] sm:$0x1]
      %v2101 = vsel %vm647, %v2098, 0.0
      %2102 = vadd.xlane.f32.xlu0 %v2101
      %v2103 = vpop.xlane.xlu0 %2102
      %v2104 = vmul.f32 %v2103, %v651
      %v2105 = vsub.f32 %v2098, %v2104
      %v2106 = vmul.f32 %v2105, %v2105
      %v2107 = vsel %vm647, %v2106, 0.0
      %2108 = vadd.xlane.f32.xlu0 %v2107
      %v2109 = vpop.xlane.xlu0 %2108
      %v2110 = vmul.f32 %v2109, %v651
      %v2111 = vadd.f32 %v2110, 1e-12
      %v2112 = vrsqrt.pop %v2111
      %v2113 = vmul.f32 %v2105, %v2112
      %v2115 = vlaneseq
      %v2116 = vshrl.u32 %v2115, 7
      %v2117 = vsub.s32 0, %v2116
      %v2118 = vrot.slane %v2099, %v2117
      %v2120 = vmul.f32 %v2113, %v2118
      %v2122 = vlaneseq
      %v2123 = vshrl.u32 %v2122, 7
      %v2124 = vsub.s32 0, %v2123
      %v2125 = vrot.slane %v2100, %v2124
      %v2127 = vadd.f32 %v2120, %v2125
      %v2128 = vpack.c.bf16 %v2127, %v2127
      %v2129 = vld [vmem:[%s10] sm:$0xf]
      %v2130 = vld [vmem:[%s10 + $0x4] sm:$0xf]
      %v2131 = vld [vmem:[%s10 + $0x8] sm:$0xf]
      %v2132 = vld [vmem:[%s10 + $0xc] sm:$0xf]
      %v2133 = vld [vmem:[%s11] sm:$0x1]
      %v2135 = vlaneseq
      %v2136 = vshrl.u32 %v2135, 7
      %v2137 = vsub.s32 0, %v2136
      %v2138 = vrot.slane %v2133, %v2137
      %v2144 = vunpack.c.l.b16 %v2129
      %v2145 = vunpack.c.l.b16 %v2130
      %v2146 = vunpack.c.l.b16 %v2131
      %v2147 = vunpack.c.l.b16 %v2132
      %v2148 = vpack.c.b16 %v2145, %v2144
      %v2149 = vpack.c.b16 %v2147, %v2146
      %v2153 = vsel %vm647, %v2128, 0
      %2155 = vmatprep.subr.bf16.mxu0 0
      %2156 = vmatpush1.bf16.msra.mxu0 %v2148
      %2157 = vmatprep.subr.bf16.mxu0 0
      %2158 = vmatpush1.bf16.msra.mxu0 %v2149
      %2159 = vmatprep.subr.bf16.mxu0 0
      %2160 = vmatpush1.bf16.msra.mxu0 0
      %2161 = vmatprep.subr.bf16.mxu0 0
      %2162 = vmatpush1.bf16.msra.mxu0 0
      %2163 = vmatprep.subr.bf16.mxu0 0
      %2164 = vmatpush1.bf16.msra.mxu0 0
      %2165 = vmatprep.subr.bf16.mxu0 0
      %2166 = vmatpush1.bf16.msra.mxu0 0
      %2167 = vmatprep.subr.bf16.mxu0 0
      %2168 = vmatpush1.bf16.msra.mxu0 0
      %2169 = vmatprep.subr.bf16.mxu0 0
      %2170 = vmatpush1.bf16.msra.mxu0 0
      %2171 = vmatprep.subr.bf16.mxu0 0
      %2172 = vmatpush1.bf16.msra.mxu0 0
      %2173 = vmatprep.subr.bf16.mxu0 0
      %2174 = vmatpush1.bf16.msra.mxu0 0
      %2175 = vmatprep.subr.bf16.mxu0 0
      %2176 = vmatpush1.bf16.msra.mxu0 0
      %2177 = vmatprep.subr.bf16.mxu0 0
      %2178 = vmatpush1.bf16.msra.mxu0 0
      %2179 = vmatprep.subr.bf16.mxu0 0
      %2180 = vmatpush1.bf16.msra.mxu0 0
      %2181 = vmatprep.subr.bf16.mxu0 0
      %2182 = vmatpush1.bf16.msra.mxu0 0
      %2183 = vmatprep.subr.bf16.mxu0 0
      %2184 = vmatpush1.bf16.msra.mxu0 0
      %2185 = vmatprep.subr.bf16.mxu0 0
      %2186 = vmatpush1.bf16.msra.mxu0 0
      %2187 = vmatprep.mubr.bf16.mxu0 0
      %2188 = vmatmul.mubr.bf16.gmra.mrb[0].mxu0 %v2153
      %v2189 = vpop.f32.mrb[0].mxu0
      %v2190 = vadd.f32 %v2138, %v2189
      %v2191 = vpop.f32.mrb[0].mxu0
      %v2192 = vpop.f32.mrb[0].mxu0
      %v2193 = vpop.f32.mrb[0].mxu0
      %2194 = vdwg.mxu0
      %v2195 = vmul.f32 %v2190, 0.5
      %v2196 = vmul.f32 %v2190, 0.044715
      %v2197 = vmul.f32 %v2196, %v2190
      %v2198 = vmul.f32 %v2197, %v2190
      %v2199 = vadd.f32 %v2190, %v2198
      %v2200 = vmul.f32 %v2199, 0.7978846
      %v2201 = vtanh.pop %v2200
      %v2202 = vadd.f32 %v2201, 1.0
      %v2203 = vmul.f32 %v2195, %v2202
      %v2204 = vpack.c.bf16 %v2203, %v2203
      %v2205 = vld [vmem:[%s12] sm:$0xf]
      %v2206 = vld [vmem:[%s12 + $0x4] sm:$0xf]
      %v2207 = vld [vmem:[%s12 + $0x8] sm:$0xf]
      %v2208 = vld [vmem:[%s12 + $0xc] sm:$0xf]
      %v2209 = vld [vmem:[%s12 + $0x10] sm:$0xf]
      %v2210 = vld [vmem:[%s12 + $0x14] sm:$0xf]
      %v2211 = vld [vmem:[%s12 + $0x18] sm:$0xf]
      %v2212 = vld [vmem:[%s12 + $0x1c] sm:$0xf]
      %v2213 = vld [vmem:[%s12 + $0x20] sm:$0xf]
      %v2214 = vld [vmem:[%s12 + $0x24] sm:$0xf]
      %v2215 = vld [vmem:[%s12 + $0x28] sm:$0xf]
      %v2216 = vld [vmem:[%s12 + $0x2c] sm:$0xf]
      %v2217 = vld [vmem:[%s12 + $0x30] sm:$0xf]
      %v2218 = vld [vmem:[%s12 + $0x34] sm:$0xf]
      %v2219 = vld [vmem:[%s12 + $0x38] sm:$0xf]
      %v2220 = vld [vmem:[%s12 + $0x3c] sm:$0xf]
      %v2221 = vld [vmem:[%s13] sm:$0x1]
      %v2223 = vlaneseq
      %v2224 = vshrl.u32 %v2223, 7
      %v2225 = vsub.s32 0, %v2224
      %v2226 = vrot.slane %v2221, %v2225
      %v2244 = vunpack.c.l.b16 %v2205
      %v2245 = vunpack.c.l.b16 %v2206
      %v2246 = vunpack.c.l.b16 %v2207
      %v2247 = vunpack.c.l.b16 %v2208
      %v2248 = vunpack.c.l.b16 %v2209
      %v2249 = vunpack.c.l.b16 %v2210
      %v2250 = vunpack.c.l.b16 %v2211
      %v2251 = vunpack.c.l.b16 %v2212
      %v2252 = vunpack.c.l.b16 %v2213
      %v2253 = vunpack.c.l.b16 %v2214
      %v2254 = vunpack.c.l.b16 %v2215
      %v2255 = vunpack.c.l.b16 %v2216
      %v2256 = vunpack.c.l.b16 %v2217
      %v2257 = vunpack.c.l.b16 %v2218
      %v2258 = vunpack.c.l.b16 %v2219
      %v2259 = vunpack.c.l.b16 %v2220
      %v2260 = vpack.c.b16 %v2245, %v2244
      %v2261 = vpack.c.b16 %v2247, %v2246
      %v2262 = vpack.c.b16 %v2249, %v2248
      %v2263 = vpack.c.b16 %v2251, %v2250
      %v2264 = vpack.c.b16 %v2253, %v2252
      %v2265 = vpack.c.b16 %v2255, %v2254
      %v2266 = vpack.c.b16 %v2257, %v2256
      %v2267 = vpack.c.b16 %v2259, %v2258
      %2276 = vmatprep.subr.bf16.mxu0 0
      %2277 = vmatpush1.bf16.msra.mxu0 %v2260
      %2278 = vmatprep.subr.bf16.mxu0 0
      %2279 = vmatpush1.bf16.msra.mxu0 %v2261
      %2280 = vmatprep.subr.bf16.mxu0 0
      %2281 = vmatpush1.bf16.msra.mxu0 %v2262
      %2282 = vmatprep.subr.bf16.mxu0 0
      %2283 = vmatpush1.bf16.msra.mxu0 %v2263
      %2284 = vmatprep.subr.bf16.mxu0 0
      %2285 = vmatpush1.bf16.msra.mxu0 %v2264
      %2286 = vmatprep.subr.bf16.mxu0 0
      %2287 = vmatpush1.bf16.msra.mxu0 %v2265
      %2288 = vmatprep.subr.bf16.mxu0 0
      %2289 = vmatpush1.bf16.msra.mxu0 %v2266
      %2290 = vmatprep.subr.bf16.mxu0 0
      %2291 = vmatpush1.bf16.msra.mxu0 %v2267
      %2292 = vmatprep.subr.bf16.mxu0 0
      %2293 = vmatpush1.bf16.msra.mxu0 0
      %2294 = vmatprep.subr.bf16.mxu0 0
      %2295 = vmatpush1.bf16.msra.mxu0 0
      %2296 = vmatprep.subr.bf16.mxu0 0
      %2297 = vmatpush1.bf16.msra.mxu0 0
      %2298 = vmatprep.subr.bf16.mxu0 0
      %2299 = vmatpush1.bf16.msra.mxu0 0
      %2300 = vmatprep.subr.bf16.mxu0 0
      %2301 = vmatpush1.bf16.msra.mxu0 0
      %2302 = vmatprep.subr.bf16.mxu0 0
      %2303 = vmatpush1.bf16.msra.mxu0 0
      %2304 = vmatprep.subr.bf16.mxu0 0
      %2305 = vmatpush1.bf16.msra.mxu0 0
      %2306 = vmatprep.subr.bf16.mxu0 0
      %2307 = vmatpush1.bf16.msra.mxu0 0
      %2308 = vmatprep.mubr.bf16.mxu0 0
      %2309 = vmatmul.mubr.bf16.gmra.mrb[0].mxu0 %v2204
      %v2310 = vpop.f32.mrb[0].mxu0
      %v2311 = vadd.f32 %v2226, %v2310
      %v2312 = vpop.f32.mrb[0].mxu0
      %v2313 = vpop.f32.mrb[0].mxu0
      %v2314 = vpop.f32.mrb[0].mxu0
      %2315 = vdwg.mxu0
      %v2316 = vadd.f32 %v2311, %v2127
      %v2317 = vld [vmem:[%s14] sm:$0x1]
      %v2318 = vld [vmem:[%s15] sm:$0x1]
      %v2319 = vsel %vm647, %v2316, 0.0
      %2320 = vadd.xlane.f32.xlu0 %v2319
      %v2321 = vpop.xlane.xlu0 %2320
      %v2322 = vmul.f32 %v2321, %v651
      %v2323 = vsub.f32 %v2316, %v2322
      %v2324 = vmul.f32 %v2323, %v2323
      %v2325 = vsel %vm647, %v2324, 0.0
      %2326 = vadd.xlane.f32.xlu0 %v2325
      %v2327 = vpop.xlane.xlu0 %2326
      %v2328 = vmul.f32 %v2327, %v651
      %v2329 = vadd.f32 %v2328, 1e-12
      %v2330 = vrsqrt.pop %v2329
      %v2331 = vmul.f32 %v2323, %v2330
      %v2333 = vlaneseq
      %v2334 = vshrl.u32 %v2333, 7
      %v2335 = vsub.s32 0, %v2334
      %v2336 = vrot.slane %v2317, %v2335
      %v2338 = vmul.f32 %v2331, %v2336
      %v2340 = vlaneseq
      %v2341 = vshrl.u32 %v2340, 7
      %v2342 = vsub.s32 0, %v2341
      %v2343 = vrot.slane %v2318, %v2342
      %v2345 = vadd.f32 %v2338, %v2343
      %v2346 = vpack.c.bf16 %v2345, %v2345
      %s2347 = scalar_lea.vmem %s4, 192
      %v2348 = vld [vmem:[%s2347] sm:$0xff]
      %v2349 = vld [vmem:[%s2347 + $0x8] sm:$0xff]
      %v2350 = vld [vmem:[%s2347 + $0x10] sm:$0xff]
      %v2351 = vld [vmem:[%s2347 + $0x18] sm:$0xff]
      %v2352 = vld [vmem:[%s2347 + $0x20] sm:$0xff]
      %v2353 = vld [vmem:[%s2347 + $0x28] sm:$0xff]
      %v2354 = vld [vmem:[%s2347 + $0x30] sm:$0xff]
      %v2355 = vld [vmem:[%s2347 + $0x38] sm:$0xff]
      %v2356 = vld [vmem:[%s2347 + $0x40] sm:$0xff]
      %v2357 = vld [vmem:[%s2347 + $0x48] sm:$0xff]
      %v2358 = vld [vmem:[%s2347 + $0x50] sm:$0xff]
      %v2359 = vld [vmem:[%s2347 + $0x58] sm:$0xff]
      %v2360 = vld [vmem:[%s2347 + $0x60] sm:$0xff]
      %v2361 = vld [vmem:[%s2347 + $0x68] sm:$0xff]
      %v2362 = vld [vmem:[%s2347 + $0x70] sm:$0xff]
      %v2363 = vld [vmem:[%s2347 + $0x78] sm:$0xff]
      %v2364 = vld [vmem:[%s2347 + $0x80] sm:$0xff]
      %v2365 = vld [vmem:[%s2347 + $0x88] sm:$0xff]
      %v2366 = vld [vmem:[%s2347 + $0x90] sm:$0xff]
      %v2367 = vld [vmem:[%s2347 + $0x98] sm:$0xff]
      %v2368 = vld [vmem:[%s2347 + $0xa0] sm:$0xff]
      %v2369 = vld [vmem:[%s2347 + $0xa8] sm:$0xff]
      %v2370 = vld [vmem:[%s2347 + $0xb0] sm:$0xff]
      %v2371 = vld [vmem:[%s2347 + $0xb8] sm:$0xff]
      %s2372 = scalar_lea.vmem %s5, 12
      %v2373 = vld [vmem:[%s2372] sm:$0xff]
      %v2374 = vld [vmem:[%s2372 + $0x8] sm:$0xf]
      %v2377 = vlaneseq
      %v2378 = vshrl.u32 %v2377, 7
      %v2379 = vsub.s32 0, %v2378
      %v2380 = vrot.slane %v2373, %v2379
      %v2381 = vlaneseq
      %v2382 = vshrl.u32 %v2381, 7
      %v2383 = vsub.s32 1, %v2382
      %v2384 = vrot.slane %v2373, %v2383
      %v2385 = vlaneseq
      %v2386 = vshrl.u32 %v2385, 7
      %v2387 = vsub.s32 2, %v2386
      %v2388 = vrot.slane %v2373, %v2387
      %v2389 = vlaneseq
      %v2390 = vshrl.u32 %v2389, 7
      %v2391 = vsub.s32 3, %v2390
      %v2392 = vrot.slane %v2373, %v2391
      %v2393 = vlaneseq
      %v2394 = vshrl.u32 %v2393, 7
      %v2395 = vsub.s32 4, %v2394
      %v2396 = vrot.slane %v2373, %v2395
      %v2397 = vlaneseq
      %v2398 = vshrl.u32 %v2397, 7
      %v2399 = vsub.s32 5, %v2398
      %v2400 = vrot.slane %v2373, %v2399
      %v2401 = vlaneseq
      %v2402 = vshrl.u32 %v2401, 7
      %v2403 = vsub.s32 6, %v2402
      %v2404 = vrot.slane %v2373, %v2403
      %v2405 = vlaneseq
      %v2406 = vshrl.u32 %v2405, 7
      %v2407 = vsub.s32 7, %v2406
      %v2408 = vrot.slane %v2373, %v2407
      %v2409 = vlaneseq
      %v2410 = vshrl.u32 %v2409, 7
      %v2411 = vsub.s32 0, %v2410
      %v2412 = vrot.slane %v2374, %v2411
      %v2413 = vlaneseq
      %v2414 = vshrl.u32 %v2413, 7
      %v2415 = vsub.s32 1, %v2414
      %v2416 = vrot.slane %v2374, %v2415
      %v2417 = vlaneseq
      %v2418 = vshrl.u32 %v2417, 7
      %v2419 = vsub.s32 2, %v2418
      %v2420 = vrot.slane %v2374, %v2419
      %v2421 = vlaneseq
      %v2422 = vshrl.u32 %v2421, 7
      %v2423 = vsub.s32 3, %v2422
      %v2424 = vrot.slane %v2374, %v2423
      %v2461 = vunpack.c.l.b16 %v2348
      %v2462 = vunpack.c.h.b16 %v2348
      %v2463 = vunpack.c.l.b16 %v2349
      %v2464 = vunpack.c.h.b16 %v2349
      %v2465 = vunpack.c.l.b16 %v2350
      %v2466 = vunpack.c.h.b16 %v2350
      %v2467 = vunpack.c.l.b16 %v2351
      %v2468 = vunpack.c.h.b16 %v2351
      %v2469 = vunpack.c.l.b16 %v2352
      %v2470 = vunpack.c.h.b16 %v2352
      %v2471 = vunpack.c.l.b16 %v2353
      %v2472 = vunpack.c.h.b16 %v2353
      %v2473 = vunpack.c.l.b16 %v2354
      %v2474 = vunpack.c.h.b16 %v2354
      %v2475 = vunpack.c.l.b16 %v2355
      %v2476 = vunpack.c.h.b16 %v2355
      %v2477 = vunpack.c.l.b16 %v2356
      %v2478 = vunpack.c.h.b16 %v2356
      %v2479 = vunpack.c.l.b16 %v2357
      %v2480 = vunpack.c.h.b16 %v2357
      %v2481 = vunpack.c.l.b16 %v2358
      %v2482 = vunpack.c.h.b16 %v2358
      %v2483 = vunpack.c.l.b16 %v2359
      %v2484 = vunpack.c.h.b16 %v2359
      %v2485 = vunpack.c.l.b16 %v2360
      %v2486 = vunpack.c.h.b16 %v2360
      %v2487 = vunpack.c.l.b16 %v2361
      %v2488 = vunpack.c.h.b16 %v2361
      %v2489 = vunpack.c.l.b16 %v2362
      %v2490 = vunpack.c.h.b16 %v2362
      %v2491 = vunpack.c.l.b16 %v2363
      %v2492 = vunpack.c.h.b16 %v2363
      %v2493 = vunpack.c.l.b16 %v2364
      %v2494 = vunpack.c.h.b16 %v2364
      %v2495 = vunpack.c.l.b16 %v2365
      %v2496 = vunpack.c.h.b16 %v2365
      %v2497 = vunpack.c.l.b16 %v2366
      %v2498 = vunpack.c.h.b16 %v2366
      %v2499 = vunpack.c.l.b16 %v2367
      %v2500 = vunpack.c.h.b16 %v2367
      %v2501 = vunpack.c.l.b16 %v2368
      %v2502 = vunpack.c.h.b16 %v2368
      %v2503 = vunpack.c.l.b16 %v2369
      %v2504 = vunpack.c.h.b16 %v2369
      %v2505 = vunpack.c.l.b16 %v2370
      %v2506 = vunpack.c.h.b16 %v2370
      %v2507 = vunpack.c.l.b16 %v2371
      %v2508 = vunpack.c.h.b16 %v2371
      %v2509 = vpack.c.b16 %v2473, %v2461
      %v2510 = vpack.c.b16 %v2474, %v2462
      %v2511 = vpack.c.b16 %v2475, %v2463
      %v2512 = vpack.c.b16 %v2476, %v2464
      %v2513 = vpack.c.b16 %v2477, %v2465
      %v2514 = vpack.c.b16 %v2478, %v2466
      %v2515 = vpack.c.b16 %v2479, %v2467
      %v2516 = vpack.c.b16 %v2480, %v2468
      %v2517 = vpack.c.b16 %v2481, %v2469
      %v2518 = vpack.c.b16 %v2482, %v2470
      %v2519 = vpack.c.b16 %v2483, %v2471
      %v2520 = vpack.c.b16 %v2484, %v2472
      %v2521 = vpack.c.b16 %v2497, %v2485
      %v2522 = vpack.c.b16 %v2498, %v2486
      %v2523 = vpack.c.b16 %v2499, %v2487
      %v2524 = vpack.c.b16 %v2500, %v2488
      %v2525 = vpack.c.b16 %v2501, %v2489
      %v2526 = vpack.c.b16 %v2502, %v2490
      %v2527 = vpack.c.b16 %v2503, %v2491
      %v2528 = vpack.c.b16 %v2504, %v2492
      %v2529 = vpack.c.b16 %v2505, %v2493
      %v2530 = vpack.c.b16 %v2506, %v2494
      %v2531 = vpack.c.b16 %v2507, %v2495
      %v2532 = vpack.c.b16 %v2508, %v2496
      %v2558 = vsel %vm647, %v2346, 0
      %2560 = vmatprep.subr.bf16.mxu0 %v2510
      %2561 = vmatpush1.bf16.msra.mxu0 %v2509
      %2562 = vmatprep.subr.bf16.mxu0 %v2522
      %2563 = vmatpush1.bf16.msra.mxu0 %v2521
      %2564 = vmatprep.subr.bf16.mxu0 0
      %2565 = vmatpush1.bf16.msra.mxu0 0
      %2566 = vmatprep.subr.bf16.mxu0 0
      %2567 = vmatpush1.bf16.msra.mxu0 0
      %2568 = vmatprep.subr.bf16.mxu0 0
      %2569 = vmatpush1.bf16.msra.mxu0 0
      %2570 = vmatprep.subr.bf16.mxu0 0
      %2571 = vmatpush1.bf16.msra.mxu0 0
      %2572 = vmatprep.subr.bf16.mxu0 0
      %2573 = vmatpush1.bf16.msra.mxu0 0
      %2574 = vmatprep.subr.bf16.mxu0 0
      %2575 = vmatpush1.bf16.msra.mxu0 0
      %2576 = vmatprep.subr.bf16.mxu0 0
      %2577 = vmatpush1.bf16.msra.mxu0 0
      %2578 = vmatprep.subr.bf16.mxu0 0
      %2579 = vmatpush1.bf16.msra.mxu0 0
      %2580 = vmatprep.subr.bf16.mxu0 0
      %2581 = vmatpush1.bf16.msra.mxu0 0
      %2582 = vmatprep.subr.bf16.mxu0 0
      %2583 = vmatpush1.bf16.msra.mxu0 0
      %2584 = vmatprep.subr.bf16.mxu0 0
      %2585 = vmatpush1.bf16.msra.mxu0 0
      %2586 = vmatprep.subr.bf16.mxu0 0
      %2587 = vmatpush1.bf16.msra.mxu0 0
      %2588 = vmatprep.subr.bf16.mxu0 0
      %2589 = vmatpush1.bf16.msra.mxu0 0
      %2590 = vmatprep.subr.bf16.mxu0 0
      %2591 = vmatpush1.bf16.msra.mxu0 0
      %2592 = vmatprep.mubr.bf16.mxu0 0
      %2593 = vmatmul.mubr.bf16.gmra.mrb[0].mxu0 %v2558
      %v2594 = vpop.f32.mrb[0].mxu0
      %v2595 = vadd.f32 %v2380, %v2594
      %v2596 = vpop.f32.mrb[0].mxu0
      %v2597 = vadd.f32 %v2384, %v2596
      %v2598 = vpop.f32.mrb[0].mxu0
      %v2599 = vpop.f32.mrb[0].mxu0
      %2600 = vdwg.mxu0
      %2601 = vmatprep.subr.bf16.mxu0 %v2512
      %2602 = vmatpush1.bf16.msra.mxu0 %v2511
      %2603 = vmatprep.subr.bf16.mxu0 %v2524
      %2604 = vmatpush1.bf16.msra.mxu0 %v2523
      %2605 = vmatprep.subr.bf16.mxu0 0
      %2606 = vmatpush1.bf16.msra.mxu0 0
      %2607 = vmatprep.subr.bf16.mxu0 0
      %2608 = vmatpush1.bf16.msra.mxu0 0
      %2609 = vmatprep.subr.bf16.mxu0 0
      %2610 = vmatpush1.bf16.msra.mxu0 0
      %2611 = vmatprep.subr.bf16.mxu0 0
      %2612 = vmatpush1.bf16.msra.mxu0 0
      %2613 = vmatprep.subr.bf16.mxu0 0
      %2614 = vmatpush1.bf16.msra.mxu0 0
      %2615 = vmatprep.subr.bf16.mxu0 0
      %2616 = vmatpush1.bf16.msra.mxu0 0
      %2617 = vmatprep.subr.bf16.mxu0 0
      %2618 = vmatpush1.bf16.msra.mxu0 0
      %2619 = vmatprep.subr.bf16.mxu0 0
      %2620 = vmatpush1.bf16.msra.mxu0 0
      %2621 = vmatprep.subr.bf16.mxu0 0
      %2622 = vmatpush1.bf16.msra.mxu0 0
      %2623 = vmatprep.subr.bf16.mxu0 0
      %2624 = vmatpush1.bf16.msra.mxu0 0
      %2625 = vmatprep.subr.bf16.mxu0 0
      %2626 = vmatpush1.bf16.msra.mxu0 0
      %2627 = vmatprep.subr.bf16.mxu0 0
      %2628 = vmatpush1.bf16.msra.mxu0 0
      %2629 = vmatprep.subr.bf16.mxu0 0
      %2630 = vmatpush1.bf16.msra.mxu0 0
      %2631 = vmatprep.subr.bf16.mxu0 0
      %2632 = vmatpush1.bf16.msra.mxu0 0
      %2633 = vmatprep.mubr.bf16.mxu0 0
      %2634 = vmatmul.mubr.bf16.gmra.mrb[0].mxu0 %v2558
      %v2635 = vpop.f32.mrb[0].mxu0
      %v2636 = vadd.f32 %v2388, %v2635
      %v2637 = vpop.f32.mrb[0].mxu0
      %v2638 = vadd.f32 %v2392, %v2637
      %v2639 = vpop.f32.mrb[0].mxu0
      %v2640 = vpop.f32.mrb[0].mxu0
      %2641 = vdwg.mxu0
      %2642 = vmatprep.subr.bf16.mxu0 %v2514
      %2643 = vmatpush1.bf16.msra.mxu0 %v2513
      %2644 = vmatprep.subr.bf16.mxu0 %v2526
      %2645 = vmatpush1.bf16.msra.mxu0 %v2525
      %2646 = vmatprep.subr.bf16.mxu0 0
      %2647 = vmatpush1.bf16.msra.mxu0 0
      %2648 = vmatprep.subr.bf16.mxu0 0
      %2649 = vmatpush1.bf16.msra.mxu0 0
      %2650 = vmatprep.subr.bf16.mxu0 0
      %2651 = vmatpush1.bf16.msra.mxu0 0
      %2652 = vmatprep.subr.bf16.mxu0 0
      %2653 = vmatpush1.bf16.msra.mxu0 0
      %2654 = vmatprep.subr.bf16.mxu0 0
      %2655 = vmatpush1.bf16.msra.mxu0 0
      %2656 = vmatprep.subr.bf16.mxu0 0
      %2657 = vmatpush1.bf16.msra.mxu0 0
      %2658 = vmatprep.subr.bf16.mxu0 0
      %2659 = vmatpush1.bf16.msra.mxu0 0
      %2660 = vmatprep.subr.bf16.mxu0 0
      %2661 = vmatpush1.bf16.msra.mxu0 0
      %2662 = vmatprep.subr.bf16.mxu0 0
      %2663 = vmatpush1.bf16.msra.mxu0 0
      %2664 = vmatprep.subr.bf16.mxu0 0
      %2665 = vmatpush1.bf16.msra.mxu0 0
      %2666 = vmatprep.subr.bf16.mxu0 0
      %2667 = vmatpush1.bf16.msra.mxu0 0
      %2668 = vmatprep.subr.bf16.mxu0 0
      %2669 = vmatpush1.bf16.msra.mxu0 0
      %2670 = vmatprep.subr.bf16.mxu0 0
      %2671 = vmatpush1.bf16.msra.mxu0 0
      %2672 = vmatprep.subr.bf16.mxu0 0
      %2673 = vmatpush1.bf16.msra.mxu0 0
      %2674 = vmatprep.mubr.bf16.mxu0 0
      %2675 = vmatmul.mubr.bf16.gmra.mrb[0].mxu0 %v2558
      %v2676 = vpop.f32.mrb[0].mxu0
      %v2677 = vadd.f32 %v2396, %v2676
      %v2678 = vpop.f32.mrb[0].mxu0
      %v2679 = vadd.f32 %v2400, %v2678
      %v2680 = vpop.f32.mrb[0].mxu0
      %v2681 = vpop.f32.mrb[0].mxu0
      %2682 = vdwg.mxu0
      %2683 = vmatprep.subr.bf16.mxu0 %v2516
      %2684 = vmatpush1.bf16.msra.mxu0 %v2515
      %2685 = vmatprep.subr.bf16.mxu0 %v2528
      %2686 = vmatpush1.bf16.msra.mxu0 %v2527
      %2687 = vmatprep.subr.bf16.mxu0 0
      %2688 = vmatpush1.bf16.msra.mxu0 0
      %2689 = vmatprep.subr.bf16.mxu0 0
      %2690 = vmatpush1.bf16.msra.mxu0 0
      %2691 = vmatprep.subr.bf16.mxu0 0
      %2692 = vmatpush1.bf16.msra.mxu0 0
      %2693 = vmatprep.subr.bf16.mxu0 0
      %2694 = vmatpush1.bf16.msra.mxu0 0
      %2695 = vmatprep.subr.bf16.mxu0 0
      %2696 = vmatpush1.bf16.msra.mxu0 0
      %2697 = vmatprep.subr.bf16.mxu0 0
      %2698 = vmatpush1.bf16.msra.mxu0 0
      %2699 = vmatprep.subr.bf16.mxu0 0
      %2700 = vmatpush1.bf16.msra.mxu0 0
      %2701 = vmatprep.subr.bf16.mxu0 0
      %2702 = vmatpush1.bf16.msra.mxu0 0
      %2703 = vmatprep.subr.bf16.mxu0 0
      %2704 = vmatpush1.bf16.msra.mxu0 0
      %2705 = vmatprep.subr.bf16.mxu0 0
      %2706 = vmatpush1.bf16.msra.mxu0 0
      %2707 = vmatprep.subr.bf16.mxu0 0
      %2708 = vmatpush1.bf16.msra.mxu0 0
      %2709 = vmatprep.subr.bf16.mxu0 0
      %2710 = vmatpush1.bf16.msra.mxu0 0
      %2711 = vmatprep.subr.bf16.mxu0 0
      %2712 = vmatpush1.bf16.msra.mxu0 0
      %2713 = vmatprep.subr.bf16.mxu0 0
      %2714 = vmatpush1.bf16.msra.mxu0 0
      %2715 = vmatprep.mubr.bf16.mxu0 0
      %2716 = vmatmul.mubr.bf16.gmra.mrb[0].mxu0 %v2558
      %v2717 = vpop.f32.mrb[0].mxu0
      %v2718 = vadd.f32 %v2404, %v2717
      %v2719 = vpop.f32.mrb[0].mxu0
      %v2720 = vadd.f32 %v2408, %v2719
      %v2721 = vpop.f32.mrb[0].mxu0
      %v2722 = vpop.f32.mrb[0].mxu0
      %2723 = vdwg.mxu0
      %2724 = vmatprep.subr.bf16.mxu0 %v2518
      %2725 = vmatpush1.bf16.msra.mxu0 %v2517
      %2726 = vmatprep.subr.bf16.mxu0 %v2530
      %2727 = vmatpush1.bf16.msra.mxu0 %v2529
      %2728 = vmatprep.subr.bf16.mxu0 0
      %2729 = vmatpush1.bf16.msra.mxu0 0
      %2730 = vmatprep.subr.bf16.mxu0 0
      %2731 = vmatpush1.bf16.msra.mxu0 0
      %2732 = vmatprep.subr.bf16.mxu0 0
      %2733 = vmatpush1.bf16.msra.mxu0 0
      %2734 = vmatprep.subr.bf16.mxu0 0
      %2735 = vmatpush1.bf16.msra.mxu0 0
      %2736 = vmatprep.subr.bf16.mxu0 0
      %2737 = vmatpush1.bf16.msra.mxu0 0
      %2738 = vmatprep.subr.bf16.mxu0 0
      %2739 = vmatpush1.bf16.msra.mxu0 0
      %2740 = vmatprep.subr.bf16.mxu0 0
      %2741 = vmatpush1.bf16.msra.mxu0 0
      %2742 = vmatprep.subr.bf16.mxu0 0
      %2743 = vmatpush1.bf16.msra.mxu0 0
      %2744 = vmatprep.subr.bf16.mxu0 0
      %2745 = vmatpush1.bf16.msra.mxu0 0
      %2746 = vmatprep.subr.bf16.mxu0 0
      %2747 = vmatpush1.bf16.msra.mxu0 0
      %2748 = vmatprep.subr.bf16.mxu0 0
      %2749 = vmatpush1.bf16.msra.mxu0 0
      %2750 = vmatprep.subr.bf16.mxu0 0
      %2751 = vmatpush1.bf16.msra.mxu0 0
      %2752 = vmatprep.subr.bf16.mxu0 0
      %2753 = vmatpush1.bf16.msra.mxu0 0
      %2754 = vmatprep.subr.bf16.mxu0 0
      %2755 = vmatpush1.bf16.msra.mxu0 0
      %2756 = vmatprep.mubr.bf16.mxu0 0
      %2757 = vmatmul.mubr.bf16.gmra.mrb[0].mxu0 %v2558
      %v2758 = vpop.f32.mrb[0].mxu0
      %v2759 = vadd.f32 %v2412, %v2758
      %v2760 = vpop.f32.mrb[0].mxu0
      %v2761 = vadd.f32 %v2416, %v2760
      %v2762 = vpop.f32.mrb[0].mxu0
      %v2763 = vpop.f32.mrb[0].mxu0
      %2764 = vdwg.mxu0
      %2765 = vmatprep.subr.bf16.mxu0 %v2520
      %2766 = vmatpush1.bf16.msra.mxu0 %v2519
      %2767 = vmatprep.subr.bf16.mxu0 %v2532
      %2768 = vmatpush1.bf16.msra.mxu0 %v2531
      %2769 = vmatprep.subr.bf16.mxu0 0
      %2770 = vmatpush1.bf16.msra.mxu0 0
      %2771 = vmatprep.subr.bf16.mxu0 0
      %2772 = vmatpush1.bf16.msra.mxu0 0
      %2773 = vmatprep.subr.bf16.mxu0 0
      %2774 = vmatpush1.bf16.msra.mxu0 0
      %2775 = vmatprep.subr.bf16.mxu0 0
      %2776 = vmatpush1.bf16.msra.mxu0 0
      %2777 = vmatprep.subr.bf16.mxu0 0
      %2778 = vmatpush1.bf16.msra.mxu0 0
      %2779 = vmatprep.subr.bf16.mxu0 0
      %2780 = vmatpush1.bf16.msra.mxu0 0
      %2781 = vmatprep.subr.bf16.mxu0 0
      %2782 = vmatpush1.bf16.msra.mxu0 0
      %2783 = vmatprep.subr.bf16.mxu0 0
      %2784 = vmatpush1.bf16.msra.mxu0 0
      %2785 = vmatprep.subr.bf16.mxu0 0
      %2786 = vmatpush1.bf16.msra.mxu0 0
      %2787 = vmatprep.subr.bf16.mxu0 0
      %2788 = vmatpush1.bf16.msra.mxu0 0
      %2789 = vmatprep.subr.bf16.mxu0 0
      %2790 = vmatpush1.bf16.msra.mxu0 0
      %2791 = vmatprep.subr.bf16.mxu0 0
      %2792 = vmatpush1.bf16.msra.mxu0 0
      %2793 = vmatprep.subr.bf16.mxu0 0
      %2794 = vmatpush1.bf16.msra.mxu0 0
      %2795 = vmatprep.subr.bf16.mxu0 0
      %2796 = vmatpush1.bf16.msra.mxu0 0
      %2797 = vmatprep.mubr.bf16.mxu0 0
      %2798 = vmatmul.mubr.bf16.gmra.mrb[0].mxu0 %v2558
      %v2799 = vpop.f32.mrb[0].mxu0
      %v2800 = vadd.f32 %v2420, %v2799
      %v2801 = vpop.f32.mrb[0].mxu0
      %v2802 = vadd.f32 %v2424, %v2801
      %v2803 = vpop.f32.mrb[0].mxu0
      %v2804 = vpop.f32.mrb[0].mxu0
      %2805 = vdwg.mxu0
      %2806 = vmatprep.subr.mxu0 0.0
      %2807 = vmatpush1.xpose.msra.mxu0 %v2677
      %2808 = vmatprep.subr.mxu0 0.0
      %2809 = vmatpush1.xpose.msra.mxu0 0.0
      %2810 = vmatprep.subr.mxu0 0.0
      %2811 = vmatpush1.xpose.msra.mxu0 0.0
      %2812 = vmatprep.subr.mxu0 0.0
      %2813 = vmatpush1.xpose.msra.mxu0 0.0
      %2814 = vmatprep.subr.mxu0 0.0
      %2815 = vmatpush1.xpose.msra.mxu0 0.0
      %2816 = vmatprep.subr.mxu0 0.0
      %2817 = vmatpush1.xpose.msra.mxu0 0.0
      %2818 = vmatprep.subr.mxu0 0.0
      %2819 = vmatpush1.xpose.msra.mxu0 0.0
      %2820 = vmatprep.subr.mxu0 0.0
      %2821 = vmatpush1.xpose.msra.mxu0 0.0
      %2822 = vmatprep.subr.mxu0 0.0
      %2823 = vmatpush1.xpose.msra.mxu0 0.0
      %2824 = vmatprep.subr.mxu0 0.0
      %2825 = vmatpush1.xpose.msra.mxu0 0.0
      %2826 = vmatprep.subr.mxu0 0.0
      %2827 = vmatpush1.xpose.msra.mxu0 0.0
      %2828 = vmatprep.subr.mxu0 0.0
      %2829 = vmatpush1.xpose.msra.mxu0 0.0
      %2830 = vmatprep.subr.mxu0 0.0
      %2831 = vmatpush1.xpose.msra.mxu0 0.0
      %2832 = vmatprep.subr.mxu0 0.0
      %2833 = vmatpush1.xpose.msra.mxu0 0.0
      %2834 = vmatprep.subr.mxu0 0.0
      %2835 = vmatpush1.xpose.msra.mxu0 0.0
      %2836 = vmatprep.subr.mxu0 0.0
      %2837 = vmatpush1.xpose.msra.mxu0 0.0
      %2838 = vmatprep.subr.mxu0 0.0
      %2839 = vmatpush1.xpose.msra.mxu0 0.0
      %2840 = vmatprep.subr.mxu0 0.0
      %2841 = vmatpush1.xpose.msra.mxu0 0.0
      %2842 = vmatprep.subr.mxu0 0.0
      %2843 = vmatpush1.xpose.msra.mxu0 0.0
      %2844 = vmatprep.subr.mxu0 0.0
      %2845 = vmatpush1.xpose.msra.mxu0 0.0
      %2846 = vmatprep.subr.mxu0 0.0
      %2847 = vmatpush1.xpose.msra.mxu0 0.0
      %2848 = vmatprep.subr.mxu0 0.0
      %2849 = vmatpush1.xpose.msra.mxu0 0.0
      %2850 = vmatprep.subr.mxu0 0.0
      %2851 = vmatpush1.xpose.msra.mxu0 0.0
      %2852 = vmatprep.subr.mxu0 0.0
      %2853 = vmatpush1.xpose.msra.mxu0 0.0
      %2854 = vmatprep.subr.mxu0 0.0
      %2855 = vmatpush1.xpose.msra.mxu0 0.0
      %2856 = vmatprep.subr.mxu0 0.0
      %2857 = vmatpush1.xpose.msra.mxu0 0.0
      %2858 = vmatprep.subr.mxu0 0.0
      %2859 = vmatpush1.xpose.msra.mxu0 0.0
      %2860 = vmatprep.subr.mxu0 0.0
      %2861 = vmatpush1.xpose.msra.mxu0 0.0
      %2862 = vmatprep.subr.mxu0 0.0
      %2863 = vmatpush1.xpose.msra.mxu0 0.0
      %2864 = vmatprep.subr.mxu0 0.0
      %2865 = vmatpush1.xpose.msra.mxu0 0.0
      %2866 = vmatprep.subr.mxu0 0.0
      %2867 = vmatpush1.xpose.msra.mxu0 0.0
      %2868 = vmatprep.subr.mxu0 0.0
      %2869 = vmatpush1.xpose.msra.mxu0 0.0
      %2870 = vmatprep.mubr.f32.mxu0 0.0
      %2871 = vmatmul.mubr.f32.gmra.mrb[0].mxu0 %v2595
      %v2872 = vpop.f32.mrb[0].mxu0
      %v2873 = vadd.f32 %v643, %v2872
      %v2874 = vpop.f32.mrb[0].mxu0
      %2875 = vdwg.mxu0
      %v2876 = vsel %vm1204, %v2873, -inf
      %2877 = vmax.xlane.f32.xlu0 %v2876
      %v2878 = vpop.xlane.xlu0 %2877
      %v2879 = vsub.f32 %v2873, %v2878
      %v2880 = vmul.f32 %v2879, 1.442695
      %v2881 = vpow.pop %v2880
      %v2882 = vsel %vm1204, %v2881, 0.0
      %2883 = vadd.xlane.f32.xlu0 %v2882
      %v2884 = vpop.xlane.xlu0 %2883
      %v2885 = vrcp.pop %v2884
      %v2886 = vmul.f32 %v2881, %v2885
      %v2888 = vsel %vm1204, %v2886, 0
      %2890 = vmatprep.subr.mxu0 0.0
      %2891 = vmatpush1.msra.mxu0 %v2759
      %2892 = vmatprep.subr.mxu0 0.0
      %2893 = vmatpush1.msra.mxu0 0.0
      %2894 = vmatprep.subr.mxu0 0.0
      %2895 = vmatpush1.msra.mxu0 0.0
      %2896 = vmatprep.subr.mxu0 0.0
      %2897 = vmatpush1.msra.mxu0 0.0
      %2898 = vmatprep.subr.mxu0 0.0
      %2899 = vmatpush1.msra.mxu0 0.0
      %2900 = vmatprep.subr.mxu0 0.0
      %2901 = vmatpush1.msra.mxu0 0.0
      %2902 = vmatprep.subr.mxu0 0.0
      %2903 = vmatpush1.msra.mxu0 0.0
      %2904 = vmatprep.subr.mxu0 0.0
      %2905 = vmatpush1.msra.mxu0 0.0
      %2906 = vmatprep.subr.mxu0 0.0
      %2907 = vmatpush1.msra.mxu0 0.0
      %2908 = vmatprep.subr.mxu0 0.0
      %2909 = vmatpush1.msra.mxu0 0.0
      %2910 = vmatprep.subr.mxu0 0.0
      %2911 = vmatpush1.msra.mxu0 0.0
      %2912 = vmatprep.subr.mxu0 0.0
      %2913 = vmatpush1.msra.mxu0 0.0
      %2914 = vmatprep.subr.mxu0 0.0
      %2915 = vmatpush1.msra.mxu0 0.0
      %2916 = vmatprep.subr.mxu0 0.0
      %2917 = vmatpush1.msra.mxu0 0.0
      %2918 = vmatprep.subr.mxu0 0.0
      %2919 = vmatpush1.msra.mxu0 0.0
      %2920 = vmatprep.subr.mxu0 0.0
      %2921 = vmatpush1.msra.mxu0 0.0
      %2922 = vmatprep.subr.mxu0 0.0
      %2923 = vmatpush1.msra.mxu0 0.0
      %2924 = vmatprep.subr.mxu0 0.0
      %2925 = vmatpush1.msra.mxu0 0.0
      %2926 = vmatprep.subr.mxu0 0.0
      %2927 = vmatpush1.msra.mxu0 0.0
      %2928 = vmatprep.subr.mxu0 0.0
      %2929 = vmatpush1.msra.mxu0 0.0
      %2930 = vmatprep.subr.mxu0 0.0
      %2931 = vmatpush1.msra.mxu0 0.0
      %2932 = vmatprep.subr.mxu0 0.0
      %2933 = vmatpush1.msra.mxu0 0.0
      %2934 = vmatprep.subr.mxu0 0.0
      %2935 = vmatpush1.msra.mxu0 0.0
      %2936 = vmatprep.subr.mxu0 0.0
      %2937 = vmatpush1.msra.mxu0 0.0
      %2938 = vmatprep.subr.mxu0 0.0
      %2939 = vmatpush1.msra.mxu0 0.0
      %2940 = vmatprep.subr.mxu0 0.0
      %2941 = vmatpush1.msra.mxu0 0.0
      %2942 = vmatprep.subr.mxu0 0.0
      %2943 = vmatpush1.msra.mxu0 0.0
      %2944 = vmatprep.subr.mxu0 0.0
      %2945 = vmatpush1.msra.mxu0 0.0
      %2946 = vmatprep.subr.mxu0 0.0
      %2947 = vmatpush1.msra.mxu0 0.0
      %2948 = vmatprep.subr.mxu0 0.0
      %2949 = vmatpush1.msra.mxu0 0.0
      %2950 = vmatprep.subr.mxu0 0.0
      %2951 = vmatpush1.msra.mxu0 0.0
      %2952 = vmatprep.subr.mxu0 0.0
      %2953 = vmatpush1.msra.mxu0 0.0
      %2954 = vmatprep.mubr.f32.mxu0 0.0
      %2955 = vmatmul.mubr.f32.gmra.mrb[0].mxu0 %v2888
      %v2956 = vpop.f32.mrb[0].mxu0
      %v2957 = vadd.f32 0.0, %v2956
      %v2958 = vpop.f32.mrb[0].mxu0
      %2959 = vdwg.mxu0
      %2960 = vmatprep.subr.mxu0 0.0
      %2961 = vmatpush1.xpose.msra.mxu0 %v2679
      %2962 = vmatprep.subr.mxu0 0.0
      %2963 = vmatpush1.xpose.msra.mxu0 0.0
      %2964 = vmatprep.subr.mxu0 0.0
      %2965 = vmatpush1.xpose.msra.mxu0 0.0
      %2966 = vmatprep.subr.mxu0 0.0
      %2967 = vmatpush1.xpose.msra.mxu0 0.0
      %2968 = vmatprep.subr.mxu0 0.0
      %2969 = vmatpush1.xpose.msra.mxu0 0.0
      %2970 = vmatprep.subr.mxu0 0.0
      %2971 = vmatpush1.xpose.msra.mxu0 0.0
      %2972 = vmatprep.subr.mxu0 0.0
      %2973 = vmatpush1.xpose.msra.mxu0 0.0
      %2974 = vmatprep.subr.mxu0 0.0
      %2975 = vmatpush1.xpose.msra.mxu0 0.0
      %2976 = vmatprep.subr.mxu0 0.0
      %2977 = vmatpush1.xpose.msra.mxu0 0.0
      %2978 = vmatprep.subr.mxu0 0.0
      %2979 = vmatpush1.xpose.msra.mxu0 0.0
      %2980 = vmatprep.subr.mxu0 0.0
      %2981 = vmatpush1.xpose.msra.mxu0 0.0
      %2982 = vmatprep.subr.mxu0 0.0
      %2983 = vmatpush1.xpose.msra.mxu0 0.0
      %2984 = vmatprep.subr.mxu0 0.0
      %2985 = vmatpush1.xpose.msra.mxu0 0.0
      %2986 = vmatprep.subr.mxu0 0.0
      %2987 = vmatpush1.xpose.msra.mxu0 0.0
      %2988 = vmatprep.subr.mxu0 0.0
      %2989 = vmatpush1.xpose.msra.mxu0 0.0
      %2990 = vmatprep.subr.mxu0 0.0
      %2991 = vmatpush1.xpose.msra.mxu0 0.0
      %2992 = vmatprep.subr.mxu0 0.0
      %2993 = vmatpush1.xpose.msra.mxu0 0.0
      %2994 = vmatprep.subr.mxu0 0.0
      %2995 = vmatpush1.xpose.msra.mxu0 0.0
      %2996 = vmatprep.subr.mxu0 0.0
      %2997 = vmatpush1.xpose.msra.mxu0 0.0
      %2998 = vmatprep.subr.mxu0 0.0
      %2999 = vmatpush1.xpose.msra.mxu0 0.0
      %3000 = vmatprep.subr.mxu0 0.0
      %3001 = vmatpush1.xpose.msra.mxu0 0.0
      %3002 = vmatprep.subr.mxu0 0.0
      %3003 = vmatpush1.xpose.msra.mxu0 0.0
      %3004 = vmatprep.subr.mxu0 0.0
      %3005 = vmatpush1.xpose.msra.mxu0 0.0
      %3006 = vmatprep.subr.mxu0 0.0
      %3007 = vmatpush1.xpose.msra.mxu0 0.0
      %3008 = vmatprep.subr.mxu0 0.0
      %3009 = vmatpush1.xpose.msra.mxu0 0.0
      %3010 = vmatprep.subr.mxu0 0.0
      %3011 = vmatpush1.xpose.msra.mxu0 0.0
      %3012 = vmatprep.subr.mxu0 0.0
      %3013 = vmatpush1.xpose.msra.mxu0 0.0
      %3014 = vmatprep.subr.mxu0 0.0
      %3015 = vmatpush1.xpose.msra.mxu0 0.0
      %3016 = vmatprep.subr.mxu0 0.0
      %3017 = vmatpush1.xpose.msra.mxu0 0.0
      %3018 = vmatprep.subr.mxu0 0.0
      %3019 = vmatpush1.xpose.msra.mxu0 0.0
      %3020 = vmatprep.subr.mxu0 0.0
      %3021 = vmatpush1.xpose.msra.mxu0 0.0
      %3022 = vmatprep.subr.mxu0 0.0
      %3023 = vmatpush1.xpose.msra.mxu0 0.0
      %3024 = vmatprep.mubr.f32.mxu0 0.0
      %3025 = vmatmul.mubr.f32.gmra.mrb[0].mxu0 %v2597
      %v3026 = vpop.f32.mrb[0].mxu0
      %v3027 = vadd.f32 %v643, %v3026
      %v3028 = vpop.f32.mrb[0].mxu0
      %3029 = vdwg.mxu0
      %v3030 = vsel %vm1204, %v3027, -inf
      %3031 = vmax.xlane.f32.xlu0 %v3030
      %v3032 = vpop.xlane.xlu0 %3031
      %v3033 = vsub.f32 %v3027, %v3032
      %v3034 = vmul.f32 %v3033, 1.442695
      %v3035 = vpow.pop %v3034
      %v3036 = vsel %vm1204, %v3035, 0.0
      %3037 = vadd.xlane.f32.xlu0 %v3036
      %v3038 = vpop.xlane.xlu0 %3037
      %v3039 = vrcp.pop %v3038
      %v3040 = vmul.f32 %v3035, %v3039
      %v3042 = vsel %vm1204, %v3040, 0
      %3044 = vmatprep.subr.mxu0 0.0
      %3045 = vmatpush1.msra.mxu0 %v2761
      %3046 = vmatprep.subr.mxu0 0.0
      %3047 = vmatpush1.msra.mxu0 0.0
      %3048 = vmatprep.subr.mxu0 0.0
      %3049 = vmatpush1.msra.mxu0 0.0
      %3050 = vmatprep.subr.mxu0 0.0
      %3051 = vmatpush1.msra.mxu0 0.0
      %3052 = vmatprep.subr.mxu0 0.0
      %3053 = vmatpush1.msra.mxu0 0.0
      %3054 = vmatprep.subr.mxu0 0.0
      %3055 = vmatpush1.msra.mxu0 0.0
      %3056 = vmatprep.subr.mxu0 0.0
      %3057 = vmatpush1.msra.mxu0 0.0
      %3058 = vmatprep.subr.mxu0 0.0
      %3059 = vmatpush1.msra.mxu0 0.0
      %3060 = vmatprep.subr.mxu0 0.0
      %3061 = vmatpush1.msra.mxu0 0.0
      %3062 = vmatprep.subr.mxu0 0.0
      %3063 = vmatpush1.msra.mxu0 0.0
      %3064 = vmatprep.subr.mxu0 0.0
      %3065 = vmatpush1.msra.mxu0 0.0
      %3066 = vmatprep.subr.mxu0 0.0
      %3067 = vmatpush1.msra.mxu0 0.0
      %3068 = vmatprep.subr.mxu0 0.0
      %3069 = vmatpush1.msra.mxu0 0.0
      %3070 = vmatprep.subr.mxu0 0.0
      %3071 = vmatpush1.msra.mxu0 0.0
      %3072 = vmatprep.subr.mxu0 0.0
      %3073 = vmatpush1.msra.mxu0 0.0
      %3074 = vmatprep.subr.mxu0 0.0
      %3075 = vmatpush1.msra.mxu0 0.0
      %3076 = vmatprep.subr.mxu0 0.0
      %3077 = vmatpush1.msra.mxu0 0.0
      %3078 = vmatprep.subr.mxu0 0.0
      %3079 = vmatpush1.msra.mxu0 0.0
      %3080 = vmatprep.subr.mxu0 0.0
      %3081 = vmatpush1.msra.mxu0 0.0
      %3082 = vmatprep.subr.mxu0 0.0
      %3083 = vmatpush1.msra.mxu0 0.0
      %3084 = vmatprep.subr.mxu0 0.0
      %3085 = vmatpush1.msra.mxu0 0.0
      %3086 = vmatprep.subr.mxu0 0.0
      %3087 = vmatpush1.msra.mxu0 0.0
      %3088 = vmatprep.subr.mxu0 0.0
      %3089 = vmatpush1.msra.mxu0 0.0
      %3090 = vmatprep.subr.mxu0 0.0
      %3091 = vmatpush1.msra.mxu0 0.0
      %3092 = vmatprep.subr.mxu0 0.0
      %3093 = vmatpush1.msra.mxu0 0.0
      %3094 = vmatprep.subr.mxu0 0.0
      %3095 = vmatpush1.msra.mxu0 0.0
      %3096 = vmatprep.subr.mxu0 0.0
      %3097 = vmatpush1.msra.mxu0 0.0
      %3098 = vmatprep.subr.mxu0 0.0
      %3099 = vmatpush1.msra.mxu0 0.0
      %3100 = vmatprep.subr.mxu0 0.0
      %3101 = vmatpush1.msra.mxu0 0.0
      %3102 = vmatprep.subr.mxu0 0.0
      %3103 = vmatpush1.msra.mxu0 0.0
      %3104 = vmatprep.subr.mxu0 0.0
      %3105 = vmatpush1.msra.mxu0 0.0
      %3106 = vmatprep.subr.mxu0 0.0
      %3107 = vmatpush1.msra.mxu0 0.0
      %3108 = vmatprep.mubr.f32.mxu0 0.0
      %3109 = vmatmul.mubr.f32.gmra.mrb[0].mxu0 %v3042
      %v3110 = vpop.f32.mrb[0].mxu0
      %v3111 = vadd.f32 0.0, %v3110
      %v3112 = vpop.f32.mrb[0].mxu0
      %3113 = vdwg.mxu0
      %3114 = vmatprep.subr.mxu0 0.0
      %3115 = vmatpush1.xpose.msra.mxu0 %v2718
      %3116 = vmatprep.subr.mxu0 0.0
      %3117 = vmatpush1.xpose.msra.mxu0 0.0
      %3118 = vmatprep.subr.mxu0 0.0
      %3119 = vmatpush1.xpose.msra.mxu0 0.0
      %3120 = vmatprep.subr.mxu0 0.0
      %3121 = vmatpush1.xpose.msra.mxu0 0.0
      %3122 = vmatprep.subr.mxu0 0.0
      %3123 = vmatpush1.xpose.msra.mxu0 0.0
      %3124 = vmatprep.subr.mxu0 0.0
      %3125 = vmatpush1.xpose.msra.mxu0 0.0
      %3126 = vmatprep.subr.mxu0 0.0
      %3127 = vmatpush1.xpose.msra.mxu0 0.0
      %3128 = vmatprep.subr.mxu0 0.0
      %3129 = vmatpush1.xpose.msra.mxu0 0.0
      %3130 = vmatprep.subr.mxu0 0.0
      %3131 = vmatpush1.xpose.msra.mxu0 0.0
      %3132 = vmatprep.subr.mxu0 0.0
      %3133 = vmatpush1.xpose.msra.mxu0 0.0
      %3134 = vmatprep.subr.mxu0 0.0
      %3135 = vmatpush1.xpose.msra.mxu0 0.0
      %3136 = vmatprep.subr.mxu0 0.0
      %3137 = vmatpush1.xpose.msra.mxu0 0.0
      %3138 = vmatprep.subr.mxu0 0.0
      %3139 = vmatpush1.xpose.msra.mxu0 0.0
      %3140 = vmatprep.subr.mxu0 0.0
      %3141 = vmatpush1.xpose.msra.mxu0 0.0
      %3142 = vmatprep.subr.mxu0 0.0
      %3143 = vmatpush1.xpose.msra.mxu0 0.0
      %3144 = vmatprep.subr.mxu0 0.0
      %3145 = vmatpush1.xpose.msra.mxu0 0.0
      %3146 = vmatprep.subr.mxu0 0.0
      %3147 = vmatpush1.xpose.msra.mxu0 0.0
      %3148 = vmatprep.subr.mxu0 0.0
      %3149 = vmatpush1.xpose.msra.mxu0 0.0
      %3150 = vmatprep.subr.mxu0 0.0
      %3151 = vmatpush1.xpose.msra.mxu0 0.0
      %3152 = vmatprep.subr.mxu0 0.0
      %3153 = vmatpush1.xpose.msra.mxu0 0.0
      %3154 = vmatprep.subr.mxu0 0.0
      %3155 = vmatpush1.xpose.msra.mxu0 0.0
      %3156 = vmatprep.subr.mxu0 0.0
      %3157 = vmatpush1.xpose.msra.mxu0 0.0
      %3158 = vmatprep.subr.mxu0 0.0
      %3159 = vmatpush1.xpose.msra.mxu0 0.0
      %3160 = vmatprep.subr.mxu0 0.0
      %3161 = vmatpush1.xpose.msra.mxu0 0.0
      %3162 = vmatprep.subr.mxu0 0.0
      %3163 = vmatpush1.xpose.msra.mxu0 0.0
      %3164 = vmatprep.subr.mxu0 0.0
      %3165 = vmatpush1.xpose.msra.mxu0 0.0
      %3166 = vmatprep.subr.mxu0 0.0
      %3167 = vmatpush1.xpose.msra.mxu0 0.0
      %3168 = vmatprep.subr.mxu0 0.0
      %3169 = vmatpush1.xpose.msra.mxu0 0.0
      %3170 = vmatprep.subr.mxu0 0.0
      %3171 = vmatpush1.xpose.msra.mxu0 0.0
      %3172 = vmatprep.subr.mxu0 0.0
      %3173 = vmatpush1.xpose.msra.mxu0 0.0
      %3174 = vmatprep.subr.mxu0 0.0
      %3175 = vmatpush1.xpose.msra.mxu0 0.0
      %3176 = vmatprep.subr.mxu0 0.0
      %3177 = vmatpush1.xpose.msra.mxu0 0.0
      %3178 = vmatprep.mubr.f32.mxu0 0.0
      %3179 = vmatmul.mubr.f32.gmra.mrb[0].mxu0 %v2636
      %v3180 = vpop.f32.mrb[0].mxu0
      %v3181 = vadd.f32 %v643, %v3180
      %v3182 = vpop.f32.mrb[0].mxu0
      %3183 = vdwg.mxu0
      %v3184 = vsel %vm1204, %v3181, -inf
      %3185 = vmax.xlane.f32.xlu0 %v3184
      %v3186 = vpop.xlane.xlu0 %3185
      %v3187 = vsub.f32 %v3181, %v3186
      %v3188 = vmul.f32 %v3187, 1.442695
      %v3189 = vpow.pop %v3188
      %v3190 = vsel %vm1204, %v3189, 0.0
      %3191 = vadd.xlane.f32.xlu0 %v3190
      %v3192 = vpop.xlane.xlu0 %3191
      %v3193 = vrcp.pop %v3192
      %v3194 = vmul.f32 %v3189, %v3193
      %v3196 = vsel %vm1204, %v3194, 0
      %3198 = vmatprep.subr.mxu0 0.0
      %3199 = vmatpush1.msra.mxu0 %v2800
      %3200 = vmatprep.subr.mxu0 0.0
      %3201 = vmatpush1.msra.mxu0 0.0
      %3202 = vmatprep.subr.mxu0 0.0
      %3203 = vmatpush1.msra.mxu0 0.0
      %3204 = vmatprep.subr.mxu0 0.0
      %3205 = vmatpush1.msra.mxu0 0.0
      %3206 = vmatprep.subr.mxu0 0.0
      %3207 = vmatpush1.msra.mxu0 0.0
      %3208 = vmatprep.subr.mxu0 0.0
      %3209 = vmatpush1.msra.mxu0 0.0
      %3210 = vmatprep.subr.mxu0 0.0
      %3211 = vmatpush1.msra.mxu0 0.0
      %3212 = vmatprep.subr.mxu0 0.0
      %3213 = vmatpush1.msra.mxu0 0.0
      %3214 = vmatprep.subr.mxu0 0.0
      %3215 = vmatpush1.msra.mxu0 0.0
      %3216 = vmatprep.subr.mxu0 0.0
      %3217 = vmatpush1.msra.mxu0 0.0
      %3218 = vmatprep.subr.mxu0 0.0
      %3219 = vmatpush1.msra.mxu0 0.0
      %3220 = vmatprep.subr.mxu0 0.0
      %3221 = vmatpush1.msra.mxu0 0.0
      %3222 = vmatprep.subr.mxu0 0.0
      %3223 = vmatpush1.msra.mxu0 0.0
      %3224 = vmatprep.subr.mxu0 0.0
      %3225 = vmatpush1.msra.mxu0 0.0
      %3226 = vmatprep.subr.mxu0 0.0
      %3227 = vmatpush1.msra.mxu0 0.0
      %3228 = vmatprep.subr.mxu0 0.0
      %3229 = vmatpush1.msra.mxu0 0.0
      %3230 = vmatprep.subr.mxu0 0.0
      %3231 = vmatpush1.msra.mxu0 0.0
      %3232 = vmatprep.subr.mxu0 0.0
      %3233 = vmatpush1.msra.mxu0 0.0
      %3234 = vmatprep.subr.mxu0 0.0
      %3235 = vmatpush1.msra.mxu0 0.0
      %3236 = vmatprep.subr.mxu0 0.0
      %3237 = vmatpush1.msra.mxu0 0.0
      %3238 = vmatprep.subr.mxu0 0.0
      %3239 = vmatpush1.msra.mxu0 0.0
      %3240 = vmatprep.subr.mxu0 0.0
      %3241 = vmatpush1.msra.mxu0 0.0
      %3242 = vmatprep.subr.mxu0 0.0
      %3243 = vmatpush1.msra.mxu0 0.0
      %3244 = vmatprep.subr.mxu0 0.0
      %3245 = vmatpush1.msra.mxu0 0.0
      %3246 = vmatprep.subr.mxu0 0.0
      %3247 = vmatpush1.msra.mxu0 0.0
      %3248 = vmatprep.subr.mxu0 0.0
      %3249 = vmatpush1.msra.mxu0 0.0
      %3250 = vmatprep.subr.mxu0 0.0
      %3251 = vmatpush1.msra.mxu0 0.0
      %3252 = vmatprep.subr.mxu0 0.0
      %3253 = vmatpush1.msra.mxu0 0.0
      %3254 = vmatprep.subr.mxu0 0.0
      %3255 = vmatpush1.msra.mxu0 0.0
      %3256 = vmatprep.subr.mxu0 0.0
      %3257 = vmatpush1.msra.mxu0 0.0
      %3258 = vmatprep.subr.mxu0 0.0
      %3259 = vmatpush1.msra.mxu0 0.0
      %3260 = vmatprep.subr.mxu0 0.0
      %3261 = vmatpush1.msra.mxu0 0.0
      %3262 = vmatprep.mubr.f32.mxu0 0.0
      %3263 = vmatmul.mubr.f32.gmra.mrb[0].mxu0 %v3196
      %v3264 = vpop.f32.mrb[0].mxu0
      %v3265 = vadd.f32 0.0, %v3264
      %v3266 = vpop.f32.mrb[0].mxu0
      %3267 = vdwg.mxu0
      %3268 = vmatprep.subr.mxu0 0.0
      %3269 = vmatpush1.xpose.msra.mxu0 %v2720
      %3270 = vmatprep.subr.mxu0 0.0
      %3271 = vmatpush1.xpose.msra.mxu0 0.0
      %3272 = vmatprep.subr.mxu0 0.0
      %3273 = vmatpush1.xpose.msra.mxu0 0.0
      %3274 = vmatprep.subr.mxu0 0.0
      %3275 = vmatpush1.xpose.msra.mxu0 0.0
      %3276 = vmatprep.subr.mxu0 0.0
      %3277 = vmatpush1.xpose.msra.mxu0 0.0
      %3278 = vmatprep.subr.mxu0 0.0
      %3279 = vmatpush1.xpose.msra.mxu0 0.0
      %3280 = vmatprep.subr.mxu0 0.0
      %3281 = vmatpush1.xpose.msra.mxu0 0.0
      %3282 = vmatprep.subr.mxu0 0.0
      %3283 = vmatpush1.xpose.msra.mxu0 0.0
      %3284 = vmatprep.subr.mxu0 0.0
      %3285 = vmatpush1.xpose.msra.mxu0 0.0
      %3286 = vmatprep.subr.mxu0 0.0
      %3287 = vmatpush1.xpose.msra.mxu0 0.0
      %3288 = vmatprep.subr.mxu0 0.0
      %3289 = vmatpush1.xpose.msra.mxu0 0.0
      %3290 = vmatprep.subr.mxu0 0.0
      %3291 = vmatpush1.xpose.msra.mxu0 0.0
      %3292 = vmatprep.subr.mxu0 0.0
      %3293 = vmatpush1.xpose.msra.mxu0 0.0
      %3294 = vmatprep.subr.mxu0 0.0
      %3295 = vmatpush1.xpose.msra.mxu0 0.0
      %3296 = vmatprep.subr.mxu0 0.0
      %3297 = vmatpush1.xpose.msra.mxu0 0.0
      %3298 = vmatprep.subr.mxu0 0.0
      %3299 = vmatpush1.xpose.msra.mxu0 0.0
      %3300 = vmatprep.subr.mxu0 0.0
      %3301 = vmatpush1.xpose.msra.mxu0 0.0
      %3302 = vmatprep.subr.mxu0 0.0
      %3303 = vmatpush1.xpose.msra.mxu0 0.0
      %3304 = vmatprep.subr.mxu0 0.0
      %3305 = vmatpush1.xpose.msra.mxu0 0.0
      %3306 = vmatprep.subr.mxu0 0.0
      %3307 = vmatpush1.xpose.msra.mxu0 0.0
      %3308 = vmatprep.subr.mxu0 0.0
      %3309 = vmatpush1.xpose.msra.mxu0 0.0
      %3310 = vmatprep.subr.mxu0 0.0
      %3311 = vmatpush1.xpose.msra.mxu0 0.0
      %3312 = vmatprep.subr.mxu0 0.0
      %3313 = vmatpush1.xpose.msra.mxu0 0.0
      %3314 = vmatprep.subr.mxu0 0.0
      %3315 = vmatpush1.xpose.msra.mxu0 0.0
      %3316 = vmatprep.subr.mxu0 0.0
      %3317 = vmatpush1.xpose.msra.mxu0 0.0
      %3318 = vmatprep.subr.mxu0 0.0
      %3319 = vmatpush1.xpose.msra.mxu0 0.0
      %3320 = vmatprep.subr.mxu0 0.0
      %3321 = vmatpush1.xpose.msra.mxu0 0.0
      %3322 = vmatprep.subr.mxu0 0.0
      %3323 = vmatpush1.xpose.msra.mxu0 0.0
      %3324 = vmatprep.subr.mxu0 0.0
      %3325 = vmatpush1.xpose.msra.mxu0 0.0
      %3326 = vmatprep.subr.mxu0 0.0
      %3327 = vmatpush1.xpose.msra.mxu0 0.0
      %3328 = vmatprep.subr.mxu0 0.0
      %3329 = vmatpush1.xpose.msra.mxu0 0.0
      %3330 = vmatprep.subr.mxu0 0.0
      %3331 = vmatpush1.xpose.msra.mxu0 0.0
      %3332 = vmatprep.mubr.f32.mxu0 0.0
      %3333 = vmatmul.mubr.f32.gmra.mrb[0].mxu0 %v2638
      %v3334 = vpop.f32.mrb[0].mxu0
      %v3335 = vadd.f32 %v643, %v3334
      %v3336 = vpop.f32.mrb[0].mxu0
      %3337 = vdwg.mxu0
      %v3338 = vsel %vm1204, %v3335, -inf
      %3339 = vmax.xlane.f32.xlu0 %v3338
      %v3340 = vpop.xlane.xlu0 %3339
      %v3341 = vsub.f32 %v3335, %v3340
      %v3342 = vmul.f32 %v3341, 1.442695
      %v3343 = vpow.pop %v3342
      %v3344 = vsel %vm1204, %v3343, 0.0
      %3345 = vadd.xlane.f32.xlu0 %v3344
      %v3346 = vpop.xlane.xlu0 %3345
      %v3347 = vrcp.pop %v3346
      %v3348 = vmul.f32 %v3343, %v3347
      %v3350 = vsel %vm1204, %v3348, 0
      %3352 = vmatprep.subr.mxu0 0.0
      %3353 = vmatpush1.msra.mxu0 %v2802
      %3354 = vmatprep.subr.mxu0 0.0
      %3355 = vmatpush1.msra.mxu0 0.0
      %3356 = vmatprep.subr.mxu0 0.0
      %3357 = vmatpush1.msra.mxu0 0.0
      %3358 = vmatprep.subr.mxu0 0.0
      %3359 = vmatpush1.msra.mxu0 0.0
      %3360 = vmatprep.subr.mxu0 0.0
      %3361 = vmatpush1.msra.mxu0 0.0
      %3362 = vmatprep.subr.mxu0 0.0
      %3363 = vmatpush1.msra.mxu0 0.0
      %3364 = vmatprep.subr.mxu0 0.0
      %3365 = vmatpush1.msra.mxu0 0.0
      %3366 = vmatprep.subr.mxu0 0.0
      %3367 = vmatpush1.msra.mxu0 0.0
      %3368 = vmatprep.subr.mxu0 0.0
      %3369 = vmatpush1.msra.mxu0 0.0
      %3370 = vmatprep.subr.mxu0 0.0
      %3371 = vmatpush1.msra.mxu0 0.0
      %3372 = vmatprep.subr.mxu0 0.0
      %3373 = vmatpush1.msra.mxu0 0.0
      %3374 = vmatprep.subr.mxu0 0.0
      %3375 = vmatpush1.msra.mxu0 0.0
      %3376 = vmatprep.subr.mxu0 0.0
      %3377 = vmatpush1.msra.mxu0 0.0
      %3378 = vmatprep.subr.mxu0 0.0
      %3379 = vmatpush1.msra.mxu0 0.0
      %3380 = vmatprep.subr.mxu0 0.0
      %3381 = vmatpush1.msra.mxu0 0.0
      %3382 = vmatprep.subr.mxu0 0.0
      %3383 = vmatpush1.msra.mxu0 0.0
      %3384 = vmatprep.subr.mxu0 0.0
      %3385 = vmatpush1.msra.mxu0 0.0
      %3386 = vmatprep.subr.mxu0 0.0
      %3387 = vmatpush1.msra.mxu0 0.0
      %3388 = vmatprep.subr.mxu0 0.0
      %3389 = vmatpush1.msra.mxu0 0.0
      %3390 = vmatprep.subr.mxu0 0.0
      %3391 = vmatpush1.msra.mxu0 0.0
      %3392 = vmatprep.subr.mxu0 0.0
      %3393 = vmatpush1.msra.mxu0 0.0
      %3394 = vmatprep.subr.mxu0 0.0
      %3395 = vmatpush1.msra.mxu0 0.0
      %3396 = vmatprep.subr.mxu0 0.0
      %3397 = vmatpush1.msra.mxu0 0.0
      %3398 = vmatprep.subr.mxu0 0.0
      %3399 = vmatpush1.msra.mxu0 0.0
      %3400 = vmatprep.subr.mxu0 0.0
      %3401 = vmatpush1.msra.mxu0 0.0
      %3402 = vmatprep.subr.mxu0 0.0
      %3403 = vmatpush1.msra.mxu0 0.0
      %3404 = vmatprep.subr.mxu0 0.0
      %3405 = vmatpush1.msra.mxu0 0.0
      %3406 = vmatprep.subr.mxu0 0.0
      %3407 = vmatpush1.msra.mxu0 0.0
      %3408 = vmatprep.subr.mxu0 0.0
      %3409 = vmatpush1.msra.mxu0 0.0
      %3410 = vmatprep.subr.mxu0 0.0
      %3411 = vmatpush1.msra.mxu0 0.0
      %3412 = vmatprep.subr.mxu0 0.0
      %3413 = vmatpush1.msra.mxu0 0.0
      %3414 = vmatprep.subr.mxu0 0.0
      %3415 = vmatpush1.msra.mxu0 0.0
      %3416 = vmatprep.mubr.f32.mxu0 0.0
      %3417 = vmatmul.mubr.f32.gmra.mrb[0].mxu0 %v3350
      %v3418 = vpop.f32.mrb[0].mxu0
      %v3419 = vadd.f32 0.0, %v3418
      %v3420 = vpop.f32.mrb[0].mxu0
      %3421 = vdwg.mxu0
      %v3422 = vpack.c.bf16 %v2957, %v2957
      %v3423 = vpack.c.bf16 %v3111, %v3111
      %v3424 = vpack.c.bf16 %v3265, %v3265
      %v3425 = vpack.c.bf16 %v3419, %v3419
      %s3426 = scalar_lea.vmem %s6, 256
      %v3427 = vld [vmem:[%s3426] sm:$0xf]
      %v3428 = vld [vmem:[%s3426 + $0x4] sm:$0xf]
      %v3429 = vld [vmem:[%s3426 + $0x8] sm:$0xf]
      %v3430 = vld [vmem:[%s3426 + $0xc] sm:$0xf]
      %v3431 = vld [vmem:[%s3426 + $0x10] sm:$0xf]
      %v3432 = vld [vmem:[%s3426 + $0x14] sm:$0xf]
      %v3433 = vld [vmem:[%s3426 + $0x18] sm:$0xf]
      %v3434 = vld [vmem:[%s3426 + $0x1c] sm:$0xf]
      %v3435 = vld [vmem:[%s3426 + $0x20] sm:$0xf]
      %v3436 = vld [vmem:[%s3426 + $0x24] sm:$0xf]
      %v3437 = vld [vmem:[%s3426 + $0x28] sm:$0xf]
      %v3438 = vld [vmem:[%s3426 + $0x2c] sm:$0xf]
      %v3439 = vld [vmem:[%s3426 + $0x30] sm:$0xf]
      %v3440 = vld [vmem:[%s3426 + $0x34] sm:$0xf]
      %v3441 = vld [vmem:[%s3426 + $0x38] sm:$0xf]
      %v3442 = vld [vmem:[%s3426 + $0x3c] sm:$0xf]
      %v3443 = vld [vmem:[%s3426 + $0x40] sm:$0xf]
      %v3444 = vld [vmem:[%s3426 + $0x44] sm:$0xf]
      %v3445 = vld [vmem:[%s3426 + $0x48] sm:$0xf]
      %v3446 = vld [vmem:[%s3426 + $0x4c] sm:$0xf]
      %v3447 = vld [vmem:[%s3426 + $0x50] sm:$0xf]
      %v3448 = vld [vmem:[%s3426 + $0x54] sm:$0xf]
      %v3449 = vld [vmem:[%s3426 + $0x58] sm:$0xf]
      %v3450 = vld [vmem:[%s3426 + $0x5c] sm:$0xf]
      %v3451 = vld [vmem:[%s3426 + $0x60] sm:$0xf]
      %v3452 = vld [vmem:[%s3426 + $0x64] sm:$0xf]
      %v3453 = vld [vmem:[%s3426 + $0x68] sm:$0xf]
      %v3454 = vld [vmem:[%s3426 + $0x6c] sm:$0xf]
      %v3455 = vld [vmem:[%s3426 + $0x70] sm:$0xf]
      %v3456 = vld [vmem:[%s3426 + $0x74] sm:$0xf]
      %v3457 = vld [vmem:[%s3426 + $0x78] sm:$0xf]
      %v3458 = vld [vmem:[%s3426 + $0x7c] sm:$0xf]
      %v3459 = vld [vmem:[%s3426 + $0x80] sm:$0xf]
      %v3460 = vld [vmem:[%s3426 + $0x84] sm:$0xf]
      %v3461 = vld [vmem:[%s3426 + $0x88] sm:$0xf]
      %v3462 = vld [vmem:[%s3426 + $0x8c] sm:$0xf]
      %v3463 = vld [vmem:[%s3426 + $0x90] sm:$0xf]
      %v3464 = vld [vmem:[%s3426 + $0x94] sm:$0xf]
      %v3465 = vld [vmem:[%s3426 + $0x98] sm:$0xf]
      %v3466 = vld [vmem:[%s3426 + $0x9c] sm:$0xf]
      %v3467 = vld [vmem:[%s3426 + $0xa0] sm:$0xf]
      %v3468 = vld [vmem:[%s3426 + $0xa4] sm:$0xf]
      %v3469 = vld [vmem:[%s3426 + $0xa8] sm:$0xf]
      %v3470 = vld [vmem:[%s3426 + $0xac] sm:$0xf]
      %v3471 = vld [vmem:[%s3426 + $0xb0] sm:$0xf]
      %v3472 = vld [vmem:[%s3426 + $0xb4] sm:$0xf]
      %v3473 = vld [vmem:[%s3426 + $0xb8] sm:$0xf]
      %v3474 = vld [vmem:[%s3426 + $0xbc] sm:$0xf]
      %v3475 = vld [vmem:[%s3426 + $0xc0] sm:$0xf]
      %v3476 = vld [vmem:[%s3426 + $0xc4] sm:$0xf]
      %v3477 = vld [vmem:[%s3426 + $0xc8] sm:$0xf]
      %v3478 = vld [vmem:[%s3426 + $0xcc] sm:$0xf]
      %v3479 = vld [vmem:[%s3426 + $0xd0] sm:$0xf]
      %v3480 = vld [vmem:[%s3426 + $0xd4] sm:$0xf]
      %v3481 = vld [vmem:[%s3426 + $0xd8] sm:$0xf]
      %v3482 = vld [vmem:[%s3426 + $0xdc] sm:$0xf]
      %v3483 = vld [vmem:[%s3426 + $0xe0] sm:$0xf]
      %v3484 = vld [vmem:[%s3426 + $0xe4] sm:$0xf]
      %v3485 = vld [vmem:[%s3426 + $0xe8] sm:$0xf]
      %v3486 = vld [vmem:[%s3426 + $0xec] sm:$0xf]
      %v3487 = vld [vmem:[%s3426 + $0xf0] sm:$0xf]
      %v3488 = vld [vmem:[%s3426 + $0xf4] sm:$0xf]
      %v3489 = vld [vmem:[%s3426 + $0xf8] sm:$0xf]
      %v3490 = vld [vmem:[%s3426 + $0xfc] sm:$0xf]
      %s3491 = scalar_lea.vmem %s7, 1
      %v3492 = vld [vmem:[%s3491] sm:$0x1]
      %v3494 = vlaneseq
      %v3495 = vshrl.u32 %v3494, 7
      %v3496 = vsub.s32 0, %v3495
      %v3497 = vrot.slane %v3492, %v3496
      %v3563 = vunpack.c.l.b16 %v3427
      %v3564 = vunpack.c.l.b16 %v3428
      %v3565 = vunpack.c.l.b16 %v3429
      %v3566 = vunpack.c.l.b16 %v3430
      %v3567 = vunpack.c.l.b16 %v3431
      %v3568 = vunpack.c.l.b16 %v3432
      %v3569 = vunpack.c.l.b16 %v3433
      %v3570 = vunpack.c.l.b16 %v3434
      %v3571 = vunpack.c.l.b16 %v3435
      %v3572 = vunpack.c.l.b16 %v3436
      %v3573 = vunpack.c.l.b16 %v3437
      %v3574 = vunpack.c.l.b16 %v3438
      %v3575 = vunpack.c.l.b16 %v3439
      %v3576 = vunpack.c.l.b16 %v3440
      %v3577 = vunpack.c.l.b16 %v3441
      %v3578 = vunpack.c.l.b16 %v3442
      %v3579 = vunpack.c.l.b16 %v3443
      %v3580 = vunpack.c.l.b16 %v3444
      %v3581 = vunpack.c.l.b16 %v3445
      %v3582 = vunpack.c.l.b16 %v3446
      %v3583 = vunpack.c.l.b16 %v3447
      %v3584 = vunpack.c.l.b16 %v3448
      %v3585 = vunpack.c.l.b16 %v3449
      %v3586 = vunpack.c.l.b16 %v3450
      %v3587 = vunpack.c.l.b16 %v3451
      %v3588 = vunpack.c.l.b16 %v3452
      %v3589 = vunpack.c.l.b16 %v3453
      %v3590 = vunpack.c.l.b16 %v3454
      %v3591 = vunpack.c.l.b16 %v3455
      %v3592 = vunpack.c.l.b16 %v3456
      %v3593 = vunpack.c.l.b16 %v3457
      %v3594 = vunpack.c.l.b16 %v3458
      %v3595 = vunpack.c.l.b16 %v3459
      %v3596 = vunpack.c.l.b16 %v3460
      %v3597 = vunpack.c.l.b16 %v3461
      %v3598 = vunpack.c.l.b16 %v3462
      %v3599 = vunpack.c.l.b16 %v3463
      %v3600 = vunpack.c.l.b16 %v3464
      %v3601 = vunpack.c.l.b16 %v3465
      %v3602 = vunpack.c.l.b16 %v3466
      %v3603 = vunpack.c.l.b16 %v3467
      %v3604 = vunpack.c.l.b16 %v3468
      %v3605 = vunpack.c.l.b16 %v3469
      %v3606 = vunpack.c.l.b16 %v3470
      %v3607 = vunpack.c.l.b16 %v3471
      %v3608 = vunpack.c.l.b16 %v3472
      %v3609 = vunpack.c.l.b16 %v3473
      %v3610 = vunpack.c.l.b16 %v3474
      %v3611 = vunpack.c.l.b16 %v3475
      %v3612 = vunpack.c.l.b16 %v3476
      %v3613 = vunpack.c.l.b16 %v3477
      %v3614 = vunpack.c.l.b16 %v3478
      %v3615 = vunpack.c.l.b16 %v3479
      %v3616 = vunpack.c.l.b16 %v3480
      %v3617 = vunpack.c.l.b16 %v3481
      %v3618 = vunpack.c.l.b16 %v3482
      %v3619 = vunpack.c.l.b16 %v3483
      %v3620 = vunpack.c.l.b16 %v3484
      %v3621 = vunpack.c.l.b16 %v3485
      %v3622 = vunpack.c.l.b16 %v3486
      %v3623 = vunpack.c.l.b16 %v3487
      %v3624 = vunpack.c.l.b16 %v3488
      %v3625 = vunpack.c.l.b16 %v3489
      %v3626 = vunpack.c.l.b16 %v3490
      %v3627 = vpack.c.b16 %v3564, %v3563
      %v3628 = vpack.c.b16 %v3566, %v3565
      %v3629 = vpack.c.b16 %v3568, %v3567
      %v3630 = vpack.c.b16 %v3570, %v3569
      %v3631 = vpack.c.b16 %v3572, %v3571
      %v3632 = vpack.c.b16 %v3574, %v3573
      %v3633 = vpack.c.b16 %v3576, %v3575
      %v3634 = vpack.c.b16 %v3578, %v3577
      %v3635 = vpack.c.b16 %v3580, %v3579
      %v3636 = vpack.c.b16 %v3582, %v3581
      %v3637 = vpack.c.b16 %v3584, %v3583
      %v3638 = vpack.c.b16 %v3586, %v3585
      %v3639 = vpack.c.b16 %v3588, %v3587
      %v3640 = vpack.c.b16 %v3590, %v3589
      %v3641 = vpack.c.b16 %v3592, %v3591
      %v3642 = vpack.c.b16 %v3594, %v3593
      %v3643 = vpack.c.b16 %v3596, %v3595
      %v3644 = vpack.c.b16 %v3598, %v3597
      %v3645 = vpack.c.b16 %v3600, %v3599
      %v3646 = vpack.c.b16 %v3602, %v3601
      %v3647 = vpack.c.b16 %v3604, %v3603
      %v3648 = vpack.c.b16 %v3606, %v3605
      %v3649 = vpack.c.b16 %v3608, %v3607
      %v3650 = vpack.c.b16 %v3610, %v3609
      %v3651 = vpack.c.b16 %v3612, %v3611
      %v3652 = vpack.c.b16 %v3614, %v3613
      %v3653 = vpack.c.b16 %v3616, %v3615
      %v3654 = vpack.c.b16 %v3618, %v3617
      %v3655 = vpack.c.b16 %v3620, %v3619
      %v3656 = vpack.c.b16 %v3622, %v3621
      %v3657 = vpack.c.b16 %v3624, %v3623
      %v3658 = vpack.c.b16 %v3626, %v3625
      %3691 = vmatprep.subr.bf16.mxu0 0
      %3692 = vmatpush1.bf16.msra.mxu0 %v3627
      %3693 = vmatprep.subr.bf16.mxu0 0
      %3694 = vmatpush1.bf16.msra.mxu0 %v3628
      %3695 = vmatprep.subr.bf16.mxu0 0
      %3696 = vmatpush1.bf16.msra.mxu0 %v3629
      %3697 = vmatprep.subr.bf16.mxu0 0
      %3698 = vmatpush1.bf16.msra.mxu0 %v3630
      %3699 = vmatprep.subr.bf16.mxu0 0
      %3700 = vmatpush1.bf16.msra.mxu0 %v3631
      %3701 = vmatprep.subr.bf16.mxu0 0
      %3702 = vmatpush1.bf16.msra.mxu0 %v3632
      %3703 = vmatprep.subr.bf16.mxu0 0
      %3704 = vmatpush1.bf16.msra.mxu0 %v3633
      %3705 = vmatprep.subr.bf16.mxu0 0
      %3706 = vmatpush1.bf16.msra.mxu0 %v3634
      %3707 = vmatprep.subr.bf16.mxu0 0
      %3708 = vmatpush1.bf16.msra.mxu0 %v3635
      %3709 = vmatprep.subr.bf16.mxu0 0
      %3710 = vmatpush1.bf16.msra.mxu0 %v3636
      %3711 = vmatprep.subr.bf16.mxu0 0
      %3712 = vmatpush1.bf16.msra.mxu0 %v3637
      %3713 = vmatprep.subr.bf16.mxu0 0
      %3714 = vmatpush1.bf16.msra.mxu0 %v3638
      %3715 = vmatprep.subr.bf16.mxu0 0
      %3716 = vmatpush1.bf16.msra.mxu0 %v3639
      %3717 = vmatprep.subr.bf16.mxu0 0
      %3718 = vmatpush1.bf16.msra.mxu0 %v3640
      %3719 = vmatprep.subr.bf16.mxu0 0
      %3720 = vmatpush1.bf16.msra.mxu0 %v3641
      %3721 = vmatprep.subr.bf16.mxu0 0
      %3722 = vmatpush1.bf16.msra.mxu0 %v3642
      %3723 = vmatprep.mubr.bf16.mxu0 %v3423
      %3724 = vmatmul.mubr.bf16.gmra.mrb[0].mxu0 %v3422
      %v3725 = vpop.f32.mrb[0].mxu0
      %v3726 = vadd.f32 %v3497, %v3725
      %v3727 = vpop.f32.mrb[0].mxu0
      %v3728 = vpop.f32.mrb[0].mxu0
      %v3729 = vpop.f32.mrb[0].mxu0
      %3730 = vdwg.mxu0
      %3731 = vmatprep.subr.bf16.mxu0 0
      %3732 = vmatpush1.bf16.msra.mxu0 %v3643
      %3733 = vmatprep.subr.bf16.mxu0 0
      %3734 = vmatpush1.bf16.msra.mxu0 %v3644
      %3735 = vmatprep.subr.bf16.mxu0 0
      %3736 = vmatpush1.bf16.msra.mxu0 %v3645
      %3737 = vmatprep.subr.bf16.mxu0 0
      %3738 = vmatpush1.bf16.msra.mxu0 %v3646
      %3739 = vmatprep.subr.bf16.mxu0 0
      %3740 = vmatpush1.bf16.msra.mxu0 %v3647
      %3741 = vmatprep.subr.bf16.mxu0 0
      %3742 = vmatpush1.bf16.msra.mxu0 %v3648
      %3743 = vmatprep.subr.bf16.mxu0 0
      %3744 = vmatpush1.bf16.msra.mxu0 %v3649
      %3745 = vmatprep.subr.bf16.mxu0 0
      %3746 = vmatpush1.bf16.msra.mxu0 %v3650
      %3747 = vmatprep.subr.bf16.mxu0 0
      %3748 = vmatpush1.bf16.msra.mxu0 %v3651
      %3749 = vmatprep.subr.bf16.mxu0 0
      %3750 = vmatpush1.bf16.msra.mxu0 %v3652
      %3751 = vmatprep.subr.bf16.mxu0 0
      %3752 = vmatpush1.bf16.msra.mxu0 %v3653
      %3753 = vmatprep.subr.bf16.mxu0 0
      %3754 = vmatpush1.bf16.msra.mxu0 %v3654
      %3755 = vmatprep.subr.bf16.mxu0 0
      %3756 = vmatpush1.bf16.msra.mxu0 %v3655
      %3757 = vmatprep.subr.bf16.mxu0 0
      %3758 = vmatpush1.bf16.msra.mxu0 %v3656
      %3759 = vmatprep.subr.bf16.mxu0 0
      %3760 = vmatpush1.bf16.msra.mxu0 %v3657
      %3761 = vmatprep.subr.bf16.mxu0 0
      %3762 = vmatpush1.bf16.msra.mxu0 %v3658
      %3763 = vmatprep.mubr.bf16.mxu0 %v3425
      %3764 = vmatmul.mubr.bf16.gmra.mrb[0].mxu0 %v3424
      %v3765 = vpop.f32.mrb[0].mxu0
      %v3766 = vadd.f32 %v3726, %v3765
      %v3767 = vpop.f32.mrb[0].mxu0
      %v3768 = vpop.f32.mrb[0].mxu0
      %v3769 = vpop.f32.mrb[0].mxu0
      %3770 = vdwg.mxu0
      %v3771 = vadd.f32 %v3766, %v2345
      %s3772 = scalar_lea.vmem %s8, 1
      %v3773 = vld [vmem:[%s3772] sm:$0x1]
      %s3774 = scalar_lea.vmem %s9, 1
      %v3775 = vld [vmem:[%s3774] sm:$0x1]
      %v3776 = vsel %vm647, %v3771, 0.0
      %3777 = vadd.xlane.f32.xlu0 %v3776
      %v3778 = vpop.xlane.xlu0 %3777
      %v3779 = vmul.f32 %v3778, %v651
      %v3780 = vsub.f32 %v3771, %v3779
      %v3781 = vmul.f32 %v3780, %v3780
      %v3782 = vsel %vm647, %v3781, 0.0
      %3783 = vadd.xlane.f32.xlu0 %v3782
      %v3784 = vpop.xlane.xlu0 %3783
      %v3785 = vmul.f32 %v3784, %v651
      %v3786 = vadd.f32 %v3785, 1e-12
      %v3787 = vrsqrt.pop %v3786
      %v3788 = vmul.f32 %v3780, %v3787
      %v3790 = vlaneseq
      %v3791 = vshrl.u32 %v3790, 7
      %v3792 = vsub.s32 0, %v3791
      %v3793 = vrot.slane %v3773, %v3792
      %v3795 = vmul.f32 %v3788, %v3793
      %v3797 = vlaneseq
      %v3798 = vshrl.u32 %v3797, 7
      %v3799 = vsub.s32 0, %v3798
      %v3800 = vrot.slane %v3775, %v3799
      %v3802 = vadd.f32 %v3795, %v3800
      %v3803 = vpack.c.bf16 %v3802, %v3802
      %s3804 = scalar_lea.vmem %s10, 16
      %v3805 = vld [vmem:[%s3804] sm:$0xf]
      %v3806 = vld [vmem:[%s3804 + $0x4] sm:$0xf]
      %v3807 = vld [vmem:[%s3804 + $0x8] sm:$0xf]
      %v3808 = vld [vmem:[%s3804 + $0xc] sm:$0xf]
      %s3809 = scalar_lea.vmem %s11, 1
      %v3810 = vld [vmem:[%s3809] sm:$0x1]
      %v3812 = vlaneseq
      %v3813 = vshrl.u32 %v3812, 7
      %v3814 = vsub.s32 0, %v3813
      %v3815 = vrot.slane %v3810, %v3814
      %v3821 = vunpack.c.l.b16 %v3805
      %v3822 = vunpack.c.l.b16 %v3806
      %v3823 = vunpack.c.l.b16 %v3807
      %v3824 = vunpack.c.l.b16 %v3808
      %v3825 = vpack.c.b16 %v3822, %v3821
      %v3826 = vpack.c.b16 %v3824, %v3823
      %v3830 = vsel %vm647, %v3803, 0
      %3832 = vmatprep.subr.bf16.mxu0 0
      %3833 = vmatpush1.bf16.msra.mxu0 %v3825
      %3834 = vmatprep.subr.bf16.mxu0 0
      %3835 = vmatpush1.bf16.msra.mxu0 %v3826
      %3836 = vmatprep.subr.bf16.mxu0 0
      %3837 = vmatpush1.bf16.msra.mxu0 0
      %3838 = vmatprep.subr.bf16.mxu0 0
      %3839 = vmatpush1.bf16.msra.mxu0 0
      %3840 = vmatprep.subr.bf16.mxu0 0
      %3841 = vmatpush1.bf16.msra.mxu0 0
      %3842 = vmatprep.subr.bf16.mxu0 0
      %3843 = vmatpush1.bf16.msra.mxu0 0
      %3844 = vmatprep.subr.bf16.mxu0 0
      %3845 = vmatpush1.bf16.msra.mxu0 0
      %3846 = vmatprep.subr.bf16.mxu0 0
      %3847 = vmatpush1.bf16.msra.mxu0 0
      %3848 = vmatprep.subr.bf16.mxu0 0
      %3849 = vmatpush1.bf16.msra.mxu0 0
      %3850 = vmatprep.subr.bf16.mxu0 0
      %3851 = vmatpush1.bf16.msra.mxu0 0
      %3852 = vmatprep.subr.bf16.mxu0 0
      %3853 = vmatpush1.bf16.msra.mxu0 0
      %3854 = vmatprep.subr.bf16.mxu0 0
      %3855 = vmatpush1.bf16.msra.mxu0 0
      %3856 = vmatprep.subr.bf16.mxu0 0
      %3857 = vmatpush1.bf16.msra.mxu0 0
      %3858 = vmatprep.subr.bf16.mxu0 0
      %3859 = vmatpush1.bf16.msra.mxu0 0
      %3860 = vmatprep.subr.bf16.mxu0 0
      %3861 = vmatpush1.bf16.msra.mxu0 0
      %3862 = vmatprep.subr.bf16.mxu0 0
      %3863 = vmatpush1.bf16.msra.mxu0 0
      %3864 = vmatprep.mubr.bf16.mxu0 0
      %3865 = vmatmul.mubr.bf16.gmra.mrb[0].mxu0 %v3830
      %v3866 = vpop.f32.mrb[0].mxu0
      %v3867 = vadd.f32 %v3815, %v3866
      %v3868 = vpop.f32.mrb[0].mxu0
      %v3869 = vpop.f32.mrb[0].mxu0
      %v3870 = vpop.f32.mrb[0].mxu0
      %3871 = vdwg.mxu0
      %v3872 = vmul.f32 %v3867, 0.5
      %v3873 = vmul.f32 %v3867, 0.044715
      %v3874 = vmul.f32 %v3873, %v3867
      %v3875 = vmul.f32 %v3874, %v3867
      %v3876 = vadd.f32 %v3867, %v3875
      %v3877 = vmul.f32 %v3876, 0.7978846
      %v3878 = vtanh.pop %v3877
      %v3879 = vadd.f32 %v3878, 1.0
      %v3880 = vmul.f32 %v3872, %v3879
      %v3881 = vpack.c.bf16 %v3880, %v3880
      %s3882 = scalar_lea.vmem %s12, 64
      %v3883 = vld [vmem:[%s3882] sm:$0xf]
      %v3884 = vld [vmem:[%s3882 + $0x4] sm:$0xf]
      %v3885 = vld [vmem:[%s3882 + $0x8] sm:$0xf]
      %v3886 = vld [vmem:[%s3882 + $0xc] sm:$0xf]
      %v3887 = vld [vmem:[%s3882 + $0x10] sm:$0xf]
      %v3888 = vld [vmem:[%s3882 + $0x14] sm:$0xf]
      %v3889 = vld [vmem:[%s3882 + $0x18] sm:$0xf]
      %v3890 = vld [vmem:[%s3882 + $0x1c] sm:$0xf]
      %v3891 = vld [vmem:[%s3882 + $0x20] sm:$0xf]
      %v3892 = vld [vmem:[%s3882 + $0x24] sm:$0xf]
      %v3893 = vld [vmem:[%s3882 + $0x28] sm:$0xf]
      %v3894 = vld [vmem:[%s3882 + $0x2c] sm:$0xf]
      %v3895 = vld [vmem:[%s3882 + $0x30] sm:$0xf]
      %v3896 = vld [vmem:[%s3882 + $0x34] sm:$0xf]
      %v3897 = vld [vmem:[%s3882 + $0x38] sm:$0xf]
      %v3898 = vld [vmem:[%s3882 + $0x3c] sm:$0xf]
      %s3899 = scalar_lea.vmem %s13, 1
      %v3900 = vld [vmem:[%s3899] sm:$0x1]
      %v3902 = vlaneseq
      %v3903 = vshrl.u32 %v3902, 7
      %v3904 = vsub.s32 0, %v3903
      %v3905 = vrot.slane %v3900, %v3904
      %v3923 = vunpack.c.l.b16 %v3883
      %v3924 = vunpack.c.l.b16 %v3884
      %v3925 = vunpack.c.l.b16 %v3885
      %v3926 = vunpack.c.l.b16 %v3886
      %v3927 = vunpack.c.l.b16 %v3887
      %v3928 = vunpack.c.l.b16 %v3888
      %v3929 = vunpack.c.l.b16 %v3889
      %v3930 = vunpack.c.l.b16 %v3890
      %v3931 = vunpack.c.l.b16 %v3891
      %v3932 = vunpack.c.l.b16 %v3892
      %v3933 = vunpack.c.l.b16 %v3893
      %v3934 = vunpack.c.l.b16 %v3894
      %v3935 = vunpack.c.l.b16 %v3895
      %v3936 = vunpack.c.l.b16 %v3896
      %v3937 = vunpack.c.l.b16 %v3897
      %v3938 = vunpack.c.l.b16 %v3898
      %v3939 = vpack.c.b16 %v3924, %v3923
      %v3940 = vpack.c.b16 %v3926, %v3925
      %v3941 = vpack.c.b16 %v3928, %v3927
      %v3942 = vpack.c.b16 %v3930, %v3929
      %v3943 = vpack.c.b16 %v3932, %v3931
      %v3944 = vpack.c.b16 %v3934, %v3933
      %v3945 = vpack.c.b16 %v3936, %v3935
      %v3946 = vpack.c.b16 %v3938, %v3937
      %3955 = vmatprep.subr.bf16.mxu0 0
      %3956 = vmatpush1.bf16.msra.mxu0 %v3939
      %3957 = vmatprep.subr.bf16.mxu0 0
      %3958 = vmatpush1.bf16.msra.mxu0 %v3940
      %3959 = vmatprep.subr.bf16.mxu0 0
      %3960 = vmatpush1.bf16.msra.mxu0 %v3941
      %3961 = vmatprep.subr.bf16.mxu0 0
      %3962 = vmatpush1.bf16.msra.mxu0 %v3942
      %3963 = vmatprep.subr.bf16.mxu0 0
      %3964 = vmatpush1.bf16.msra.mxu0 %v3943
      %3965 = vmatprep.subr.bf16.mxu0 0
      %3966 = vmatpush1.bf16.msra.mxu0 %v3944
      %3967 = vmatprep.subr.bf16.mxu0 0
      %3968 = vmatpush1.bf16.msra.mxu0 %v3945
      %3969 = vmatprep.subr.bf16.mxu0 0
      %3970 = vmatpush1.bf16.msra.mxu0 %v3946
      %3971 = vmatprep.subr.bf16.mxu0 0
      %3972 = vmatpush1.bf16.msra.mxu0 0
      %3973 = vmatprep.subr.bf16.mxu0 0
      %3974 = vmatpush1.bf16.msra.mxu0 0
      %3975 = vmatprep.subr.bf16.mxu0 0
      %3976 = vmatpush1.bf16.msra.mxu0 0
      %3977 = vmatprep.subr.bf16.mxu0 0
      %3978 = vmatpush1.bf16.msra.mxu0 0
      %3979 = vmatprep.subr.bf16.mxu0 0
      %3980 = vmatpush1.bf16.msra.mxu0 0
      %3981 = vmatprep.subr.bf16.mxu0 0
      %3982 = vmatpush1.bf16.msra.mxu0 0
      %3983 = vmatprep.subr.bf16.mxu0 0
      %3984 = vmatpush1.bf16.msra.mxu0 0
      %3985 = vmatprep.subr.bf16.mxu0 0
      %3986 = vmatpush1.bf16.msra.mxu0 0
      %3987 = vmatprep.mubr.bf16.mxu0 0
      %3988 = vmatmul.mubr.bf16.gmra.mrb[0].mxu0 %v3881
      %v3989 = vpop.f32.mrb[0].mxu0
      %v3990 = vadd.f32 %v3905, %v3989
      %v3991 = vpop.f32.mrb[0].mxu0
      %v3992 = vpop.f32.mrb[0].mxu0
      %v3993 = vpop.f32.mrb[0].mxu0
      %3994 = vdwg.mxu0
      %v3995 = vadd.f32 %v3990, %v3802
      %s3996 = scalar_lea.vmem %s14, 1
      %v3997 = vld [vmem:[%s3996] sm:$0x1]
      %s3998 = scalar_lea.vmem %s15, 1
      %v3999 = vld [vmem:[%s3998] sm:$0x1]
      %v4000 = vsel %vm647, %v3995, 0.0
      %4001 = vadd.xlane.f32.xlu0 %v4000
      %v4002 = vpop.xlane.xlu0 %4001
      %v4003 = vmul.f32 %v4002, %v651
      %v4004 = vsub.f32 %v3995, %v4003
      %v4005 = vmul.f32 %v4004, %v4004
      %v4006 = vsel %vm647, %v4005, 0.0
      %4007 = vadd.xlane.f32.xlu0 %v4006
      %v4008 = vpop.xlane.xlu0 %4007
      %v4009 = vmul.f32 %v4008, %v651
      %v4010 = vadd.f32 %v4009, 1e-12
      %v4011 = vrsqrt.pop %v4010
      %v4012 = vmul.f32 %v4004, %v4011
      %v4014 = vlaneseq
      %v4015 = vshrl.u32 %v4014, 7
      %v4016 = vsub.s32 0, %v4015
      %v4017 = vrot.slane %v3997, %v4016
      %v4019 = vmul.f32 %v4012, %v4017
      %v4021 = vlaneseq
      %v4022 = vshrl.u32 %v4021, 7
      %v4023 = vsub.s32 0, %v4022
      %v4024 = vrot.slane %v3999, %v4023
      %v4026 = vadd.f32 %v4019, %v4024
      %v4027 = vpack.c.bf16 %v4026, %v4026
      %v4028 = vld [vmem:[%s16] sm:$0xf]
      %v4029 = vld [vmem:[%s16 + $0x4] sm:$0xf]
      %v4030 = vld [vmem:[%s16 + $0x8] sm:$0xf]
      %v4031 = vld [vmem:[%s16 + $0xc] sm:$0xf]
      %v4032 = vld [vmem:[%s17] sm:$0x1]
      %v4034 = vlaneseq
      %v4035 = vshrl.u32 %v4034, 7
      %v4036 = vsub.s32 0, %v4035
      %v4037 = vrot.slane %v4032, %v4036
      %v4043 = vunpack.c.l.b16 %v4028
      %v4044 = vunpack.c.l.b16 %v4029
      %v4045 = vunpack.c.l.b16 %v4030
      %v4046 = vunpack.c.l.b16 %v4031
      %v4047 = vpack.c.b16 %v4044, %v4043
      %v4048 = vpack.c.b16 %v4046, %v4045
      %v4052 = vsel %vm647, %v4027, 0
      %4054 = vmatprep.subr.bf16.mxu0 0
      %4055 = vmatpush1.bf16.msra.mxu0 %v4047
      %4056 = vmatprep.subr.bf16.mxu0 0
      %4057 = vmatpush1.bf16.msra.mxu0 %v4048
      %4058 = vmatprep.subr.bf16.mxu0 0
      %4059 = vmatpush1.bf16.msra.mxu0 0
      %4060 = vmatprep.subr.bf16.mxu0 0
      %4061 = vmatpush1.bf16.msra.mxu0 0
      %4062 = vmatprep.subr.bf16.mxu0 0
      %4063 = vmatpush1.bf16.msra.mxu0 0
      %4064 = vmatprep.subr.bf16.mxu0 0
      %4065 = vmatpush1.bf16.msra.mxu0 0
      %4066 = vmatprep.subr.bf16.mxu0 0
      %4067 = vmatpush1.bf16.msra.mxu0 0
      %4068 = vmatprep.subr.bf16.mxu0 0
      %4069 = vmatpush1.bf16.msra.mxu0 0
      %4070 = vmatprep.subr.bf16.mxu0 0
      %4071 = vmatpush1.bf16.msra.mxu0 0
      %4072 = vmatprep.subr.bf16.mxu0 0
      %4073 = vmatpush1.bf16.msra.mxu0 0
      %4074 = vmatprep.subr.bf16.mxu0 0
      %4075 = vmatpush1.bf16.msra.mxu0 0
      %4076 = vmatprep.subr.bf16.mxu0 0
      %4077 = vmatpush1.bf16.msra.mxu0 0
      %4078 = vmatprep.subr.bf16.mxu0 0
      %4079 = vmatpush1.bf16.msra.mxu0 0
      %4080 = vmatprep.subr.bf16.mxu0 0
      %4081 = vmatpush1.bf16.msra.mxu0 0
      %4082 = vmatprep.subr.bf16.mxu0 0
      %4083 = vmatpush1.bf16.msra.mxu0 0
      %4084 = vmatprep.subr.bf16.mxu0 0
      %4085 = vmatpush1.bf16.msra.mxu0 0
      %4086 = vmatprep.mubr.bf16.mxu0 0
      %4087 = vmatmul.mubr.bf16.gmra.mrb[0].mxu0 %v4052
      %v4088 = vpop.f32.mrb[0].mxu0
      %v4089 = vadd.f32 %v4037, %v4088
      %v4090 = vpop.f32.mrb[0].mxu0
      %v4091 = vpop.f32.mrb[0].mxu0
      %v4092 = vpop.f32.mrb[0].mxu0
      %4093 = vdwg.mxu0
      %v4094 = vtanh.pop %v4089
      %v4095 = vpack.c.bf16 %v4094, %v4094
      %v4096 = vld [vmem:[%s18] sm:$0xf]
      %v4097 = vld [vmem:[%s18 + $0x4] sm:$0xf]
      %v4098 = vld [vmem:[%s18 + $0x8] sm:$0xf]
      %v4099 = vld [vmem:[%s18 + $0xc] sm:$0xf]
      %v4100 = vld [vmem:[%s19] sm:$0x1]
      %v4102 = vlaneseq
      %v4103 = vshrl.u32 %v4102, 7
      %v4104 = vsub.s32 0, %v4103
      %v4105 = vrot.slane %v4100, %v4104
      %v4111 = vunpack.c.l.b16 %v4096
      %v4112 = vunpack.c.l.b16 %v4097
      %v4113 = vunpack.c.l.b16 %v4098
      %v4114 = vunpack.c.l.b16 %v4099
      %v4115 = vpack.c.b16 %v4112, %v4111
      %v4116 = vpack.c.b16 %v4114, %v4113
      %v4120 = vsel %vm647, %v4095, 0
      %4122 = vmatprep.subr.bf16.mxu0 0
      %4123 = vmatpush1.bf16.msra.mxu0 %v4115
      %4124 = vmatprep.subr.bf16.mxu0 0
      %4125 = vmatpush1.bf16.msra.mxu0 %v4116
      %4126 = vmatprep.subr.bf16.mxu0 0
      %4127 = vmatpush1.bf16.msra.mxu0 0
      %4128 = vmatprep.subr.bf16.mxu0 0
      %4129 = vmatpush1.bf16.msra.mxu0 0
      %4130 = vmatprep.subr.bf16.mxu0 0
      %4131 = vmatpush1.bf16.msra.mxu0 0
      %4132 = vmatprep.subr.bf16.mxu0 0
      %4133 = vmatpush1.bf16.msra.mxu0 0
      %4134 = vmatprep.subr.bf16.mxu0 0
      %4135 = vmatpush1.bf16.msra.mxu0 0
      %4136 = vmatprep.subr.bf16.mxu0 0
      %4137 = vmatpush1.bf16.msra.mxu0 0
      %4138 = vmatprep.subr.bf16.mxu0 0
      %4139 = vmatpush1.bf16.msra.mxu0 0
      %4140 = vmatprep.subr.bf16.mxu0 0
      %4141 = vmatpush1.bf16.msra.mxu0 0
      %4142 = vmatprep.subr.bf16.mxu0 0
      %4143 = vmatpush1.bf16.msra.mxu0 0
      %4144 = vmatprep.subr.bf16.mxu0 0
      %4145 = vmatpush1.bf16.msra.mxu0 0
      %4146 = vmatprep.subr.bf16.mxu0 0
      %4147 = vmatpush1.bf16.msra.mxu0 0
      %4148 = vmatprep.subr.bf16.mxu0 0
      %4149 = vmatpush1.bf16.msra.mxu0 0
      %4150 = vmatprep.subr.bf16.mxu0 0
      %4151 = vmatpush1.bf16.msra.mxu0 0
      %4152 = vmatprep.subr.bf16.mxu0 0
      %4153 = vmatpush1.bf16.msra.mxu0 0
      %4154 = vmatprep.mubr.bf16.mxu0 0
      %4155 = vmatmul.mubr.bf16.gmra.mrb[0].mxu0 %v4120
      %v4156 = vpop.f32.mrb[0].mxu0
      %v4157 = vadd.f32 %v4105, %v4156
      %v4158 = vpop.f32.mrb[0].mxu0
      %v4159 = vpop.f32.mrb[0].mxu0
      %v4160 = vpop.f32.mrb[0].mxu0
      %4161 = vdwg.mxu0
      %4162 = vst [vmem:[%s641] sm:$0xff] %v4157
      %p4163 = scmp.lt.s32.totalorder %s31, 1
      %s4164 = scalar_select %p4163, %s31, 1
      %s4165 = smul.addr %s4164, 8
      %s4166 = scalar_lea.vmem %s20, %s4165
      // Predicated region
      $region101: #{bert_forward.1} parent=99 // pred_check
        %p4167 = pneg %p479
      $region102: #{bert_forward.1} parent=99 // pred_check_branch
        %4169 = sbr.rel (%p4167) target = $region104
      $region103: #{bert_forward.1} parent=99 // pred_region
        _
      $region104: #{bert_forward.1} parent=99 // pred_fallthru
        _
    $region100: #{bert_forward.1} parent=5 // pred_fallthru
      _
    %p4170 = scmp.le.s32.totalorder 2, %s26
    // Predicated region
    $region105: #{bert_forward.1} parent=5 // pred_check
      %p4171 = pneg %p4170
    $region106: #{bert_forward.1} parent=5 // pred_check_branch
      %4173 = sbr.rel (%p4171) target = $region108
    $region107: #{bert_forward.1} parent=5 // pred_region
      %s4174 = ssub.s32 %s26, 2
      // Predicated region
      $region109: #{bert_forward.1} parent=107 // pred_check
        %p4175 = pneg %p485
      $region110: #{bert_forward.1} parent=107 // pred_check_branch
        %4177 = sbr.rel (%p4175) target = $region112
      $region111: #{bert_forward.1} parent=107 // pred_region
        %p4178 = scmp.lt.s32.totalorder %s32, 1
        %s4179 = scalar_select %p4178, %s32, 1
        %s4180 = smul.addr %s4179, 8
        %s4181 = scalar_lea.vmem %s20, %s4180
      $region112: #{bert_forward.1} parent=107 // pred_fallthru
        _
    $region108: #{bert_forward.1} parent=5 // pred_fallthru
      _
  $region6: #{bert_forward.1} parent=0 // loop_footer
    %s30 = sadd.s32 1, %s26
  $region7: #{bert_forward.1} parent=0 // loop_footer_branch
    %25 = sbr.rel target = $region3
  $region8: #{bert_forward.1} parent=0 // loop_exit
    _

</llo_original>
